<compile_context>
chip_gen: v5e
topology: v5e:2x2
jax: 0.10.0
libtpu: 0.0.40
codegen_flags: <defaults>
</compile_context>

<pallas_src>
import functools

import numpy as np

import jax
import jax.numpy as jnp
from jax.experimental import pallas as pl
from jax.experimental.pallas import tpu as pltpu


# ------------------------------ fused kernel ------------------------------- #

def _pnet_fused_kernel(x_ref, w1_ref, b1_ref, w2_ref, b2_ref, w3_ref, b3_ref,
                       wh_ref, bh_ref, alpha_ref,
                       out_ref,
                       im_ref, y1_ref, pool_ref, y2_ref,
                       *, W0, Wd1, Hp, Wp, R1, R3, R4):
    """Whole PNet forward for one image (one grid step).

    Flat-2D layout: an activation with flat width Wd is a (rows, C) matrix with
    row = h * Wd + w; columns beyond the valid width (and trailing rows) hold
    finite garbage that never reaches a valid output position.
    """

    def conv3x3_prelu(read_rows, n_rows, wd, cin, w_ref, b_ref, alpha):
        # Assemble the 9 shifted taps into one (n_rows, 9*cin) im2col block in
        # VMEM scratch, then a single MXU matmul with f32 accumulation.
        for kh in range(3):
            for kw in range(3):
                k = kh * 3 + kw
                s = kh * wd + kw                       # shifted-tap row offset
                im_ref[0:n_rows, k * cin:(k + 1) * cin] = read_rows(s, n_rows)
        patches = im_ref[0:n_rows, 0:9 * cin].astype(jnp.bfloat16)
        y = jnp.dot(patches, w_ref[...],
                    preferred_element_type=jnp.float32) + b_ref[...]
        return jnp.where(y > 0.0, y, alpha * y)        # PReLU (f32, shared a)

    a1 = alpha_ref[:, 0:1]
    a2 = alpha_ref[:, 1:2]
    a3 = alpha_ref[:, 2:3]

    # conv1: 3x3, 3 -> 10, PReLU (flat width W0)
    y1_ref[...] = conv3x3_prelu(lambda s, n: x_ref[0, pl.ds(s, n), :],
                                R1, W0, 3, w1_ref, b1_ref, a1)

    # MaxPool2d(2, 2): exact stride-2 selection via sublane-strided reads
    # (no decimation matmul, no MXU rounding of pooled values).
    for hp in range(Hp):
        base = 2 * hp * W0
        p = jnp.maximum(
            jnp.maximum(y1_ref[pl.ds(base, Wp, stride=2), :],
                        y1_ref[pl.ds(base + 1, Wp, stride=2), :]),
            jnp.maximum(y1_ref[pl.ds(base + W0, Wp, stride=2), :],
                        y1_ref[pl.ds(base + W0 + 1, Wp, stride=2), :]))
        pool_ref[hp * Wp:(hp + 1) * Wp, :] = p
    # Zero the slack rows covering conv2's tap reach (never read by valid outs).
    n_tail = pool_ref.shape[0] - Hp * Wp
    pool_ref[Hp * Wp:Hp * Wp + n_tail, :] = jnp.zeros(
        (n_tail, pool_ref.shape[1]), jnp.float32)

    # conv2: 3x3, 10 -> 16, PReLU (flat width Wd1 = Wp)
    y2_ref[...] = conv3x3_prelu(lambda s, n: pool_ref[pl.ds(s, n), :],
                                R3, Wd1, 10, w2_ref, b2_ref, a2)

    # conv3: 3x3, 16 -> 32, PReLU
    y3 = conv3x3_prelu(lambda s, n: y2_ref[pl.ds(s, n), :],
                       R4, Wd1, 16, w3_ref, b3_ref, a3)

    # fused heads: [conv4_1 | conv4_2] as one (32, 5) matmul; sigmoid on col 0.
    yh = jnp.dot(y3.astype(jnp.bfloat16), wh_ref[...],
                 preferred_element_type=jnp.float32) + bh_ref[...]
    col = jax.lax.broadcasted_iota(jnp.int32, yh.shape, 1)
    out_ref[0] = jnp.where(col == 0, jax.nn.sigmoid(yh), yh)


# ------------------------------- wrapper ----------------------------------- #

def pnet_forward(params, x_nchw):
    """Matches PNet.forward: returns (cond, offset) in NCHW."""
    N, C, H0, W0 = x_nchw.shape
    assert C == 3
    H1, W1 = H0 - 2, W0 - 2              # conv1 (valid 3x3)
    Hp, Wp = H1 // 2, W1 // 2            # MaxPool2d(2, 2) (floor, as in spec)
    H2, W2 = Hp - 2, Wp - 2              # conv2
    H3, W3 = H2 - 2, W2 - 2              # conv3
    assert H3 >= 1 and W3 >= 1
    Wd1 = Wp                             # flat width used from the pool onward

    R0 = H0 * W0 + 8                     # padded input rows (conv1 tap reach)
    R1 = H1 * W0                         # conv1 output rows (flat width W0)
    R4 = H3 * Wd1                        # conv3 / head rows
    R3 = R4 + 2 * Wd1 + 2                # conv2 rows (covers conv3 tap reach)
    R2 = Hp * Wp + 4                     # pooled rows + slack for conv2 reach

    # NCHW -> NHWC -> flat (N, H*W, 3); zero-pad rows so every tap slice fits.
    # TODO(synk): feed a lane-dense (N, H0, W0*3) layout for large images to
    # cut the input-DMA padding; negligible at these sizes.
    x = jnp.transpose(x_nchw, (0, 2, 3, 1)).astype(jnp.float32)
    x = x.reshape(N, H0 * W0, 3)
    x = jnp.pad(x, ((0, 0), (0, R0 - H0 * W0), (0, 0)))

    # Fused-tap weights: (9, Cin, Cout) -> (9*Cin, Cout), bf16 MXU operands.
    def conv_w(w):
        ktaps, cin, cout = w.shape
        return w.reshape(ktaps * cin, cout).astype(jnp.bfloat16)

    w1 = conv_w(params["w1"])
    w2 = conv_w(params["w2"])
    w3 = conv_w(params["w3"])
    # Fuse the two 1x1 heads into a single (32, 5) matmul.
    wh = jnp.concatenate([params["w4_1"][0], params["w4_2"][0]],
                         axis=-1).astype(jnp.bfloat16)
    bh = jnp.concatenate([params["b4_1"], params["b4_2"]], axis=-1)
    alphas = jnp.concatenate(
        [params["a1"], params["a2"], params["a3"]]).reshape(1, 3)

    kernel = functools.partial(_pnet_fused_kernel, W0=W0, Wd1=Wd1, Hp=Hp,
                               Wp=Wp, R1=R1, R3=R3, R4=R4)

    def const(shape):
        return pl.BlockSpec(shape, lambda n: (0,) * len(shape))

    out = pl.pallas_call(
        kernel,
        grid=(N,),
        in_specs=[
            pl.BlockSpec((1, R0, 3), lambda n: (n, 0, 0)),   # input image
            const((27, 10)), const((1, 10)),                 # conv1
            const((90, 16)), const((1, 16)),                 # conv2
            const((144, 32)), const((1, 32)),                # conv3
            const((32, 5)), const((1, 5)),                   # fused heads
            const((1, 3)),                                   # PReLU alphas
        ],
        out_specs=pl.BlockSpec((1, R4, 5), lambda n: (n, 0, 0)),
        out_shape=jax.ShapeDtypeStruct((N, R4, 5), jnp.float32),
        scratch_shapes=[
            pltpu.VMEM((R1, 144), jnp.float32),   # im2col assembly (reused)
            pltpu.VMEM((R1, 10), jnp.float32),    # conv1 output
            pltpu.VMEM((R2, 10), jnp.float32),    # pooled (+ slack rows)
            pltpu.VMEM((R3, 16), jnp.float32),    # conv2 output
        ],
        compiler_params=pltpu.CompilerParams(
            dimension_semantics=("parallel",)),
    )(x, w1, params["b1"], w2, params["b2"], w3, params["b3"],
      wh, bh, alphas)

    out = out.reshape(N, H3, Wd1, 5)[:, :, :W3, :]           # drop garbage cols
    cond = jnp.transpose(out[..., 0:1], (0, 3, 1, 2))        # (N, 1, H3, W3)
    offset = jnp.transpose(out[..., 1:5], (0, 3, 1, 2))      # (N, 4, H3, W3)
    return cond, offset


# ------------------------ params / pure-JAX reference ---------------------- #

def init_params(key):
    """Synthetic parameters with PNet's shapes (see layout note at the top)."""
    ks = jax.random.split(key, 10)

    def conv_w(k, kk, cin, cout):
        fan_in = kk * kk * cin
        return (jax.random.normal(k, (kk * kk, cin, cout), jnp.float32)
                / jnp.sqrt(jnp.float32(fan_in)))

    def bias(k, cout):
        return 0.01 * jax.random.normal(k, (1, cout), jnp.float32)

    return {
        "w1": conv_w(ks[0], 3, 3, 10), "b1": bias(ks[1], 10),
        "a1": jnp.full((1,), 0.25, jnp.float32),
        "w2": conv_w(ks[2], 3, 10, 16), "b2": bias(ks[3], 16),
        "a2": jnp.full((1,), 0.25, jnp.float32),
        "w3": conv_w(ks[4], 3, 16, 32), "b3": bias(ks[5], 32),
        "a3": jnp.full((1,), 0.25, jnp.float32),
        "w4_1": conv_w(ks[6], 1, 32, 1), "b4_1": bias(ks[7], 1),
        "w4_2": conv_w(ks[8], 1, 32, 4), "b4_2": bias(ks[9], 4),
    }


def pnet_reference(params, x_nchw):
    """Pure-JAX (XLA) reference: same bf16-operand / f32-accumulate convs."""
    x = jnp.transpose(x_nchw, (0, 2, 3, 1)).astype(jnp.float32)

    def conv(y, w_taps, b, k, cin, cout):
        w = w_taps.reshape(k, k, cin, cout)
        y = jax.lax.conv_general_dilated(
            y.astype(jnp.bfloat16), w.astype(jnp.bfloat16),
            window_strides=(1, 1), padding="VALID",
            dimension_numbers=("NHWC", "HWIO", "NHWC"),
            preferred_element_type=jnp.float32)
        return y + b.reshape(1, 1, 1, cout)

    def prelu(y, a):
        return jnp.where(y > 0, y, a * y)

    y = prelu(conv(x, params["w1"], params["b1"], 3, 3, 10), params["a1"])
    y = jax.lax.reduce_window(y, -jnp.inf, jax.lax.max,
                              (1, 2, 2, 1), (1, 2, 2, 1), "VALID")
    y = prelu(conv(y, params["w2"], params["b2"], 3, 10, 16), params["a2"])
    y = prelu(conv(y, params["w3"], params["b3"], 3, 16, 32), params["a3"])
    cond = jax.nn.sigmoid(conv(y, params["w4_1"], params["b4_1"], 1, 32, 1))
    off = conv(y, params["w4_2"], params["b4_2"], 1, 32, 4)
    return (jnp.transpose(cond, (0, 3, 1, 2)), jnp.transpose(off, (0, 3, 1, 2)))


# ---------------------------------- main ------------------------------------ #

if __name__ == "__main__":
    key = jax.random.PRNGKey(0)
    k_param, k_x = jax.random.split(key)

    params = init_params(k_param)
    # NCHW input: 16x16 -> conv 14 -> pool 7 -> conv 5 -> conv 3
    x = jax.random.normal(k_x, (2, 3, 16, 16), jnp.float32)

    fwd = jax.jit(pnet_forward)
    cond, offset = fwd(params, x)
    jax.block_until_ready((cond, offset))

    assert cond.shape == (2, 1, 3, 3), cond.shape
    assert offset.shape == (2, 4, 3, 3), offset.shape
    assert bool(jnp.all((cond >= 0.0) & (cond <= 1.0)))

    # Validate against the plain-XLA reference.  Both sides use bf16 matmul
    # operands with f32 accumulation and the kernel's pooling is exact, so the
    # tolerance is tight (bounded by rare bf16-ULP flips of activations), far
    # below the magnitude of any indexing/layout bug.
    ref_cond, ref_off = jax.jit(pnet_reference)(params, x)
    np.testing.assert_allclose(np.asarray(cond), np.asarray(ref_cond),
                               rtol=2e-3, atol=2e-3)
    np.testing.assert_allclose(np.asarray(offset), np.asarray(ref_off),
                               rtol=2e-3, atol=2e-3)

    print("KERNEL_OK")
</pallas_src>

<mosaic_0001>
module attributes {stable_mosaic.version = 11 : i64} {
  func.func @_pnet_fused_kernel(%arg0: i32, %arg1: memref<1x264x3xf32, #tpu.memory_space<vmem>>, %arg2: memref<27x10xbf16, #tpu.memory_space<vmem>>, %arg3: memref<1x10xf32, #tpu.memory_space<vmem>>, %arg4: memref<90x16xbf16, #tpu.memory_space<vmem>>, %arg5: memref<1x16xf32, #tpu.memory_space<vmem>>, %arg6: memref<144x32xbf16, #tpu.memory_space<vmem>>, %arg7: memref<1x32xf32, #tpu.memory_space<vmem>>, %arg8: memref<32x5xbf16, #tpu.memory_space<vmem>>, %arg9: memref<1x5xf32, #tpu.memory_space<vmem>>, %arg10: memref<1x3xf32, #tpu.memory_space<vmem>>, %arg11: memref<1x21x5xf32, #tpu.memory_space<vmem>>, %arg12: memref<224x144xf32, #tpu.memory_space<vmem>>, %arg13: memref<224x10xf32, #tpu.memory_space<vmem>>, %arg14: memref<53x10xf32, #tpu.memory_space<vmem>>, %arg15: memref<37x16xf32, #tpu.memory_space<vmem>>) attributes {dimension_semantics = [#tpu.dimension_semantics<parallel>], iteration_bounds = array<i64: 2>, scalar_prefetch = 0 : i64, scratch_operands = 4 : i64, tpu.core_type = #tpu.core_type<tc>, window_params = [{transform_indices = @transform_0, window_bounds = array<i64: 1, 264, 3>}, {pipeline_mode = #tpu.pipeline_mode<synchronous>, transform_indices = @transform_1, window_bounds = array<i64: 27, 10>}, {pipeline_mode = #tpu.pipeline_mode<synchronous>, transform_indices = @transform_2, window_bounds = array<i64: 1, 10>}, {pipeline_mode = #tpu.pipeline_mode<synchronous>, transform_indices = @transform_3, window_bounds = array<i64: 90, 16>}, {pipeline_mode = #tpu.pipeline_mode<synchronous>, transform_indices = @transform_4, window_bounds = array<i64: 1, 16>}, {pipeline_mode = #tpu.pipeline_mode<synchronous>, transform_indices = @transform_5, window_bounds = array<i64: 144, 32>}, {pipeline_mode = #tpu.pipeline_mode<synchronous>, transform_indices = @transform_6, window_bounds = array<i64: 1, 32>}, {pipeline_mode = #tpu.pipeline_mode<synchronous>, transform_indices = @transform_7, window_bounds = array<i64: 32, 5>}, {pipeline_mode = #tpu.pipeline_mode<synchronous>, transform_indices = @transform_8, window_bounds = array<i64: 1, 5>}, {pipeline_mode = #tpu.pipeline_mode<synchronous>, transform_indices = @transform_9, window_bounds = array<i64: 1, 3>}, {transform_indices = @transform_10, window_bounds = array<i64: 1, 21, 5>}]} {
    %c0 = arith.constant 0 : index
    %c0_0 = arith.constant 0 : index
    %0 = vector.load %arg10[%c0, %c0_0] : memref<1x3xf32, #tpu.memory_space<vmem>>, vector<1x1xf32>
    %c0_1 = arith.constant 0 : index
    %c1 = arith.constant 1 : index
    %1 = vector.load %arg10[%c0_1, %c1] : memref<1x3xf32, #tpu.memory_space<vmem>>, vector<1x1xf32>
    %c0_2 = arith.constant 0 : index
    %c2 = arith.constant 2 : index
    %2 = vector.load %arg10[%c0_2, %c2] : memref<1x3xf32, #tpu.memory_space<vmem>>, vector<1x1xf32>
    %c0_3 = arith.constant 0 : index
    %c0_4 = arith.constant 0 : index
    %c0_5 = arith.constant 0 : index
    %3 = vector.load %arg1[%c0_3, %c0_4, %c0_5] : memref<1x264x3xf32, #tpu.memory_space<vmem>>, vector<1x224x3xf32>
    %4 = vector.shape_cast %3 : vector<1x224x3xf32> to vector<224x3xf32>
    %c0_6 = arith.constant 0 : index
    %c0_7 = arith.constant 0 : index
    %5 = vector.load %arg12[%c0_6, %c0_7] : memref<224x144xf32, #tpu.memory_space<vmem>>, vector<224x3xf32>
    tpu.vector_store %arg12[%c0_6, %c0_7], %4 {strides = array<i32>} : memref<224x144xf32, #tpu.memory_space<vmem>>, vector<224x3xf32>,
    %c0_8 = arith.constant 0 : index
    %c1_9 = arith.constant 1 : index
    %c0_10 = arith.constant 0 : index
    %6 = vector.load %arg1[%c0_8, %c1_9, %c0_10] : memref<1x264x3xf32, #tpu.memory_space<vmem>>, vector<1x224x3xf32>
    %7 = vector.shape_cast %6 : vector<1x224x3xf32> to vector<224x3xf32>
    %c0_11 = arith.constant 0 : index
    %c3 = arith.constant 3 : index
    %8 = vector.load %arg12[%c0_11, %c3] : memref<224x144xf32, #tpu.memory_space<vmem>>, vector<224x3xf32>
    tpu.vector_store %arg12[%c0_11, %c3], %7 {strides = array<i32>} : memref<224x144xf32, #tpu.memory_space<vmem>>, vector<224x3xf32>,
    %c0_12 = arith.constant 0 : index
    %c2_13 = arith.constant 2 : index
    %c0_14 = arith.constant 0 : index
    %9 = vector.load %arg1[%c0_12, %c2_13, %c0_14] : memref<1x264x3xf32, #tpu.memory_space<vmem>>, vector<1x224x3xf32>
    %10 = vector.shape_cast %9 : vector<1x224x3xf32> to vector<224x3xf32>
    %c0_15 = arith.constant 0 : index
    %c6 = arith.constant 6 : index
    %11 = vector.load %arg12[%c0_15, %c6] : memref<224x144xf32, #tpu.memory_space<vmem>>, vector<224x3xf32>
    tpu.vector_store %arg12[%c0_15, %c6], %10 {strides = array<i32>} : memref<224x144xf32, #tpu.memory_space<vmem>>, vector<224x3xf32>,
    %c0_16 = arith.constant 0 : index
    %c16 = arith.constant 16 : index
    %c0_17 = arith.constant 0 : index
    %12 = vector.load %arg1[%c0_16, %c16, %c0_17] : memref<1x264x3xf32, #tpu.memory_space<vmem>>, vector<1x224x3xf32>
    %13 = vector.shape_cast %12 : vector<1x224x3xf32> to vector<224x3xf32>
    %c0_18 = arith.constant 0 : index
    %c9 = arith.constant 9 : index
    %14 = vector.load %arg12[%c0_18, %c9] : memref<224x144xf32, #tpu.memory_space<vmem>>, vector<224x3xf32>
    tpu.vector_store %arg12[%c0_18, %c9], %13 {strides = array<i32>} : memref<224x144xf32, #tpu.memory_space<vmem>>, vector<224x3xf32>,
    %c0_19 = arith.constant 0 : index
    %c17 = arith.constant 17 : index
    %c0_20 = arith.constant 0 : index
    %15 = vector.load %arg1[%c0_19, %c17, %c0_20] : memref<1x264x3xf32, #tpu.memory_space<vmem>>, vector<1x224x3xf32>
    %16 = vector.shape_cast %15 : vector<1x224x3xf32> to vector<224x3xf32>
    %c0_21 = arith.constant 0 : index
    %c12 = arith.constant 12 : index
    %17 = vector.load %arg12[%c0_21, %c12] : memref<224x144xf32, #tpu.memory_space<vmem>>, vector<224x3xf32>
    tpu.vector_store %arg12[%c0_21, %c12], %16 {strides = array<i32>} : memref<224x144xf32, #tpu.memory_space<vmem>>, vector<224x3xf32>,
    %c0_22 = arith.constant 0 : index
    %c18 = arith.constant 18 : index
    %c0_23 = arith.constant 0 : index
    %18 = vector.load %arg1[%c0_22, %c18, %c0_23] : memref<1x264x3xf32, #tpu.memory_space<vmem>>, vector<1x224x3xf32>
    %19 = vector.shape_cast %18 : vector<1x224x3xf32> to vector<224x3xf32>
    %c0_24 = arith.constant 0 : index
    %c15 = arith.constant 15 : index
    %20 = vector.load %arg12[%c0_24, %c15] : memref<224x144xf32, #tpu.memory_space<vmem>>, vector<224x3xf32>
    tpu.vector_store %arg12[%c0_24, %c15], %19 {strides = array<i32>} : memref<224x144xf32, #tpu.memory_space<vmem>>, vector<224x3xf32>,
    %c0_25 = arith.constant 0 : index
    %c32 = arith.constant 32 : index
    %c0_26 = arith.constant 0 : index
    %21 = vector.load %arg1[%c0_25, %c32, %c0_26] : memref<1x264x3xf32, #tpu.memory_space<vmem>>, vector<1x224x3xf32>
    %22 = vector.shape_cast %21 : vector<1x224x3xf32> to vector<224x3xf32>
    %c0_27 = arith.constant 0 : index
    %c18_28 = arith.constant 18 : index
    %23 = vector.load %arg12[%c0_27, %c18_28] : memref<224x144xf32, #tpu.memory_space<vmem>>, vector<224x3xf32>
    tpu.vector_store %arg12[%c0_27, %c18_28], %22 {strides = array<i32>} : memref<224x144xf32, #tpu.memory_space<vmem>>, vector<224x3xf32>,
    %c0_29 = arith.constant 0 : index
    %c33 = arith.constant 33 : index
    %c0_30 = arith.constant 0 : index
    %24 = vector.load %arg1[%c0_29, %c33, %c0_30] : memref<1x264x3xf32, #tpu.memory_space<vmem>>, vector<1x224x3xf32>
    %25 = vector.shape_cast %24 : vector<1x224x3xf32> to vector<224x3xf32>
    %c0_31 = arith.constant 0 : index
    %c21 = arith.constant 21 : index
    %26 = vector.load %arg12[%c0_31, %c21] : memref<224x144xf32, #tpu.memory_space<vmem>>, vector<224x3xf32>
    tpu.vector_store %arg12[%c0_31, %c21], %25 {strides = array<i32>} : memref<224x144xf32, #tpu.memory_space<vmem>>, vector<224x3xf32>,
    %c0_32 = arith.constant 0 : index
    %c34 = arith.constant 34 : index
    %c0_33 = arith.constant 0 : index
    %27 = vector.load %arg1[%c0_32, %c34, %c0_33] : memref<1x264x3xf32, #tpu.memory_space<vmem>>, vector<1x224x3xf32>
    %28 = vector.shape_cast %27 : vector<1x224x3xf32> to vector<224x3xf32>
    %c0_34 = arith.constant 0 : index
    %c24 = arith.constant 24 : index
    %29 = vector.load %arg12[%c0_34, %c24] : memref<224x144xf32, #tpu.memory_space<vmem>>, vector<224x3xf32>
    tpu.vector_store %arg12[%c0_34, %c24], %28 {strides = array<i32>} : memref<224x144xf32, #tpu.memory_space<vmem>>, vector<224x3xf32>,
    %c0_35 = arith.constant 0 : index
    %c0_36 = arith.constant 0 : index
    %30 = vector.load %arg12[%c0_35, %c0_36] : memref<224x144xf32, #tpu.memory_space<vmem>>, vector<224x27xf32>
    %31 = arith.truncf %30 : vector<224x27xf32> to vector<224x27xbf16>
    %c0_37 = arith.constant 0 : index
    %c0_38 = arith.constant 0 : index
    %32 = vector.load %arg2[%c0_37, %c0_38] : memref<27x10xbf16, #tpu.memory_space<vmem>>, vector<27x10xbf16>
    %cst = arith.constant dense<0.000000e+00> : vector<224x10xf32>
    %33 = tpu.matmul %31, %32, %cst {dimension_numbers = #tpu.dot_dimension_numbers<[1], [0], [0], [1], [0, 0, 1, 1], [], []>} : vector<224x27xbf16>, vector<27x10xbf16>, vector<224x10xf32> -> vector<224x10xf32>
    %c0_39 = arith.constant 0 : index
    %c0_40 = arith.constant 0 : index
    %34 = vector.load %arg3[%c0_39, %c0_40] : memref<1x10xf32, #tpu.memory_space<vmem>>, vector<1x10xf32>
    %35 = vector.broadcast %34 : vector<1x10xf32> to vector<224x10xf32>
    %36 = arith.addf %33, %35 : vector<224x10xf32>
    %cst_41 = arith.constant 0.000000e+00 : f32
    %37 = vector.broadcast %cst_41 : f32 to vector<224x10xf32>
    %38 = arith.cmpf ogt, %36, %37 : vector<224x10xf32>
    %39 = vector.broadcast %0 : vector<1x1xf32> to vector<224x10xf32>
    %40 = arith.mulf %39, %36 : vector<224x10xf32>
    %41 = arith.select %38, %36, %40 : vector<224x10xi1>, vector<224x10xf32>
    %c0_42 = arith.constant 0 : index
    %c0_43 = arith.constant 0 : index
    %42 = vector.load %arg13[%c0_42, %c0_43] : memref<224x10xf32, #tpu.memory_space<vmem>>, vector<224x10xf32>
    tpu.vector_store %arg13[%c0_42, %c0_43], %41 {strides = array<i32>} : memref<224x10xf32, #tpu.memory_space<vmem>>, vector<224x10xf32>,
    %c0_44 = arith.constant 0 : index
    %c0_45 = arith.constant 0 : index
    %43 = tpu.strided_load %arg13[%c0_44, %c0_45] {strides = array<i32: 2, 1>} : memref<224x10xf32, #tpu.memory_space<vmem>>, vector<7x10xf32>
    %c1_46 = arith.constant 1 : index
    %c0_47 = arith.constant 0 : index
    %44 = tpu.strided_load %arg13[%c1_46, %c0_47] {strides = array<i32: 2, 1>} : memref<224x10xf32, #tpu.memory_space<vmem>>, vector<7x10xf32>
    %45 = arith.maximumf %43, %44 : vector<7x10xf32>
    %c16_48 = arith.constant 16 : index
    %c0_49 = arith.constant 0 : index
    %46 = tpu.strided_load %arg13[%c16_48, %c0_49] {strides = array<i32: 2, 1>} : memref<224x10xf32, #tpu.memory_space<vmem>>, vector<7x10xf32>
    %c17_50 = arith.constant 17 : index
    %c0_51 = arith.constant 0 : index
    %47 = tpu.strided_load %arg13[%c17_50, %c0_51] {strides = array<i32: 2, 1>} : memref<224x10xf32, #tpu.memory_space<vmem>>, vector<7x10xf32>
    %48 = arith.maximumf %46, %47 : vector<7x10xf32>
    %49 = arith.maximumf %45, %48 : vector<7x10xf32>
    %c0_52 = arith.constant 0 : index
    %c0_53 = arith.constant 0 : index
    %50 = vector.load %arg14[%c0_52, %c0_53] : memref<53x10xf32, #tpu.memory_space<vmem>>, vector<7x10xf32>
    tpu.vector_store %arg14[%c0_52, %c0_53], %49 {strides = array<i32>} : memref<53x10xf32, #tpu.memory_space<vmem>>, vector<7x10xf32>,
    %c32_54 = arith.constant 32 : index
    %c0_55 = arith.constant 0 : index
    %51 = tpu.strided_load %arg13[%c32_54, %c0_55] {strides = array<i32: 2, 1>} : memref<224x10xf32, #tpu.memory_space<vmem>>, vector<7x10xf32>
    %c33_56 = arith.constant 33 : index
    %c0_57 = arith.constant 0 : index
    %52 = tpu.strided_load %arg13[%c33_56, %c0_57] {strides = array<i32: 2, 1>} : memref<224x10xf32, #tpu.memory_space<vmem>>, vector<7x10xf32>
    %53 = arith.maximumf %51, %52 : vector<7x10xf32>
    %c48 = arith.constant 48 : index
    %c0_58 = arith.constant 0 : index
    %54 = tpu.strided_load %arg13[%c48, %c0_58] {strides = array<i32: 2, 1>} : memref<224x10xf32, #tpu.memory_space<vmem>>, vector<7x10xf32>
    %c49 = arith.constant 49 : index
    %c0_59 = arith.constant 0 : index
    %55 = tpu.strided_load %arg13[%c49, %c0_59] {strides = array<i32: 2, 1>} : memref<224x10xf32, #tpu.memory_space<vmem>>, vector<7x10xf32>
    %56 = arith.maximumf %54, %55 : vector<7x10xf32>
    %57 = arith.maximumf %53, %56 : vector<7x10xf32>
    %c7 = arith.constant 7 : index
    %c0_60 = arith.constant 0 : index
    %58 = vector.load %arg14[%c7, %c0_60] : memref<53x10xf32, #tpu.memory_space<vmem>>, vector<7x10xf32>
    tpu.vector_store %arg14[%c7, %c0_60], %57 {strides = array<i32>} : memref<53x10xf32, #tpu.memory_space<vmem>>, vector<7x10xf32>,
    %c64 = arith.constant 64 : index
    %c0_61 = arith.constant 0 : index
    %59 = tpu.strided_load %arg13[%c64, %c0_61] {strides = array<i32: 2, 1>} : memref<224x10xf32, #tpu.memory_space<vmem>>, vector<7x10xf32>
    %c65 = arith.constant 65 : index
    %c0_62 = arith.constant 0 : index
    %60 = tpu.strided_load %arg13[%c65, %c0_62] {strides = array<i32: 2, 1>} : memref<224x10xf32, #tpu.memory_space<vmem>>, vector<7x10xf32>
    %61 = arith.maximumf %59, %60 : vector<7x10xf32>
    %c80 = arith.constant 80 : index
    %c0_63 = arith.constant 0 : index
    %62 = tpu.strided_load %arg13[%c80, %c0_63] {strides = array<i32: 2, 1>} : memref<224x10xf32, #tpu.memory_space<vmem>>, vector<7x10xf32>
    %c81 = arith.constant 81 : index
    %c0_64 = arith.constant 0 : index
    %63 = tpu.strided_load %arg13[%c81, %c0_64] {strides = array<i32: 2, 1>} : memref<224x10xf32, #tpu.memory_space<vmem>>, vector<7x10xf32>
    %64 = arith.maximumf %62, %63 : vector<7x10xf32>
    %65 = arith.maximumf %61, %64 : vector<7x10xf32>
    %c14 = arith.constant 14 : index
    %c0_65 = arith.constant 0 : index
    %66 = vector.load %arg14[%c14, %c0_65] : memref<53x10xf32, #tpu.memory_space<vmem>>, vector<7x10xf32>
    tpu.vector_store %arg14[%c14, %c0_65], %65 {strides = array<i32>} : memref<53x10xf32, #tpu.memory_space<vmem>>, vector<7x10xf32>,
    %c96 = arith.constant 96 : index
    %c0_66 = arith.constant 0 : index
    %67 = tpu.strided_load %arg13[%c96, %c0_66] {strides = array<i32: 2, 1>} : memref<224x10xf32, #tpu.memory_space<vmem>>, vector<7x10xf32>
    %c97 = arith.constant 97 : index
    %c0_67 = arith.constant 0 : index
    %68 = tpu.strided_load %arg13[%c97, %c0_67] {strides = array<i32: 2, 1>} : memref<224x10xf32, #tpu.memory_space<vmem>>, vector<7x10xf32>
    %69 = arith.maximumf %67, %68 : vector<7x10xf32>
    %c112 = arith.constant 112 : index
    %c0_68 = arith.constant 0 : index
    %70 = tpu.strided_load %arg13[%c112, %c0_68] {strides = array<i32: 2, 1>} : memref<224x10xf32, #tpu.memory_space<vmem>>, vector<7x10xf32>
    %c113 = arith.constant 113 : index
    %c0_69 = arith.constant 0 : index
    %71 = tpu.strided_load %arg13[%c113, %c0_69] {strides = array<i32: 2, 1>} : memref<224x10xf32, #tpu.memory_space<vmem>>, vector<7x10xf32>
    %72 = arith.maximumf %70, %71 : vector<7x10xf32>
    %73 = arith.maximumf %69, %72 : vector<7x10xf32>
    %c21_70 = arith.constant 21 : index
    %c0_71 = arith.constant 0 : index
    %74 = vector.load %arg14[%c21_70, %c0_71] : memref<53x10xf32, #tpu.memory_space<vmem>>, vector<7x10xf32>
    tpu.vector_store %arg14[%c21_70, %c0_71], %73 {strides = array<i32>} : memref<53x10xf32, #tpu.memory_space<vmem>>, vector<7x10xf32>,
    %c128 = arith.constant 128 : index
    %c0_72 = arith.constant 0 : index
    %75 = tpu.strided_load %arg13[%c128, %c0_72] {strides = array<i32: 2, 1>} : memref<224x10xf32, #tpu.memory_space<vmem>>, vector<7x10xf32>
    %c129 = arith.constant 129 : index
    %c0_73 = arith.constant 0 : index
    %76 = tpu.strided_load %arg13[%c129, %c0_73] {strides = array<i32: 2, 1>} : memref<224x10xf32, #tpu.memory_space<vmem>>, vector<7x10xf32>
    %77 = arith.maximumf %75, %76 : vector<7x10xf32>
    %c144 = arith.constant 144 : index
    %c0_74 = arith.constant 0 : index
    %78 = tpu.strided_load %arg13[%c144, %c0_74] {strides = array<i32: 2, 1>} : memref<224x10xf32, #tpu.memory_space<vmem>>, vector<7x10xf32>
    %c145 = arith.constant 145 : index
    %c0_75 = arith.constant 0 : index
    %79 = tpu.strided_load %arg13[%c145, %c0_75] {strides = array<i32: 2, 1>} : memref<224x10xf32, #tpu.memory_space<vmem>>, vector<7x10xf32>
    %80 = arith.maximumf %78, %79 : vector<7x10xf32>
    %81 = arith.maximumf %77, %80 : vector<7x10xf32>
    %c28 = arith.constant 28 : index
    %c0_76 = arith.constant 0 : index
    %82 = vector.load %arg14[%c28, %c0_76] : memref<53x10xf32, #tpu.memory_space<vmem>>, vector<7x10xf32>
    tpu.vector_store %arg14[%c28, %c0_76], %81 {strides = array<i32>} : memref<53x10xf32, #tpu.memory_space<vmem>>, vector<7x10xf32>,
    %c160 = arith.constant 160 : index
    %c0_77 = arith.constant 0 : index
    %83 = tpu.strided_load %arg13[%c160, %c0_77] {strides = array<i32: 2, 1>} : memref<224x10xf32, #tpu.memory_space<vmem>>, vector<7x10xf32>
    %c161 = arith.constant 161 : index
    %c0_78 = arith.constant 0 : index
    %84 = tpu.strided_load %arg13[%c161, %c0_78] {strides = array<i32: 2, 1>} : memref<224x10xf32, #tpu.memory_space<vmem>>, vector<7x10xf32>
    %85 = arith.maximumf %83, %84 : vector<7x10xf32>
    %c176 = arith.constant 176 : index
    %c0_79 = arith.constant 0 : index
    %86 = tpu.strided_load %arg13[%c176, %c0_79] {strides = array<i32: 2, 1>} : memref<224x10xf32, #tpu.memory_space<vmem>>, vector<7x10xf32>
    %c177 = arith.constant 177 : index
    %c0_80 = arith.constant 0 : index
    %87 = tpu.strided_load %arg13[%c177, %c0_80] {strides = array<i32: 2, 1>} : memref<224x10xf32, #tpu.memory_space<vmem>>, vector<7x10xf32>
    %88 = arith.maximumf %86, %87 : vector<7x10xf32>
    %89 = arith.maximumf %85, %88 : vector<7x10xf32>
    %c35 = arith.constant 35 : index
    %c0_81 = arith.constant 0 : index
    %90 = vector.load %arg14[%c35, %c0_81] : memref<53x10xf32, #tpu.memory_space<vmem>>, vector<7x10xf32>
    tpu.vector_store %arg14[%c35, %c0_81], %89 {strides = array<i32>} : memref<53x10xf32, #tpu.memory_space<vmem>>, vector<7x10xf32>,
    %c192 = arith.constant 192 : index
    %c0_82 = arith.constant 0 : index
    %91 = tpu.strided_load %arg13[%c192, %c0_82] {strides = array<i32: 2, 1>} : memref<224x10xf32, #tpu.memory_space<vmem>>, vector<7x10xf32>
    %c193 = arith.constant 193 : index
    %c0_83 = arith.constant 0 : index
    %92 = tpu.strided_load %arg13[%c193, %c0_83] {strides = array<i32: 2, 1>} : memref<224x10xf32, #tpu.memory_space<vmem>>, vector<7x10xf32>
    %93 = arith.maximumf %91, %92 : vector<7x10xf32>
    %c208 = arith.constant 208 : index
    %c0_84 = arith.constant 0 : index
    %94 = tpu.strided_load %arg13[%c208, %c0_84] {strides = array<i32: 2, 1>} : memref<224x10xf32, #tpu.memory_space<vmem>>, vector<7x10xf32>
    %c209 = arith.constant 209 : index
    %c0_85 = arith.constant 0 : index
    %95 = tpu.strided_load %arg13[%c209, %c0_85] {strides = array<i32: 2, 1>} : memref<224x10xf32, #tpu.memory_space<vmem>>, vector<7x10xf32>
    %96 = arith.maximumf %94, %95 : vector<7x10xf32>
    %97 = arith.maximumf %93, %96 : vector<7x10xf32>
    %c42 = arith.constant 42 : index
    %c0_86 = arith.constant 0 : index
    %98 = vector.load %arg14[%c42, %c0_86] : memref<53x10xf32, #tpu.memory_space<vmem>>, vector<7x10xf32>
    tpu.vector_store %arg14[%c42, %c0_86], %97 {strides = array<i32>} : memref<53x10xf32, #tpu.memory_space<vmem>>, vector<7x10xf32>,
    %cst_87 = arith.constant 0.000000e+00 : f32
    %99 = vector.broadcast %cst_87 : f32 to vector<4x10xf32>
    %c49_88 = arith.constant 49 : index
    %c0_89 = arith.constant 0 : index
    %100 = vector.load %arg14[%c49_88, %c0_89] : memref<53x10xf32, #tpu.memory_space<vmem>>, vector<4x10xf32>
    tpu.vector_store %arg14[%c49_88, %c0_89], %99 {strides = array<i32>} : memref<53x10xf32, #tpu.memory_space<vmem>>, vector<4x10xf32>,
    %c0_90 = arith.constant 0 : index
    %c0_91 = arith.constant 0 : index
    %101 = vector.load %arg14[%c0_90, %c0_91] : memref<53x10xf32, #tpu.memory_space<vmem>>, vector<37x10xf32>
    %c0_92 = arith.constant 0 : index
    %c0_93 = arith.constant 0 : index
    %102 = vector.load %arg12[%c0_92, %c0_93] : memref<224x144xf32, #tpu.memory_space<vmem>>, vector<37x10xf32>
    tpu.vector_store %arg12[%c0_92, %c0_93], %101 {strides = array<i32>} : memref<224x144xf32, #tpu.memory_space<vmem>>, vector<37x10xf32>,
    %c1_94 = arith.constant 1 : index
    %c0_95 = arith.constant 0 : index
    %103 = vector.load %arg14[%c1_94, %c0_95] : memref<53x10xf32, #tpu.memory_space<vmem>>, vector<37x10xf32>
    %c0_96 = arith.constant 0 : index
    %c10 = arith.constant 10 : index
    %104 = vector.load %arg12[%c0_96, %c10] : memref<224x144xf32, #tpu.memory_space<vmem>>, vector<37x10xf32>
    tpu.vector_store %arg12[%c0_96, %c10], %103 {strides = array<i32>} : memref<224x144xf32, #tpu.memory_space<vmem>>, vector<37x10xf32>,
    %c2_97 = arith.constant 2 : index
    %c0_98 = arith.constant 0 : index
    %105 = vector.load %arg14[%c2_97, %c0_98] : memref<53x10xf32, #tpu.memory_space<vmem>>, vector<37x10xf32>
    %c0_99 = arith.constant 0 : index
    %c20 = arith.constant 20 : index
    %106 = vector.load %arg12[%c0_99, %c20] : memref<224x144xf32, #tpu.memory_space<vmem>>, vector<37x10xf32>
    tpu.vector_store %arg12[%c0_99, %c20], %105 {strides = array<i32>} : memref<224x144xf32, #tpu.memory_space<vmem>>, vector<37x10xf32>,
    %c7_100 = arith.constant 7 : index
    %c0_101 = arith.constant 0 : index
    %107 = vector.load %arg14[%c7_100, %c0_101] : memref<53x10xf32, #tpu.memory_space<vmem>>, vector<37x10xf32>
    %c0_102 = arith.constant 0 : index
    %c30 = arith.constant 30 : index
    %108 = vector.load %arg12[%c0_102, %c30] : memref<224x144xf32, #tpu.memory_space<vmem>>, vector<37x10xf32>
    tpu.vector_store %arg12[%c0_102, %c30], %107 {strides = array<i32>} : memref<224x144xf32, #tpu.memory_space<vmem>>, vector<37x10xf32>,
    %c8 = arith.constant 8 : index
    %c0_103 = arith.constant 0 : index
    %109 = vector.load %arg14[%c8, %c0_103] : memref<53x10xf32, #tpu.memory_space<vmem>>, vector<37x10xf32>
    %c0_104 = arith.constant 0 : index
    %c40 = arith.constant 40 : index
    %110 = vector.load %arg12[%c0_104, %c40] : memref<224x144xf32, #tpu.memory_space<vmem>>, vector<37x10xf32>
    tpu.vector_store %arg12[%c0_104, %c40], %109 {strides = array<i32>} : memref<224x144xf32, #tpu.memory_space<vmem>>, vector<37x10xf32>,
    %c9_105 = arith.constant 9 : index
    %c0_106 = arith.constant 0 : index
    %111 = vector.load %arg14[%c9_105, %c0_106] : memref<53x10xf32, #tpu.memory_space<vmem>>, vector<37x10xf32>
    %c0_107 = arith.constant 0 : index
    %c50 = arith.constant 50 : index
    %112 = vector.load %arg12[%c0_107, %c50] : memref<224x144xf32, #tpu.memory_space<vmem>>, vector<37x10xf32>
    tpu.vector_store %arg12[%c0_107, %c50], %111 {strides = array<i32>} : memref<224x144xf32, #tpu.memory_space<vmem>>, vector<37x10xf32>,
    %c14_108 = arith.constant 14 : index
    %c0_109 = arith.constant 0 : index
    %113 = vector.load %arg14[%c14_108, %c0_109] : memref<53x10xf32, #tpu.memory_space<vmem>>, vector<37x10xf32>
    %c0_110 = arith.constant 0 : index
    %c60 = arith.constant 60 : index
    %114 = vector.load %arg12[%c0_110, %c60] : memref<224x144xf32, #tpu.memory_space<vmem>>, vector<37x10xf32>
    tpu.vector_store %arg12[%c0_110, %c60], %113 {strides = array<i32>} : memref<224x144xf32, #tpu.memory_space<vmem>>, vector<37x10xf32>,
    %c15_111 = arith.constant 15 : index
    %c0_112 = arith.constant 0 : index
    %115 = vector.load %arg14[%c15_111, %c0_112] : memref<53x10xf32, #tpu.memory_space<vmem>>, vector<37x10xf32>
    %c0_113 = arith.constant 0 : index
    %c70 = arith.constant 70 : index
    %116 = vector.load %arg12[%c0_113, %c70] : memref<224x144xf32, #tpu.memory_space<vmem>>, vector<37x10xf32>
    tpu.vector_store %arg12[%c0_113, %c70], %115 {strides = array<i32>} : memref<224x144xf32, #tpu.memory_space<vmem>>, vector<37x10xf32>,
    %c16_114 = arith.constant 16 : index
    %c0_115 = arith.constant 0 : index
    %117 = vector.load %arg14[%c16_114, %c0_115] : memref<53x10xf32, #tpu.memory_space<vmem>>, vector<37x10xf32>
    %c0_116 = arith.constant 0 : index
    %c80_117 = arith.constant 80 : index
    %118 = vector.load %arg12[%c0_116, %c80_117] : memref<224x144xf32, #tpu.memory_space<vmem>>, vector<37x10xf32>
    tpu.vector_store %arg12[%c0_116, %c80_117], %117 {strides = array<i32>} : memref<224x144xf32, #tpu.memory_space<vmem>>, vector<37x10xf32>,
    %c0_118 = arith.constant 0 : index
    %c0_119 = arith.constant 0 : index
    %119 = vector.load %arg12[%c0_118, %c0_119] : memref<224x144xf32, #tpu.memory_space<vmem>>, vector<37x90xf32>
    %120 = arith.truncf %119 : vector<37x90xf32> to vector<37x90xbf16>
    %c0_120 = arith.constant 0 : index
    %c0_121 = arith.constant 0 : index
    %121 = vector.load %arg4[%c0_120, %c0_121] : memref<90x16xbf16, #tpu.memory_space<vmem>>, vector<90x16xbf16>
    %cst_122 = arith.constant dense<0.000000e+00> : vector<37x16xf32>
    %122 = tpu.matmul %120, %121, %cst_122 {dimension_numbers = #tpu.dot_dimension_numbers<[1], [0], [0], [1], [0, 0, 1, 1], [], []>} : vector<37x90xbf16>, vector<90x16xbf16>, vector<37x16xf32> -> vector<37x16xf32>
    %c0_123 = arith.constant 0 : index
    %c0_124 = arith.constant 0 : index
    %123 = vector.load %arg5[%c0_123, %c0_124] : memref<1x16xf32, #tpu.memory_space<vmem>>, vector<1x16xf32>
    %124 = vector.broadcast %123 : vector<1x16xf32> to vector<37x16xf32>
    %125 = arith.addf %122, %124 : vector<37x16xf32>
    %cst_125 = arith.constant 0.000000e+00 : f32
    %126 = vector.broadcast %cst_125 : f32 to vector<37x16xf32>
    %127 = arith.cmpf ogt, %125, %126 : vector<37x16xf32>
    %128 = vector.broadcast %1 : vector<1x1xf32> to vector<37x16xf32>
    %129 = arith.mulf %128, %125 : vector<37x16xf32>
    %130 = arith.select %127, %125, %129 : vector<37x16xi1>, vector<37x16xf32>
    %c0_126 = arith.constant 0 : index
    %c0_127 = arith.constant 0 : index
    %131 = vector.load %arg15[%c0_126, %c0_127] : memref<37x16xf32, #tpu.memory_space<vmem>>, vector<37x16xf32>
    tpu.vector_store %arg15[%c0_126, %c0_127], %130 {strides = array<i32>} : memref<37x16xf32, #tpu.memory_space<vmem>>, vector<37x16xf32>,
    %c0_128 = arith.constant 0 : index
    %c0_129 = arith.constant 0 : index
    %132 = vector.load %arg15[%c0_128, %c0_129] : memref<37x16xf32, #tpu.memory_space<vmem>>, vector<21x16xf32>
    %c0_130 = arith.constant 0 : index
    %c0_131 = arith.constant 0 : index
    %133 = vector.load %arg12[%c0_130, %c0_131] : memref<224x144xf32, #tpu.memory_space<vmem>>, vector<21x16xf32>
    tpu.vector_store %arg12[%c0_130, %c0_131], %132 {strides = array<i32>} : memref<224x144xf32, #tpu.memory_space<vmem>>, vector<21x16xf32>,
    %c1_132 = arith.constant 1 : index
    %c0_133 = arith.constant 0 : index
    %134 = vector.load %arg15[%c1_132, %c0_133] : memref<37x16xf32, #tpu.memory_space<vmem>>, vector<21x16xf32>
    %c0_134 = arith.constant 0 : index
    %c16_135 = arith.constant 16 : index
    %135 = vector.load %arg12[%c0_134, %c16_135] : memref<224x144xf32, #tpu.memory_space<vmem>>, vector<21x16xf32>
    tpu.vector_store %arg12[%c0_134, %c16_135], %134 {strides = array<i32>} : memref<224x144xf32, #tpu.memory_space<vmem>>, vector<21x16xf32>,
    %c2_136 = arith.constant 2 : index
    %c0_137 = arith.constant 0 : index
    %136 = vector.load %arg15[%c2_136, %c0_137] : memref<37x16xf32, #tpu.memory_space<vmem>>, vector<21x16xf32>
    %c0_138 = arith.constant 0 : index
    %c32_139 = arith.constant 32 : index
    %137 = vector.load %arg12[%c0_138, %c32_139] : memref<224x144xf32, #tpu.memory_space<vmem>>, vector<21x16xf32>
    tpu.vector_store %arg12[%c0_138, %c32_139], %136 {strides = array<i32>} : memref<224x144xf32, #tpu.memory_space<vmem>>, vector<21x16xf32>,
    %c7_140 = arith.constant 7 : index
    %c0_141 = arith.constant 0 : index
    %138 = vector.load %arg15[%c7_140, %c0_141] : memref<37x16xf32, #tpu.memory_space<vmem>>, vector<21x16xf32>
    %c0_142 = arith.constant 0 : index
    %c48_143 = arith.constant 48 : index
    %139 = vector.load %arg12[%c0_142, %c48_143] : memref<224x144xf32, #tpu.memory_space<vmem>>, vector<21x16xf32>
    tpu.vector_store %arg12[%c0_142, %c48_143], %138 {strides = array<i32>} : memref<224x144xf32, #tpu.memory_space<vmem>>, vector<21x16xf32>,
    %c8_144 = arith.constant 8 : index
    %c0_145 = arith.constant 0 : index
    %140 = vector.load %arg15[%c8_144, %c0_145] : memref<37x16xf32, #tpu.memory_space<vmem>>, vector<21x16xf32>
    %c0_146 = arith.constant 0 : index
    %c64_147 = arith.constant 64 : index
    %141 = vector.load %arg12[%c0_146, %c64_147] : memref<224x144xf32, #tpu.memory_space<vmem>>, vector<21x16xf32>
    tpu.vector_store %arg12[%c0_146, %c64_147], %140 {strides = array<i32>} : memref<224x144xf32, #tpu.memory_space<vmem>>, vector<21x16xf32>,
    %c9_148 = arith.constant 9 : index
    %c0_149 = arith.constant 0 : index
    %142 = vector.load %arg15[%c9_148, %c0_149] : memref<37x16xf32, #tpu.memory_space<vmem>>, vector<21x16xf32>
    %c0_150 = arith.constant 0 : index
    %c80_151 = arith.constant 80 : index
    %143 = vector.load %arg12[%c0_150, %c80_151] : memref<224x144xf32, #tpu.memory_space<vmem>>, vector<21x16xf32>
    tpu.vector_store %arg12[%c0_150, %c80_151], %142 {strides = array<i32>} : memref<224x144xf32, #tpu.memory_space<vmem>>, vector<21x16xf32>,
    %c14_152 = arith.constant 14 : index
    %c0_153 = arith.constant 0 : index
    %144 = vector.load %arg15[%c14_152, %c0_153] : memref<37x16xf32, #tpu.memory_space<vmem>>, vector<21x16xf32>
    %c0_154 = arith.constant 0 : index
    %c96_155 = arith.constant 96 : index
    %145 = vector.load %arg12[%c0_154, %c96_155] : memref<224x144xf32, #tpu.memory_space<vmem>>, vector<21x16xf32>
    tpu.vector_store %arg12[%c0_154, %c96_155], %144 {strides = array<i32>} : memref<224x144xf32, #tpu.memory_space<vmem>>, vector<21x16xf32>,
    %c15_156 = arith.constant 15 : index
    %c0_157 = arith.constant 0 : index
    %146 = vector.load %arg15[%c15_156, %c0_157] : memref<37x16xf32, #tpu.memory_space<vmem>>, vector<21x16xf32>
    %c0_158 = arith.constant 0 : index
    %c112_159 = arith.constant 112 : index
    %147 = vector.load %arg12[%c0_158, %c112_159] : memref<224x144xf32, #tpu.memory_space<vmem>>, vector<21x16xf32>
    tpu.vector_store %arg12[%c0_158, %c112_159], %146 {strides = array<i32>} : memref<224x144xf32, #tpu.memory_space<vmem>>, vector<21x16xf32>,
    %c16_160 = arith.constant 16 : index
    %c0_161 = arith.constant 0 : index
    %148 = vector.load %arg15[%c16_160, %c0_161] : memref<37x16xf32, #tpu.memory_space<vmem>>, vector<21x16xf32>
    %c0_162 = arith.constant 0 : index
    %c128_163 = arith.constant 128 : index
    %149 = vector.load %arg12[%c0_162, %c128_163] : memref<224x144xf32, #tpu.memory_space<vmem>>, vector<21x16xf32>
    tpu.vector_store %arg12[%c0_162, %c128_163], %148 {strides = array<i32>} : memref<224x144xf32, #tpu.memory_space<vmem>>, vector<21x16xf32>,
    %c0_164 = arith.constant 0 : index
    %c0_165 = arith.constant 0 : index
    %150 = vector.load %arg12[%c0_164, %c0_165] : memref<224x144xf32, #tpu.memory_space<vmem>>, vector<21x144xf32>
    %151 = arith.truncf %150 : vector<21x144xf32> to vector<21x144xbf16>
    %c0_166 = arith.constant 0 : index
    %c0_167 = arith.constant 0 : index
    %152 = vector.load %arg6[%c0_166, %c0_167] : memref<144x32xbf16, #tpu.memory_space<vmem>>, vector<144x32xbf16>
    %cst_168 = arith.constant dense<0.000000e+00> : vector<21x32xf32>
    %153 = tpu.matmul %151, %152, %cst_168 {dimension_numbers = #tpu.dot_dimension_numbers<[1], [0], [0], [1], [0, 0, 1, 1], [], []>} : vector<21x144xbf16>, vector<144x32xbf16>, vector<21x32xf32> -> vector<21x32xf32>
    %c0_169 = arith.constant 0 : index
    %c0_170 = arith.constant 0 : index
    %154 = vector.load %arg7[%c0_169, %c0_170] : memref<1x32xf32, #tpu.memory_space<vmem>>, vector<1x32xf32>
    %155 = vector.broadcast %154 : vector<1x32xf32> to vector<21x32xf32>
    %156 = arith.addf %153, %155 : vector<21x32xf32>
    %cst_171 = arith.constant 0.000000e+00 : f32
    %157 = vector.broadcast %cst_171 : f32 to vector<21x32xf32>
    %158 = arith.cmpf ogt, %156, %157 : vector<21x32xf32>
    %159 = vector.broadcast %2 : vector<1x1xf32> to vector<21x32xf32>
    %160 = arith.mulf %159, %156 : vector<21x32xf32>
    %161 = arith.select %158, %156, %160 : vector<21x32xi1>, vector<21x32xf32>
    %162 = arith.truncf %161 : vector<21x32xf32> to vector<21x32xbf16>
    %c0_172 = arith.constant 0 : index
    %c0_173 = arith.constant 0 : index
    %163 = vector.load %arg8[%c0_172, %c0_173] : memref<32x5xbf16, #tpu.memory_space<vmem>>, vector<32x5xbf16>
    %cst_174 = arith.constant dense<0.000000e+00> : vector<21x5xf32>
    %164 = tpu.matmul %162, %163, %cst_174 {dimension_numbers = #tpu.dot_dimension_numbers<[1], [0], [0], [1], [0, 0, 1, 1], [], []>} : vector<21x32xbf16>, vector<32x5xbf16>, vector<21x5xf32> -> vector<21x5xf32>
    %c0_175 = arith.constant 0 : index
    %c0_176 = arith.constant 0 : index
    %165 = vector.load %arg9[%c0_175, %c0_176] : memref<1x5xf32, #tpu.memory_space<vmem>>, vector<1x5xf32>
    %166 = vector.broadcast %165 : vector<1x5xf32> to vector<21x5xf32>
    %167 = arith.addf %164, %166 : vector<21x5xf32>
    %168 = tpu.iota {dimensions = array<i32: 1>} : vector<21x5xi32>
    %c0_i32 = arith.constant 0 : i32
    %169 = vector.broadcast %c0_i32 : i32 to vector<21x5xi32>
    %170 = arith.cmpi eq, %168, %169 : vector<21x5xi32>
    %171 = arith.negf %167 : vector<21x5xf32>
    %172 = math.exp %171 : vector<21x5xf32>
    %cst_177 = arith.constant 1.000000e+00 : f32
    %173 = vector.broadcast %cst_177 : f32 to vector<21x5xf32>
    %174 = arith.addf %173, %172 : vector<21x5xf32>
    %175 = arith.divf %173, %174 : vector<21x5xf32>
    %176 = arith.select %170, %175, %167 : vector<21x5xi1>, vector<21x5xf32>
    %c0_178 = arith.constant 0 : index
    %c0_179 = arith.constant 0 : index
    %c0_180 = arith.constant 0 : index
    %177 = vector.load %arg11[%c0_178, %c0_179, %c0_180] : memref<1x21x5xf32, #tpu.memory_space<vmem>>, vector<1x21x5xf32>
    %178 = vector.shape_cast %177 : vector<1x21x5xf32> to vector<21x5xf32>
    %179 = vector.shape_cast %176 : vector<21x5xf32> to vector<1x21x5xf32>
    tpu.vector_store %arg11[%c0_178, %c0_179, %c0_180], %179 {strides = array<i32>} : memref<1x21x5xf32, #tpu.memory_space<vmem>>, vector<1x21x5xf32>,
    return
  }
  func.func @transform_0(%arg0: i32) -> (i32, i32, i32) {
    %c0_i32 = arith.constant 0 : i32
    %c0_i32_0 = arith.constant 0 : i32
    %c0_i32_1 = arith.constant 0 : i32
    return %arg0, %c0_i32, %c0_i32_0 : i32, i32, i32
  }
  func.func @transform_1(%arg0: i32) -> (i32, i32) {
    %c0_i32 = arith.constant 0 : i32
    %c0_i32_0 = arith.constant 0 : i32
    %c0_i32_1 = arith.constant 0 : i32
    return %c0_i32, %c0_i32_0 : i32, i32
  }
  func.func @transform_2(%arg0: i32) -> (i32, i32) {
    %c0_i32 = arith.constant 0 : i32
    %c0_i32_0 = arith.constant 0 : i32
    %c0_i32_1 = arith.constant 0 : i32
    return %c0_i32, %c0_i32_0 : i32, i32
  }
  func.func @transform_3(%arg0: i32) -> (i32, i32) {
    %c0_i32 = arith.constant 0 : i32
    %c0_i32_0 = arith.constant 0 : i32
    %c0_i32_1 = arith.constant 0 : i32
    return %c0_i32, %c0_i32_0 : i32, i32
  }
  func.func @transform_4(%arg0: i32) -> (i32, i32) {
    %c0_i32 = arith.constant 0 : i32
    %c0_i32_0 = arith.constant 0 : i32
    %c0_i32_1 = arith.constant 0 : i32
    return %c0_i32, %c0_i32_0 : i32, i32
  }
  func.func @transform_5(%arg0: i32) -> (i32, i32) {
    %c0_i32 = arith.constant 0 : i32
    %c0_i32_0 = arith.constant 0 : i32
    %c0_i32_1 = arith.constant 0 : i32
    return %c0_i32, %c0_i32_0 : i32, i32
  }
  func.func @transform_6(%arg0: i32) -> (i32, i32) {
    %c0_i32 = arith.constant 0 : i32
    %c0_i32_0 = arith.constant 0 : i32
    %c0_i32_1 = arith.constant 0 : i32
    return %c0_i32, %c0_i32_0 : i32, i32
  }
  func.func @transform_7(%arg0: i32) -> (i32, i32) {
    %c0_i32 = arith.constant 0 : i32
    %c0_i32_0 = arith.constant 0 : i32
    %c0_i32_1 = arith.constant 0 : i32
    return %c0_i32, %c0_i32_0 : i32, i32
  }
  func.func @transform_8(%arg0: i32) -> (i32, i32) {
    %c0_i32 = arith.constant 0 : i32
    %c0_i32_0 = arith.constant 0 : i32
    %c0_i32_1 = arith.constant 0 : i32
    return %c0_i32, %c0_i32_0 : i32, i32
  }
  func.func @transform_9(%arg0: i32) -> (i32, i32) {
    %c0_i32 = arith.constant 0 : i32
    %c0_i32_0 = arith.constant 0 : i32
    %c0_i32_1 = arith.constant 0 : i32
    return %c0_i32, %c0_i32_0 : i32, i32
  }
  func.func @transform_10(%arg0: i32) -> (i32, i32, i32) {
    %c0_i32 = arith.constant 0 : i32
    %c0_i32_0 = arith.constant 0 : i32
    %c0_i32_1 = arith.constant 0 : i32
    return %arg0, %c0_i32, %c0_i32_0 : i32, i32, i32
  }
}

</mosaic_0001>

<llo_original>
// kernel: pnet_forward.1
$region0: #{pnet_forward.1}
  #allocation0 [shape = 'u32[]', space=smem, size = 0x4, offset = 0x4, fixed_abs, tag = 'smem constant byte address 0x4 - core index']
  #allocation1 [shape = 'u32[72,128]{1,0:T(1,128)}', space=vmem, size = 0x9000, scoped, tag = 'internal scratch']
  #allocation2 [shape = 'f32[224,144]{1,0:T(8,128)}', space=vmem, size = 0x38000, scoped, tag = 'scratch operand']
  #allocation3 [shape = 'f32[224,10]{1,0:T(8,128)}', space=vmem, size = 0x1c000, scoped, tag = 'scratch operand']
  #allocation4 [shape = 'f32[53,10]{1,0:T(8,128)}', space=vmem, size = 0x7000, scoped, tag = 'scratch operand']
  #allocation5 [shape = 'f32[37,16]{1,0:T(8,128)}', space=vmem, size = 0x5000, scoped, tag = 'scratch operand']
  %s0 = inlined_call_operand.vmem [shape: f32[2,264,3], index: 0, kind: input, shape index: {}]
  %s1 = inlined_call_operand.vmem [shape: bf16[27,10], index: 1, kind: input, shape index: {}]
  %s2 = inlined_call_operand.vmem [shape: f32[1,10], index: 2, kind: input, shape index: {}]
  %s3 = inlined_call_operand.vmem [shape: bf16[90,16], index: 3, kind: input, shape index: {}]
  %s4 = inlined_call_operand.vmem [shape: f32[1,16], index: 4, kind: input, shape index: {}]
  %s5 = inlined_call_operand.vmem [shape: bf16[144,32], index: 5, kind: input, shape index: {}]
  %s6 = inlined_call_operand.vmem [shape: f32[1,32], index: 6, kind: input, shape index: {}]
  %s7 = inlined_call_operand.vmem [shape: bf16[32,5], index: 7, kind: input, shape index: {}]
  %s8 = inlined_call_operand.vmem [shape: f32[1,5], index: 8, kind: input, shape index: {}]
  %s9 = inlined_call_operand.vmem [shape: f32[1,3], index: 9, kind: input, shape index: {}]
  %s10 = inlined_call_operand.vmem [shape: f32[2,21,5], index: 10, kind: output, shape index: {}]
  %s11 = sld [smem:[#allocation0]]
  $region73: #{pnet_forward.1} parent=0
    _
  %s13 = ssub.s32 1, %s11
  %s14 = scalar_select 0, %s13, %s11
  loop: start=0, step=1, limit=4
  $region2: #{pnet_forward.1} parent=0 // loop_pre_header
    _
  $region3: #{pnet_forward.1} parent=0 // loop_header
    %s16 = sphi 0, %s20
    %p17 = scmp.ge.s32.totalorder %s16, 4
    %s26 = sphi 0, %s28
    %s29 = sphi 0, %s26
    %s30 = sphi 0, %s29
    %s46 = sphi 0, %s30
    %s50 = sphi 0, %s50
    %s52 = sphi 0, %s50
    %s53 = sphi 0, %s52
    %s67 = sphi 0, %s53
    %s71 = sphi 0, %s71
    %s73 = sphi 0, %s71
    %s74 = sphi 0, %s73
    %s88 = sphi 0, %s74
    %s92 = sphi 0, %s92
    %s94 = sphi 0, %s92
    %s95 = sphi 0, %s94
    %s109 = sphi 0, %s95
    %s113 = sphi 0, %s113
    %s115 = sphi 0, %s113
    %s116 = sphi 0, %s115
    %s130 = sphi 0, %s116
    %s134 = sphi 0, %s134
    %s136 = sphi 0, %s134
    %s137 = sphi 0, %s136
    %s151 = sphi 0, %s137
    %s155 = sphi 0, %s155
    %s157 = sphi 0, %s155
    %s158 = sphi 0, %s157
    %s172 = sphi 0, %s158
    %s176 = sphi 0, %s176
    %s178 = sphi 0, %s176
    %s179 = sphi 0, %s178
    %s193 = sphi 0, %s179
    %s197 = sphi 0, %s197
    %s199 = sphi 0, %s197
    %s200 = sphi 0, %s199
    %s214 = sphi 0, %s200
    %s218 = sphi 0, %s218
    %s220 = sphi 0, %s218
    %s221 = sphi 0, %s220
    %s235 = sphi 0, %s221
    %s241 = sphi 0, %s243
    %s244 = sphi 0, %s241
    %s245 = sphi 0, %s244
    %s261 = sphi 0, %s245
  $region4: #{pnet_forward.1} parent=0 // loop_header_branch
    %19 = sbr.rel (%p17) target = $region8
  $region5: #{pnet_forward.1} parent=0 // loop_body
    %s21 = ssub.s32 %s16, 1
    %s22 = ssub.s32 %s16, 2
    %s23 = sadd.s32 %s16, 1
    %s24 = ssub.s32 %s16, %s23
    %p25 = scmp.eq.s32.totalorder %s24, 0
    %s27 = sadd.s32 %s26, 1
    %s28 = scalar_select %p25, %s26, %s27
    %p31 = pneg %p25
    %p32 = scmp.eq.s32.totalorder %s16, 1
    %p33 = por %p31, %p32
    %p34 = scmp.ne.s32.totalorder %s26, %s29
    %p35 = scmp.eq.s32.totalorder %s16, 0
    %p36 = por %p34, %p35
    %p37 = scmp.ne.s32.totalorder %s26, %s29
    %p38 = scmp.eq.s32.totalorder %s21, 1
    %p39 = por %p37, %p38
    %p40 = scmp.ne.s32.totalorder %s29, %s30
    %p41 = scmp.eq.s32.totalorder %s21, 0
    %p42 = por %p40, %p41
    %p43 = scmp.ne.s32.totalorder %s29, %s30
    %p44 = scmp.eq.s32.totalorder %s22, 1
    %p45 = por %p43, %p44
    %p47 = scmp.ne.s32.totalorder %s30, %s46
    %p48 = scmp.eq.s32.totalorder %s22, 0
    %p49 = por %p47, %p48
    %s51 = sadd.s32 %s50, 1
    %p54 = scmp.eq.s32.totalorder %s16, 1
    %p55 = scmp.ne.s32.totalorder %s50, %s52
    %p56 = scmp.eq.s32.totalorder %s16, 0
    %p57 = por %p55, %p56
    %p58 = scmp.ne.s32.totalorder %s50, %s52
    %p59 = scmp.eq.s32.totalorder %s21, 1
    %p60 = por %p58, %p59
    %p61 = scmp.ne.s32.totalorder %s52, %s53
    %p62 = scmp.eq.s32.totalorder %s21, 0
    %p63 = por %p61, %p62
    %p64 = scmp.ne.s32.totalorder %s52, %s53
    %p65 = scmp.eq.s32.totalorder %s22, 1
    %p66 = por %p64, %p65
    %p68 = scmp.ne.s32.totalorder %s53, %s67
    %p69 = scmp.eq.s32.totalorder %s22, 0
    %p70 = por %p68, %p69
    %s72 = sadd.s32 %s71, 1
    %p75 = scmp.eq.s32.totalorder %s16, 1
    %p76 = scmp.ne.s32.totalorder %s71, %s73
    %p77 = scmp.eq.s32.totalorder %s16, 0
    %p78 = por %p76, %p77
    %p79 = scmp.ne.s32.totalorder %s71, %s73
    %p80 = scmp.eq.s32.totalorder %s21, 1
    %p81 = por %p79, %p80
    %p82 = scmp.ne.s32.totalorder %s73, %s74
    %p83 = scmp.eq.s32.totalorder %s21, 0
    %p84 = por %p82, %p83
    %p85 = scmp.ne.s32.totalorder %s73, %s74
    %p86 = scmp.eq.s32.totalorder %s22, 1
    %p87 = por %p85, %p86
    %p89 = scmp.ne.s32.totalorder %s74, %s88
    %p90 = scmp.eq.s32.totalorder %s22, 0
    %p91 = por %p89, %p90
    %s93 = sadd.s32 %s92, 1
    %p96 = scmp.eq.s32.totalorder %s16, 1
    %p97 = scmp.ne.s32.totalorder %s92, %s94
    %p98 = scmp.eq.s32.totalorder %s16, 0
    %p99 = por %p97, %p98
    %p100 = scmp.ne.s32.totalorder %s92, %s94
    %p101 = scmp.eq.s32.totalorder %s21, 1
    %p102 = por %p100, %p101
    %p103 = scmp.ne.s32.totalorder %s94, %s95
    %p104 = scmp.eq.s32.totalorder %s21, 0
    %p105 = por %p103, %p104
    %p106 = scmp.ne.s32.totalorder %s94, %s95
    %p107 = scmp.eq.s32.totalorder %s22, 1
    %p108 = por %p106, %p107
    %p110 = scmp.ne.s32.totalorder %s95, %s109
    %p111 = scmp.eq.s32.totalorder %s22, 0
    %p112 = por %p110, %p111
    %s114 = sadd.s32 %s113, 1
    %p117 = scmp.eq.s32.totalorder %s16, 1
    %p118 = scmp.ne.s32.totalorder %s113, %s115
    %p119 = scmp.eq.s32.totalorder %s16, 0
    %p120 = por %p118, %p119
    %p121 = scmp.ne.s32.totalorder %s113, %s115
    %p122 = scmp.eq.s32.totalorder %s21, 1
    %p123 = por %p121, %p122
    %p124 = scmp.ne.s32.totalorder %s115, %s116
    %p125 = scmp.eq.s32.totalorder %s21, 0
    %p126 = por %p124, %p125
    %p127 = scmp.ne.s32.totalorder %s115, %s116
    %p128 = scmp.eq.s32.totalorder %s22, 1
    %p129 = por %p127, %p128
    %p131 = scmp.ne.s32.totalorder %s116, %s130
    %p132 = scmp.eq.s32.totalorder %s22, 0
    %p133 = por %p131, %p132
    %s135 = sadd.s32 %s134, 1
    %p138 = scmp.eq.s32.totalorder %s16, 1
    %p139 = scmp.ne.s32.totalorder %s134, %s136
    %p140 = scmp.eq.s32.totalorder %s16, 0
    %p141 = por %p139, %p140
    %p142 = scmp.ne.s32.totalorder %s134, %s136
    %p143 = scmp.eq.s32.totalorder %s21, 1
    %p144 = por %p142, %p143
    %p145 = scmp.ne.s32.totalorder %s136, %s137
    %p146 = scmp.eq.s32.totalorder %s21, 0
    %p147 = por %p145, %p146
    %p148 = scmp.ne.s32.totalorder %s136, %s137
    %p149 = scmp.eq.s32.totalorder %s22, 1
    %p150 = por %p148, %p149
    %p152 = scmp.ne.s32.totalorder %s137, %s151
    %p153 = scmp.eq.s32.totalorder %s22, 0
    %p154 = por %p152, %p153
    %s156 = sadd.s32 %s155, 1
    %p159 = scmp.eq.s32.totalorder %s16, 1
    %p160 = scmp.ne.s32.totalorder %s155, %s157
    %p161 = scmp.eq.s32.totalorder %s16, 0
    %p162 = por %p160, %p161
    %p163 = scmp.ne.s32.totalorder %s155, %s157
    %p164 = scmp.eq.s32.totalorder %s21, 1
    %p165 = por %p163, %p164
    %p166 = scmp.ne.s32.totalorder %s157, %s158
    %p167 = scmp.eq.s32.totalorder %s21, 0
    %p168 = por %p166, %p167
    %p169 = scmp.ne.s32.totalorder %s157, %s158
    %p170 = scmp.eq.s32.totalorder %s22, 1
    %p171 = por %p169, %p170
    %p173 = scmp.ne.s32.totalorder %s158, %s172
    %p174 = scmp.eq.s32.totalorder %s22, 0
    %p175 = por %p173, %p174
    %s177 = sadd.s32 %s176, 1
    %p180 = scmp.eq.s32.totalorder %s16, 1
    %p181 = scmp.ne.s32.totalorder %s176, %s178
    %p182 = scmp.eq.s32.totalorder %s16, 0
    %p183 = por %p181, %p182
    %p184 = scmp.ne.s32.totalorder %s176, %s178
    %p185 = scmp.eq.s32.totalorder %s21, 1
    %p186 = por %p184, %p185
    %p187 = scmp.ne.s32.totalorder %s178, %s179
    %p188 = scmp.eq.s32.totalorder %s21, 0
    %p189 = por %p187, %p188
    %p190 = scmp.ne.s32.totalorder %s178, %s179
    %p191 = scmp.eq.s32.totalorder %s22, 1
    %p192 = por %p190, %p191
    %p194 = scmp.ne.s32.totalorder %s179, %s193
    %p195 = scmp.eq.s32.totalorder %s22, 0
    %p196 = por %p194, %p195
    %s198 = sadd.s32 %s197, 1
    %p201 = scmp.eq.s32.totalorder %s16, 1
    %p202 = scmp.ne.s32.totalorder %s197, %s199
    %p203 = scmp.eq.s32.totalorder %s16, 0
    %p204 = por %p202, %p203
    %p205 = scmp.ne.s32.totalorder %s197, %s199
    %p206 = scmp.eq.s32.totalorder %s21, 1
    %p207 = por %p205, %p206
    %p208 = scmp.ne.s32.totalorder %s199, %s200
    %p209 = scmp.eq.s32.totalorder %s21, 0
    %p210 = por %p208, %p209
    %p211 = scmp.ne.s32.totalorder %s199, %s200
    %p212 = scmp.eq.s32.totalorder %s22, 1
    %p213 = por %p211, %p212
    %p215 = scmp.ne.s32.totalorder %s200, %s214
    %p216 = scmp.eq.s32.totalorder %s22, 0
    %p217 = por %p215, %p216
    %s219 = sadd.s32 %s218, 1
    %p222 = scmp.eq.s32.totalorder %s16, 1
    %p223 = scmp.ne.s32.totalorder %s218, %s220
    %p224 = scmp.eq.s32.totalorder %s16, 0
    %p225 = por %p223, %p224
    %p226 = scmp.ne.s32.totalorder %s218, %s220
    %p227 = scmp.eq.s32.totalorder %s21, 1
    %p228 = por %p226, %p227
    %p229 = scmp.ne.s32.totalorder %s220, %s221
    %p230 = scmp.eq.s32.totalorder %s21, 0
    %p231 = por %p229, %p230
    %p232 = scmp.ne.s32.totalorder %s220, %s221
    %p233 = scmp.eq.s32.totalorder %s22, 1
    %p234 = por %p232, %p233
    %p236 = scmp.ne.s32.totalorder %s221, %s235
    %p237 = scmp.eq.s32.totalorder %s22, 0
    %p238 = por %p236, %p237
    %s239 = ssub.s32 %s16, %s23
    %p240 = scmp.eq.s32.totalorder %s239, 0
    %s242 = sadd.s32 %s241, 1
    %s243 = scalar_select %p240, %s241, %s242
    %p246 = pneg %p240
    %p247 = scmp.eq.s32.totalorder %s16, 1
    %p248 = por %p246, %p247
    %p249 = scmp.ne.s32.totalorder %s241, %s244
    %p250 = scmp.eq.s32.totalorder %s16, 0
    %p251 = por %p249, %p250
    %p252 = scmp.ne.s32.totalorder %s241, %s244
    %p253 = scmp.eq.s32.totalorder %s21, 1
    %p254 = por %p252, %p253
    %p255 = scmp.ne.s32.totalorder %s244, %s245
    %p256 = scmp.eq.s32.totalorder %s21, 0
    %p257 = por %p255, %p256
    %p258 = scmp.ne.s32.totalorder %s244, %s245
    %p259 = scmp.eq.s32.totalorder %s22, 1
    %p260 = por %p258, %p259
    %p262 = scmp.ne.s32.totalorder %s245, %s261
    %p263 = scmp.eq.s32.totalorder %s22, 0
    %p264 = por %p262, %p263
    %p265 = scmp.le.s32.totalorder 1, %s16
    %p266 = scmp.lt.s32.totalorder %s16, 3
    %p267 = pnand %p265, %p266
    %p268 = pneg %p267
    // Predicated region
    $region9: #{pnet_forward.1} parent=5 // pred_check
      _
    $region10: #{pnet_forward.1} parent=5 // pred_check_branch
      %270 = sbr.rel (%p267) target = $region12
    $region11: #{pnet_forward.1} parent=5 // pred_region
      %s271 = ssub.s32 %s16, 1
      // Predicated region
      $region13: #{pnet_forward.1} parent=11 // pred_check
        %p272 = pneg %p63
      $region14: #{pnet_forward.1} parent=11 // pred_check_branch
        %274 = sbr.rel (%p272) target = $region16
      $region15: #{pnet_forward.1} parent=11 // pred_region
        _
      $region16: #{pnet_forward.1} parent=11 // pred_fallthru
        _
      // Predicated region
      $region17: #{pnet_forward.1} parent=11 // pred_check
        %p275 = pneg %p84
      $region18: #{pnet_forward.1} parent=11 // pred_check_branch
        %277 = sbr.rel (%p275) target = $region20
      $region19: #{pnet_forward.1} parent=11 // pred_region
        _
      $region20: #{pnet_forward.1} parent=11 // pred_fallthru
        _
      // Predicated region
      $region21: #{pnet_forward.1} parent=11 // pred_check
        %p278 = pneg %p105
      $region22: #{pnet_forward.1} parent=11 // pred_check_branch
        %280 = sbr.rel (%p278) target = $region24
      $region23: #{pnet_forward.1} parent=11 // pred_region
        _
      $region24: #{pnet_forward.1} parent=11 // pred_fallthru
        _
      // Predicated region
      $region25: #{pnet_forward.1} parent=11 // pred_check
        %p281 = pneg %p126
      $region26: #{pnet_forward.1} parent=11 // pred_check_branch
        %283 = sbr.rel (%p281) target = $region28
      $region27: #{pnet_forward.1} parent=11 // pred_region
        _
      $region28: #{pnet_forward.1} parent=11 // pred_fallthru
        _
      // Predicated region
      $region29: #{pnet_forward.1} parent=11 // pred_check
        %p284 = pneg %p147
      $region30: #{pnet_forward.1} parent=11 // pred_check_branch
        %286 = sbr.rel (%p284) target = $region32
      $region31: #{pnet_forward.1} parent=11 // pred_region
        _
      $region32: #{pnet_forward.1} parent=11 // pred_fallthru
        _
      // Predicated region
      $region33: #{pnet_forward.1} parent=11 // pred_check
        %p287 = pneg %p168
      $region34: #{pnet_forward.1} parent=11 // pred_check_branch
        %289 = sbr.rel (%p287) target = $region36
      $region35: #{pnet_forward.1} parent=11 // pred_region
        _
      $region36: #{pnet_forward.1} parent=11 // pred_fallthru
        _
      // Predicated region
      $region37: #{pnet_forward.1} parent=11 // pred_check
        %p290 = pneg %p189
      $region38: #{pnet_forward.1} parent=11 // pred_check_branch
        %292 = sbr.rel (%p290) target = $region40
      $region39: #{pnet_forward.1} parent=11 // pred_region
        _
      $region40: #{pnet_forward.1} parent=11 // pred_fallthru
        _
      // Predicated region
      $region41: #{pnet_forward.1} parent=11 // pred_check
        %p293 = pneg %p210
      $region42: #{pnet_forward.1} parent=11 // pred_check_branch
        %295 = sbr.rel (%p293) target = $region44
      $region43: #{pnet_forward.1} parent=11 // pred_region
        _
      $region44: #{pnet_forward.1} parent=11 // pred_fallthru
        _
      // Predicated region
      $region45: #{pnet_forward.1} parent=11 // pred_check
        %p296 = pneg %p231
      $region46: #{pnet_forward.1} parent=11 // pred_check_branch
        %298 = sbr.rel (%p296) target = $region48
      $region47: #{pnet_forward.1} parent=11 // pred_region
        _
      $region48: #{pnet_forward.1} parent=11 // pred_fallthru
        _
    $region12: #{pnet_forward.1} parent=5 // pred_fallthru
      _
    %p299 = scmp.lt.s32.totalorder %s16, 2
    // Predicated region
    $region49: #{pnet_forward.1} parent=5 // pred_check
      %p300 = pneg %p299
    $region50: #{pnet_forward.1} parent=5 // pred_check_branch
      %302 = sbr.rel (%p300) target = $region52
    $region51: #{pnet_forward.1} parent=5 // pred_region
      // Predicated region
      $region53: #{pnet_forward.1} parent=51 // pred_check
        %p303 = pneg %p36
      $region54: #{pnet_forward.1} parent=51 // pred_check_branch
        %305 = sbr.rel (%p303) target = $region56
      $region55: #{pnet_forward.1} parent=51 // pred_region
        %p306 = scmp.lt.s32.totalorder %s16, 1
        %s307 = scalar_select %p306, %s16, 1
        %s308 = smul.addr %s307, 33
        %s309 = smul.addr %s308, 8
        %s310 = scalar_lea.vmem %s0, %s309
      $region56: #{pnet_forward.1} parent=51 // pred_fallthru
        _
    $region52: #{pnet_forward.1} parent=5 // pred_fallthru
      _
    %p311 = scmp.le.s32.totalorder 1, %s16
    %p312 = scmp.lt.s32.totalorder %s16, 3
    %p313 = pnand %p311, %p312
    %p314 = pneg %p313
    // Predicated region
    $region57: #{pnet_forward.1} parent=5 // pred_check
      _
    $region58: #{pnet_forward.1} parent=5 // pred_check_branch
      %316 = sbr.rel (%p313) target = $region60
    $region59: #{pnet_forward.1} parent=5 // pred_region
      %s317 = ssub.s32 %s16, 1
      %p318 = scmp.lt.s32.totalorder %s21, 1
      %s319 = scalar_select %p318, %s21, 1
      %s320 = smul.addr %s319, 33
      %s321 = smul.addr %s320, 8
      %s322 = scalar_lea.vmem %s0, %s321
      %p323 = pneg %p42
      %p324 = pneg %p39
      %p325 = pneg %p63
      %p326 = pneg %p60
      %p327 = pneg %p84
      %p328 = pneg %p81
      %p329 = pneg %p105
      %p330 = pneg %p102
      %p331 = pneg %p126
      %p332 = pneg %p123
      %p333 = pneg %p147
      %p334 = pneg %p144
      %p335 = pneg %p168
      %p336 = pneg %p165
      %p337 = pneg %p189
      %p338 = pneg %p186
      %p339 = pneg %p210
      %p340 = pneg %p207
      %p341 = pneg %p231
      %p342 = pneg %p228
      %p343 = pneg %p257
      %p344 = pneg %p254
      %p345 = scmp.lt.s32.totalorder %s21, 1
      %s346 = scalar_select %p345, %s21, 1
      %s347 = smul.addr %s346, 3
      %s348 = smul.addr %s347, 8
      %s349 = scalar_lea.vmem %s10, %s348
      %p350 = scmp.lt.s32.totalorder %s21, 1
      %s351 = scalar_select %p350, %s21, 1
      %s352 = smul.addr %s351, 33
      %s353 = smul.addr %s352, 8
      %s354 = scalar_lea.vmem %s0, %s353
      %p355 = scmp.lt.s32.totalorder %s21, 1
      %s356 = scalar_select %p355, %s21, 1
      %s357 = smul.addr %s356, 3
      %s358 = smul.addr %s357, 8
      %s359 = scalar_lea.vmem %s10, %s358
      %v361 = vld [vmem:[%s9] sm:$0x1]
      %v362 = vld [vmem:[%s354] sm:$0xff]
      %v363 = vld [vmem:[%s354 + $0x8] sm:$0xff]
      %v364 = vld [vmem:[%s354 + $0x10] sm:$0xff]
      %v365 = vld [vmem:[%s354 + $0x18] sm:$0xff]
      %v366 = vld [vmem:[%s354 + $0x20] sm:$0xff]
      %v367 = vld [vmem:[%s354 + $0x28] sm:$0xff]
      %v368 = vld [vmem:[%s354 + $0x30] sm:$0xff]
      %v369 = vld [vmem:[%s354 + $0x38] sm:$0xff]
      %v370 = vld [vmem:[%s354 + $0x40] sm:$0xff]
      %v371 = vld [vmem:[%s354 + $0x48] sm:$0xff]
      %v372 = vld [vmem:[%s354 + $0x50] sm:$0xff]
      %v373 = vld [vmem:[%s354 + $0x58] sm:$0xff]
      %v374 = vld [vmem:[%s354 + $0x60] sm:$0xff]
      %v375 = vld [vmem:[%s354 + $0x68] sm:$0xff]
      %v376 = vld [vmem:[%s354 + $0x70] sm:$0xff]
      %v377 = vld [vmem:[%s354 + $0x78] sm:$0xff]
      %v378 = vld [vmem:[%s354 + $0x80] sm:$0xff]
      %v379 = vld [vmem:[%s354 + $0x88] sm:$0xff]
      %v380 = vld [vmem:[%s354 + $0x90] sm:$0xff]
      %v381 = vld [vmem:[%s354 + $0x98] sm:$0xff]
      %v382 = vld [vmem:[%s354 + $0xa0] sm:$0xff]
      %v383 = vld [vmem:[%s354 + $0xa8] sm:$0xff]
      %v384 = vld [vmem:[%s354 + $0xb0] sm:$0xff]
      %v385 = vld [vmem:[%s354 + $0xb8] sm:$0xff]
      %v386 = vld [vmem:[%s354 + $0xc0] sm:$0xff]
      %v387 = vld [vmem:[%s354 + $0xc8] sm:$0xff]
      %v388 = vld [vmem:[%s354 + $0xd0] sm:$0xff]
      %v389 = vld [vmem:[%s354 + $0xd8] sm:$0xff]
      %vm390 = vcmask 23552
      %391 = vst.msk [vmem:[#allocation2] sm:$0xff] %vm390, %v362
      %392 = vst.msk [vmem:[#allocation2 + $0x10] sm:$0xff] %vm390, %v363
      %393 = vst.msk [vmem:[#allocation2 + $0x20] sm:$0xff] %vm390, %v364
      %394 = vst.msk [vmem:[#allocation2 + $0x30] sm:$0xff] %vm390, %v365
      %395 = vst.msk [vmem:[#allocation2 + $0x40] sm:$0xff] %vm390, %v366
      %396 = vst.msk [vmem:[#allocation2 + $0x50] sm:$0xff] %vm390, %v367
      %397 = vst.msk [vmem:[#allocation2 + $0x60] sm:$0xff] %vm390, %v368
      %398 = vst.msk [vmem:[#allocation2 + $0x70] sm:$0xff] %vm390, %v369
      %399 = vst.msk [vmem:[#allocation2 + $0x80] sm:$0xff] %vm390, %v370
      %400 = vst.msk [vmem:[#allocation2 + $0x90] sm:$0xff] %vm390, %v371
      %401 = vst.msk [vmem:[#allocation2 + $0xa0] sm:$0xff] %vm390, %v372
      %402 = vst.msk [vmem:[#allocation2 + $0xb0] sm:$0xff] %vm390, %v373
      %403 = vst.msk [vmem:[#allocation2 + $0xc0] sm:$0xff] %vm390, %v374
      %404 = vst.msk [vmem:[#allocation2 + $0xd0] sm:$0xff] %vm390, %v375
      %405 = vst.msk [vmem:[#allocation2 + $0xe0] sm:$0xff] %vm390, %v376
      %406 = vst.msk [vmem:[#allocation2 + $0xf0] sm:$0xff] %vm390, %v377
      %407 = vst.msk [vmem:[#allocation2 + $0x100] sm:$0xff] %vm390, %v378
      %408 = vst.msk [vmem:[#allocation2 + $0x110] sm:$0xff] %vm390, %v379
      %409 = vst.msk [vmem:[#allocation2 + $0x120] sm:$0xff] %vm390, %v380
      %410 = vst.msk [vmem:[#allocation2 + $0x130] sm:$0xff] %vm390, %v381
      %411 = vst.msk [vmem:[#allocation2 + $0x140] sm:$0xff] %vm390, %v382
      %412 = vst.msk [vmem:[#allocation2 + $0x150] sm:$0xff] %vm390, %v383
      %413 = vst.msk [vmem:[#allocation2 + $0x160] sm:$0xff] %vm390, %v384
      %414 = vst.msk [vmem:[#allocation2 + $0x170] sm:$0xff] %vm390, %v385
      %415 = vst.msk [vmem:[#allocation2 + $0x180] sm:$0xff] %vm390, %v386
      %416 = vst.msk [vmem:[#allocation2 + $0x190] sm:$0xff] %vm390, %v387
      %417 = vst.msk [vmem:[#allocation2 + $0x1a0] sm:$0xff] %vm390, %v388
      %418 = vst.msk [vmem:[#allocation2 + $0x1b0] sm:$0xff] %vm390, %v389
      %v419 = vld [vmem:[%s354 + $0x1] sm:$0xff]
      %v420 = vld [vmem:[%s354 + $0x9] sm:$0xff]
      %v421 = vld [vmem:[%s354 + $0x11] sm:$0xff]
      %v422 = vld [vmem:[%s354 + $0x19] sm:$0xff]
      %v423 = vld [vmem:[%s354 + $0x21] sm:$0xff]
      %v424 = vld [vmem:[%s354 + $0x29] sm:$0xff]
      %v425 = vld [vmem:[%s354 + $0x31] sm:$0xff]
      %v426 = vld [vmem:[%s354 + $0x39] sm:$0xff]
      %v427 = vld [vmem:[%s354 + $0x41] sm:$0xff]
      %v428 = vld [vmem:[%s354 + $0x49] sm:$0xff]
      %v429 = vld [vmem:[%s354 + $0x51] sm:$0xff]
      %v430 = vld [vmem:[%s354 + $0x59] sm:$0xff]
      %v431 = vld [vmem:[%s354 + $0x61] sm:$0xff]
      %v432 = vld [vmem:[%s354 + $0x69] sm:$0xff]
      %v433 = vld [vmem:[%s354 + $0x71] sm:$0xff]
      %v434 = vld [vmem:[%s354 + $0x79] sm:$0xff]
      %v435 = vld [vmem:[%s354 + $0x81] sm:$0xff]
      %v436 = vld [vmem:[%s354 + $0x89] sm:$0xff]
      %v437 = vld [vmem:[%s354 + $0x91] sm:$0xff]
      %v438 = vld [vmem:[%s354 + $0x99] sm:$0xff]
      %v439 = vld [vmem:[%s354 + $0xa1] sm:$0xff]
      %v440 = vld [vmem:[%s354 + $0xa9] sm:$0xff]
      %v441 = vld [vmem:[%s354 + $0xb1] sm:$0xff]
      %v442 = vld [vmem:[%s354 + $0xb9] sm:$0xff]
      %v443 = vld [vmem:[%s354 + $0xc1] sm:$0xff]
      %v444 = vld [vmem:[%s354 + $0xc9] sm:$0xff]
      %v445 = vld [vmem:[%s354 + $0xd1] sm:$0xff]
      %v446 = vld [vmem:[%s354 + $0xd9] sm:$0xff]
      %475 = vrot.lane.b32.xlu0 %v419, 3
      %v476 = vpop.permute.xlu0 %475
      %477 = vrot.lane.b32.xlu0 %v420, 3
      %v478 = vpop.permute.xlu0 %477
      %479 = vrot.lane.b32.xlu0 %v421, 3
      %v480 = vpop.permute.xlu0 %479
      %481 = vrot.lane.b32.xlu0 %v422, 3
      %v482 = vpop.permute.xlu0 %481
      %483 = vrot.lane.b32.xlu0 %v423, 3
      %v484 = vpop.permute.xlu0 %483
      %485 = vrot.lane.b32.xlu0 %v424, 3
      %v486 = vpop.permute.xlu0 %485
      %487 = vrot.lane.b32.xlu0 %v425, 3
      %v488 = vpop.permute.xlu0 %487
      %489 = vrot.lane.b32.xlu0 %v426, 3
      %v490 = vpop.permute.xlu0 %489
      %491 = vrot.lane.b32.xlu0 %v427, 3
      %v492 = vpop.permute.xlu0 %491
      %493 = vrot.lane.b32.xlu0 %v428, 3
      %v494 = vpop.permute.xlu0 %493
      %495 = vrot.lane.b32.xlu0 %v429, 3
      %v496 = vpop.permute.xlu0 %495
      %497 = vrot.lane.b32.xlu0 %v430, 3
      %v498 = vpop.permute.xlu0 %497
      %499 = vrot.lane.b32.xlu0 %v431, 3
      %v500 = vpop.permute.xlu0 %499
      %501 = vrot.lane.b32.xlu0 %v432, 3
      %v502 = vpop.permute.xlu0 %501
      %503 = vrot.lane.b32.xlu0 %v433, 3
      %v504 = vpop.permute.xlu0 %503
      %505 = vrot.lane.b32.xlu0 %v434, 3
      %v506 = vpop.permute.xlu0 %505
      %507 = vrot.lane.b32.xlu0 %v435, 3
      %v508 = vpop.permute.xlu0 %507
      %509 = vrot.lane.b32.xlu0 %v436, 3
      %v510 = vpop.permute.xlu0 %509
      %511 = vrot.lane.b32.xlu0 %v437, 3
      %v512 = vpop.permute.xlu0 %511
      %513 = vrot.lane.b32.xlu0 %v438, 3
      %v514 = vpop.permute.xlu0 %513
      %515 = vrot.lane.b32.xlu0 %v439, 3
      %v516 = vpop.permute.xlu0 %515
      %517 = vrot.lane.b32.xlu0 %v440, 3
      %v518 = vpop.permute.xlu0 %517
      %519 = vrot.lane.b32.xlu0 %v441, 3
      %v520 = vpop.permute.xlu0 %519
      %521 = vrot.lane.b32.xlu0 %v442, 3
      %v522 = vpop.permute.xlu0 %521
      %523 = vrot.lane.b32.xlu0 %v443, 3
      %v524 = vpop.permute.xlu0 %523
      %525 = vrot.lane.b32.xlu0 %v444, 3
      %v526 = vpop.permute.xlu0 %525
      %527 = vrot.lane.b32.xlu0 %v445, 3
      %v528 = vpop.permute.xlu0 %527
      %529 = vrot.lane.b32.xlu0 %v446, 3
      %v530 = vpop.permute.xlu0 %529
      %vm559 = vcmask 48152
      %560 = vst.msk [vmem:[#allocation2] sm:$0xff] %vm559, %v476
      %561 = vst.msk [vmem:[#allocation2 + $0x10] sm:$0xff] %vm559, %v478
      %562 = vst.msk [vmem:[#allocation2 + $0x20] sm:$0xff] %vm559, %v480
      %563 = vst.msk [vmem:[#allocation2 + $0x30] sm:$0xff] %vm559, %v482
      %564 = vst.msk [vmem:[#allocation2 + $0x40] sm:$0xff] %vm559, %v484
      %565 = vst.msk [vmem:[#allocation2 + $0x50] sm:$0xff] %vm559, %v486
      %566 = vst.msk [vmem:[#allocation2 + $0x60] sm:$0xff] %vm559, %v488
      %567 = vst.msk [vmem:[#allocation2 + $0x70] sm:$0xff] %vm559, %v490
      %568 = vst.msk [vmem:[#allocation2 + $0x80] sm:$0xff] %vm559, %v492
      %569 = vst.msk [vmem:[#allocation2 + $0x90] sm:$0xff] %vm559, %v494
      %570 = vst.msk [vmem:[#allocation2 + $0xa0] sm:$0xff] %vm559, %v496
      %571 = vst.msk [vmem:[#allocation2 + $0xb0] sm:$0xff] %vm559, %v498
      %572 = vst.msk [vmem:[#allocation2 + $0xc0] sm:$0xff] %vm559, %v500
      %573 = vst.msk [vmem:[#allocation2 + $0xd0] sm:$0xff] %vm559, %v502
      %574 = vst.msk [vmem:[#allocation2 + $0xe0] sm:$0xff] %vm559, %v504
      %575 = vst.msk [vmem:[#allocation2 + $0xf0] sm:$0xff] %vm559, %v506
      %576 = vst.msk [vmem:[#allocation2 + $0x100] sm:$0xff] %vm559, %v508
      %577 = vst.msk [vmem:[#allocation2 + $0x110] sm:$0xff] %vm559, %v510
      %578 = vst.msk [vmem:[#allocation2 + $0x120] sm:$0xff] %vm559, %v512
      %579 = vst.msk [vmem:[#allocation2 + $0x130] sm:$0xff] %vm559, %v514
      %580 = vst.msk [vmem:[#allocation2 + $0x140] sm:$0xff] %vm559, %v516
      %581 = vst.msk [vmem:[#allocation2 + $0x150] sm:$0xff] %vm559, %v518
      %582 = vst.msk [vmem:[#allocation2 + $0x160] sm:$0xff] %vm559, %v520
      %583 = vst.msk [vmem:[#allocation2 + $0x170] sm:$0xff] %vm559, %v522
      %584 = vst.msk [vmem:[#allocation2 + $0x180] sm:$0xff] %vm559, %v524
      %585 = vst.msk [vmem:[#allocation2 + $0x190] sm:$0xff] %vm559, %v526
      %586 = vst.msk [vmem:[#allocation2 + $0x1a0] sm:$0xff] %vm559, %v528
      %587 = vst.msk [vmem:[#allocation2 + $0x1b0] sm:$0xff] %vm559, %v530
      %v588 = vld [vmem:[%s354 + $0x2] sm:$0xff]
      %v589 = vld [vmem:[%s354 + $0xa] sm:$0xff]
      %v590 = vld [vmem:[%s354 + $0x12] sm:$0xff]
      %v591 = vld [vmem:[%s354 + $0x1a] sm:$0xff]
      %v592 = vld [vmem:[%s354 + $0x22] sm:$0xff]
      %v593 = vld [vmem:[%s354 + $0x2a] sm:$0xff]
      %v594 = vld [vmem:[%s354 + $0x32] sm:$0xff]
      %v595 = vld [vmem:[%s354 + $0x3a] sm:$0xff]
      %v596 = vld [vmem:[%s354 + $0x42] sm:$0xff]
      %v597 = vld [vmem:[%s354 + $0x4a] sm:$0xff]
      %v598 = vld [vmem:[%s354 + $0x52] sm:$0xff]
      %v599 = vld [vmem:[%s354 + $0x5a] sm:$0xff]
      %v600 = vld [vmem:[%s354 + $0x62] sm:$0xff]
      %v601 = vld [vmem:[%s354 + $0x6a] sm:$0xff]
      %v602 = vld [vmem:[%s354 + $0x72] sm:$0xff]
      %v603 = vld [vmem:[%s354 + $0x7a] sm:$0xff]
      %v604 = vld [vmem:[%s354 + $0x82] sm:$0xff]
      %v605 = vld [vmem:[%s354 + $0x8a] sm:$0xff]
      %v606 = vld [vmem:[%s354 + $0x92] sm:$0xff]
      %v607 = vld [vmem:[%s354 + $0x9a] sm:$0xff]
      %v608 = vld [vmem:[%s354 + $0xa2] sm:$0xff]
      %v609 = vld [vmem:[%s354 + $0xaa] sm:$0xff]
      %v610 = vld [vmem:[%s354 + $0xb2] sm:$0xff]
      %v611 = vld [vmem:[%s354 + $0xba] sm:$0xff]
      %v612 = vld [vmem:[%s354 + $0xc2] sm:$0xff]
      %v613 = vld [vmem:[%s354 + $0xca] sm:$0xff]
      %v614 = vld [vmem:[%s354 + $0xd2] sm:$0xff]
      %v615 = vld [vmem:[%s354 + $0xda] sm:$0xff]
      %644 = vrot.lane.b32.xlu0 %v588, 6
      %v645 = vpop.permute.xlu0 %644
      %646 = vrot.lane.b32.xlu0 %v589, 6
      %v647 = vpop.permute.xlu0 %646
      %648 = vrot.lane.b32.xlu0 %v590, 6
      %v649 = vpop.permute.xlu0 %648
      %650 = vrot.lane.b32.xlu0 %v591, 6
      %v651 = vpop.permute.xlu0 %650
      %652 = vrot.lane.b32.xlu0 %v592, 6
      %v653 = vpop.permute.xlu0 %652
      %654 = vrot.lane.b32.xlu0 %v593, 6
      %v655 = vpop.permute.xlu0 %654
      %656 = vrot.lane.b32.xlu0 %v594, 6
      %v657 = vpop.permute.xlu0 %656
      %658 = vrot.lane.b32.xlu0 %v595, 6
      %v659 = vpop.permute.xlu0 %658
      %660 = vrot.lane.b32.xlu0 %v596, 6
      %v661 = vpop.permute.xlu0 %660
      %662 = vrot.lane.b32.xlu0 %v597, 6
      %v663 = vpop.permute.xlu0 %662
      %664 = vrot.lane.b32.xlu0 %v598, 6
      %v665 = vpop.permute.xlu0 %664
      %666 = vrot.lane.b32.xlu0 %v599, 6
      %v667 = vpop.permute.xlu0 %666
      %668 = vrot.lane.b32.xlu0 %v600, 6
      %v669 = vpop.permute.xlu0 %668
      %670 = vrot.lane.b32.xlu0 %v601, 6
      %v671 = vpop.permute.xlu0 %670
      %672 = vrot.lane.b32.xlu0 %v602, 6
      %v673 = vpop.permute.xlu0 %672
      %674 = vrot.lane.b32.xlu0 %v603, 6
      %v675 = vpop.permute.xlu0 %674
      %676 = vrot.lane.b32.xlu0 %v604, 6
      %v677 = vpop.permute.xlu0 %676
      %678 = vrot.lane.b32.xlu0 %v605, 6
      %v679 = vpop.permute.xlu0 %678
      %680 = vrot.lane.b32.xlu0 %v606, 6
      %v681 = vpop.permute.xlu0 %680
      %682 = vrot.lane.b32.xlu0 %v607, 6
      %v683 = vpop.permute.xlu0 %682
      %684 = vrot.lane.b32.xlu0 %v608, 6
      %v685 = vpop.permute.xlu0 %684
      %686 = vrot.lane.b32.xlu0 %v609, 6
      %v687 = vpop.permute.xlu0 %686
      %688 = vrot.lane.b32.xlu0 %v610, 6
      %v689 = vpop.permute.xlu0 %688
      %690 = vrot.lane.b32.xlu0 %v611, 6
      %v691 = vpop.permute.xlu0 %690
      %692 = vrot.lane.b32.xlu0 %v612, 6
      %v693 = vpop.permute.xlu0 %692
      %694 = vrot.lane.b32.xlu0 %v613, 6
      %v695 = vpop.permute.xlu0 %694
      %696 = vrot.lane.b32.xlu0 %v614, 6
      %v697 = vpop.permute.xlu0 %696
      %698 = vrot.lane.b32.xlu0 %v615, 6
      %v699 = vpop.permute.xlu0 %698
      %vm728 = vcmask 72752
      %729 = vst.msk [vmem:[#allocation2] sm:$0xff] %vm728, %v645
      %730 = vst.msk [vmem:[#allocation2 + $0x10] sm:$0xff] %vm728, %v647
      %731 = vst.msk [vmem:[#allocation2 + $0x20] sm:$0xff] %vm728, %v649
      %732 = vst.msk [vmem:[#allocation2 + $0x30] sm:$0xff] %vm728, %v651
      %733 = vst.msk [vmem:[#allocation2 + $0x40] sm:$0xff] %vm728, %v653
      %734 = vst.msk [vmem:[#allocation2 + $0x50] sm:$0xff] %vm728, %v655
      %735 = vst.msk [vmem:[#allocation2 + $0x60] sm:$0xff] %vm728, %v657
      %736 = vst.msk [vmem:[#allocation2 + $0x70] sm:$0xff] %vm728, %v659
      %737 = vst.msk [vmem:[#allocation2 + $0x80] sm:$0xff] %vm728, %v661
      %738 = vst.msk [vmem:[#allocation2 + $0x90] sm:$0xff] %vm728, %v663
      %739 = vst.msk [vmem:[#allocation2 + $0xa0] sm:$0xff] %vm728, %v665
      %740 = vst.msk [vmem:[#allocation2 + $0xb0] sm:$0xff] %vm728, %v667
      %741 = vst.msk [vmem:[#allocation2 + $0xc0] sm:$0xff] %vm728, %v669
      %742 = vst.msk [vmem:[#allocation2 + $0xd0] sm:$0xff] %vm728, %v671
      %743 = vst.msk [vmem:[#allocation2 + $0xe0] sm:$0xff] %vm728, %v673
      %744 = vst.msk [vmem:[#allocation2 + $0xf0] sm:$0xff] %vm728, %v675
      %745 = vst.msk [vmem:[#allocation2 + $0x100] sm:$0xff] %vm728, %v677
      %746 = vst.msk [vmem:[#allocation2 + $0x110] sm:$0xff] %vm728, %v679
      %747 = vst.msk [vmem:[#allocation2 + $0x120] sm:$0xff] %vm728, %v681
      %748 = vst.msk [vmem:[#allocation2 + $0x130] sm:$0xff] %vm728, %v683
      %749 = vst.msk [vmem:[#allocation2 + $0x140] sm:$0xff] %vm728, %v685
      %750 = vst.msk [vmem:[#allocation2 + $0x150] sm:$0xff] %vm728, %v687
      %751 = vst.msk [vmem:[#allocation2 + $0x160] sm:$0xff] %vm728, %v689
      %752 = vst.msk [vmem:[#allocation2 + $0x170] sm:$0xff] %vm728, %v691
      %753 = vst.msk [vmem:[#allocation2 + $0x180] sm:$0xff] %vm728, %v693
      %754 = vst.msk [vmem:[#allocation2 + $0x190] sm:$0xff] %vm728, %v695
      %755 = vst.msk [vmem:[#allocation2 + $0x1a0] sm:$0xff] %vm728, %v697
      %756 = vst.msk [vmem:[#allocation2 + $0x1b0] sm:$0xff] %vm728, %v699
      %v757 = vld [vmem:[%s354 + $0x10] sm:$0xff]
      %v758 = vld [vmem:[%s354 + $0x18] sm:$0xff]
      %v759 = vld [vmem:[%s354 + $0x20] sm:$0xff]
      %v760 = vld [vmem:[%s354 + $0x28] sm:$0xff]
      %v761 = vld [vmem:[%s354 + $0x30] sm:$0xff]
      %v762 = vld [vmem:[%s354 + $0x38] sm:$0xff]
      %v763 = vld [vmem:[%s354 + $0x40] sm:$0xff]
      %v764 = vld [vmem:[%s354 + $0x48] sm:$0xff]
      %v765 = vld [vmem:[%s354 + $0x50] sm:$0xff]
      %v766 = vld [vmem:[%s354 + $0x58] sm:$0xff]
      %v767 = vld [vmem:[%s354 + $0x60] sm:$0xff]
      %v768 = vld [vmem:[%s354 + $0x68] sm:$0xff]
      %v769 = vld [vmem:[%s354 + $0x70] sm:$0xff]
      %v770 = vld [vmem:[%s354 + $0x78] sm:$0xff]
      %v771 = vld [vmem:[%s354 + $0x80] sm:$0xff]
      %v772 = vld [vmem:[%s354 + $0x88] sm:$0xff]
      %v773 = vld [vmem:[%s354 + $0x90] sm:$0xff]
      %v774 = vld [vmem:[%s354 + $0x98] sm:$0xff]
      %v775 = vld [vmem:[%s354 + $0xa0] sm:$0xff]
      %v776 = vld [vmem:[%s354 + $0xa8] sm:$0xff]
      %v777 = vld [vmem:[%s354 + $0xb0] sm:$0xff]
      %v778 = vld [vmem:[%s354 + $0xb8] sm:$0xff]
      %v779 = vld [vmem:[%s354 + $0xc0] sm:$0xff]
      %v780 = vld [vmem:[%s354 + $0xc8] sm:$0xff]
      %v781 = vld [vmem:[%s354 + $0xd0] sm:$0xff]
      %v782 = vld [vmem:[%s354 + $0xd8] sm:$0xff]
      %v783 = vld [vmem:[%s354 + $0xe0] sm:$0xff]
      %v784 = vld [vmem:[%s354 + $0xe8] sm:$0xff]
      %813 = vrot.lane.b32.xlu0 %v757, 9
      %v814 = vpop.permute.xlu0 %813
      %815 = vrot.lane.b32.xlu0 %v758, 9
      %v816 = vpop.permute.xlu0 %815
      %817 = vrot.lane.b32.xlu0 %v759, 9
      %v818 = vpop.permute.xlu0 %817
      %819 = vrot.lane.b32.xlu0 %v760, 9
      %v820 = vpop.permute.xlu0 %819
      %821 = vrot.lane.b32.xlu0 %v761, 9
      %v822 = vpop.permute.xlu0 %821
      %823 = vrot.lane.b32.xlu0 %v762, 9
      %v824 = vpop.permute.xlu0 %823
      %825 = vrot.lane.b32.xlu0 %v763, 9
      %v826 = vpop.permute.xlu0 %825
      %827 = vrot.lane.b32.xlu0 %v764, 9
      %v828 = vpop.permute.xlu0 %827
      %829 = vrot.lane.b32.xlu0 %v765, 9
      %v830 = vpop.permute.xlu0 %829
      %831 = vrot.lane.b32.xlu0 %v766, 9
      %v832 = vpop.permute.xlu0 %831
      %833 = vrot.lane.b32.xlu0 %v767, 9
      %v834 = vpop.permute.xlu0 %833
      %835 = vrot.lane.b32.xlu0 %v768, 9
      %v836 = vpop.permute.xlu0 %835
      %837 = vrot.lane.b32.xlu0 %v769, 9
      %v838 = vpop.permute.xlu0 %837
      %839 = vrot.lane.b32.xlu0 %v770, 9
      %v840 = vpop.permute.xlu0 %839
      %841 = vrot.lane.b32.xlu0 %v771, 9
      %v842 = vpop.permute.xlu0 %841
      %843 = vrot.lane.b32.xlu0 %v772, 9
      %v844 = vpop.permute.xlu0 %843
      %845 = vrot.lane.b32.xlu0 %v773, 9
      %v846 = vpop.permute.xlu0 %845
      %847 = vrot.lane.b32.xlu0 %v774, 9
      %v848 = vpop.permute.xlu0 %847
      %849 = vrot.lane.b32.xlu0 %v775, 9
      %v850 = vpop.permute.xlu0 %849
      %851 = vrot.lane.b32.xlu0 %v776, 9
      %v852 = vpop.permute.xlu0 %851
      %853 = vrot.lane.b32.xlu0 %v777, 9
      %v854 = vpop.permute.xlu0 %853
      %855 = vrot.lane.b32.xlu0 %v778, 9
      %v856 = vpop.permute.xlu0 %855
      %857 = vrot.lane.b32.xlu0 %v779, 9
      %v858 = vpop.permute.xlu0 %857
      %859 = vrot.lane.b32.xlu0 %v780, 9
      %v860 = vpop.permute.xlu0 %859
      %861 = vrot.lane.b32.xlu0 %v781, 9
      %v862 = vpop.permute.xlu0 %861
      %863 = vrot.lane.b32.xlu0 %v782, 9
      %v864 = vpop.permute.xlu0 %863
      %865 = vrot.lane.b32.xlu0 %v783, 9
      %v866 = vpop.permute.xlu0 %865
      %867 = vrot.lane.b32.xlu0 %v784, 9
      %v868 = vpop.permute.xlu0 %867
      %vm897 = vcmask 97352
      %898 = vst.msk [vmem:[#allocation2] sm:$0xff] %vm897, %v814
      %899 = vst.msk [vmem:[#allocation2 + $0x10] sm:$0xff] %vm897, %v816
      %900 = vst.msk [vmem:[#allocation2 + $0x20] sm:$0xff] %vm897, %v818
      %901 = vst.msk [vmem:[#allocation2 + $0x30] sm:$0xff] %vm897, %v820
      %902 = vst.msk [vmem:[#allocation2 + $0x40] sm:$0xff] %vm897, %v822
      %903 = vst.msk [vmem:[#allocation2 + $0x50] sm:$0xff] %vm897, %v824
      %904 = vst.msk [vmem:[#allocation2 + $0x60] sm:$0xff] %vm897, %v826
      %905 = vst.msk [vmem:[#allocation2 + $0x70] sm:$0xff] %vm897, %v828
      %906 = vst.msk [vmem:[#allocation2 + $0x80] sm:$0xff] %vm897, %v830
      %907 = vst.msk [vmem:[#allocation2 + $0x90] sm:$0xff] %vm897, %v832
      %908 = vst.msk [vmem:[#allocation2 + $0xa0] sm:$0xff] %vm897, %v834
      %909 = vst.msk [vmem:[#allocation2 + $0xb0] sm:$0xff] %vm897, %v836
      %910 = vst.msk [vmem:[#allocation2 + $0xc0] sm:$0xff] %vm897, %v838
      %911 = vst.msk [vmem:[#allocation2 + $0xd0] sm:$0xff] %vm897, %v840
      %912 = vst.msk [vmem:[#allocation2 + $0xe0] sm:$0xff] %vm897, %v842
      %913 = vst.msk [vmem:[#allocation2 + $0xf0] sm:$0xff] %vm897, %v844
      %914 = vst.msk [vmem:[#allocation2 + $0x100] sm:$0xff] %vm897, %v846
      %915 = vst.msk [vmem:[#allocation2 + $0x110] sm:$0xff] %vm897, %v848
      %916 = vst.msk [vmem:[#allocation2 + $0x120] sm:$0xff] %vm897, %v850
      %917 = vst.msk [vmem:[#allocation2 + $0x130] sm:$0xff] %vm897, %v852
      %918 = vst.msk [vmem:[#allocation2 + $0x140] sm:$0xff] %vm897, %v854
      %919 = vst.msk [vmem:[#allocation2 + $0x150] sm:$0xff] %vm897, %v856
      %920 = vst.msk [vmem:[#allocation2 + $0x160] sm:$0xff] %vm897, %v858
      %921 = vst.msk [vmem:[#allocation2 + $0x170] sm:$0xff] %vm897, %v860
      %922 = vst.msk [vmem:[#allocation2 + $0x180] sm:$0xff] %vm897, %v862
      %923 = vst.msk [vmem:[#allocation2 + $0x190] sm:$0xff] %vm897, %v864
      %924 = vst.msk [vmem:[#allocation2 + $0x1a0] sm:$0xff] %vm897, %v866
      %925 = vst.msk [vmem:[#allocation2 + $0x1b0] sm:$0xff] %vm897, %v868
      %v926 = vld [vmem:[%s354 + $0x11] sm:$0xff]
      %v927 = vld [vmem:[%s354 + $0x19] sm:$0xff]
      %v928 = vld [vmem:[%s354 + $0x21] sm:$0xff]
      %v929 = vld [vmem:[%s354 + $0x29] sm:$0xff]
      %v930 = vld [vmem:[%s354 + $0x31] sm:$0xff]
      %v931 = vld [vmem:[%s354 + $0x39] sm:$0xff]
      %v932 = vld [vmem:[%s354 + $0x41] sm:$0xff]
      %v933 = vld [vmem:[%s354 + $0x49] sm:$0xff]
      %v934 = vld [vmem:[%s354 + $0x51] sm:$0xff]
      %v935 = vld [vmem:[%s354 + $0x59] sm:$0xff]
      %v936 = vld [vmem:[%s354 + $0x61] sm:$0xff]
      %v937 = vld [vmem:[%s354 + $0x69] sm:$0xff]
      %v938 = vld [vmem:[%s354 + $0x71] sm:$0xff]
      %v939 = vld [vmem:[%s354 + $0x79] sm:$0xff]
      %v940 = vld [vmem:[%s354 + $0x81] sm:$0xff]
      %v941 = vld [vmem:[%s354 + $0x89] sm:$0xff]
      %v942 = vld [vmem:[%s354 + $0x91] sm:$0xff]
      %v943 = vld [vmem:[%s354 + $0x99] sm:$0xff]
      %v944 = vld [vmem:[%s354 + $0xa1] sm:$0xff]
      %v945 = vld [vmem:[%s354 + $0xa9] sm:$0xff]
      %v946 = vld [vmem:[%s354 + $0xb1] sm:$0xff]
      %v947 = vld [vmem:[%s354 + $0xb9] sm:$0xff]
      %v948 = vld [vmem:[%s354 + $0xc1] sm:$0xff]
      %v949 = vld [vmem:[%s354 + $0xc9] sm:$0xff]
      %v950 = vld [vmem:[%s354 + $0xd1] sm:$0xff]
      %v951 = vld [vmem:[%s354 + $0xd9] sm:$0xff]
      %v952 = vld [vmem:[%s354 + $0xe1] sm:$0xff]
      %v953 = vld [vmem:[%s354 + $0xe9] sm:$0xff]
      %982 = vrot.lane.b32.xlu0 %v926, 12
      %v983 = vpop.permute.xlu0 %982
      %984 = vrot.lane.b32.xlu0 %v927, 12
      %v985 = vpop.permute.xlu0 %984
      %986 = vrot.lane.b32.xlu0 %v928, 12
      %v987 = vpop.permute.xlu0 %986
      %988 = vrot.lane.b32.xlu0 %v929, 12
      %v989 = vpop.permute.xlu0 %988
      %990 = vrot.lane.b32.xlu0 %v930, 12
      %v991 = vpop.permute.xlu0 %990
      %992 = vrot.lane.b32.xlu0 %v931, 12
      %v993 = vpop.permute.xlu0 %992
      %994 = vrot.lane.b32.xlu0 %v932, 12
      %v995 = vpop.permute.xlu0 %994
      %996 = vrot.lane.b32.xlu0 %v933, 12
      %v997 = vpop.permute.xlu0 %996
      %998 = vrot.lane.b32.xlu0 %v934, 12
      %v999 = vpop.permute.xlu0 %998
      %1000 = vrot.lane.b32.xlu0 %v935, 12
      %v1001 = vpop.permute.xlu0 %1000
      %1002 = vrot.lane.b32.xlu0 %v936, 12
      %v1003 = vpop.permute.xlu0 %1002
      %1004 = vrot.lane.b32.xlu0 %v937, 12
      %v1005 = vpop.permute.xlu0 %1004
      %1006 = vrot.lane.b32.xlu0 %v938, 12
      %v1007 = vpop.permute.xlu0 %1006
      %1008 = vrot.lane.b32.xlu0 %v939, 12
      %v1009 = vpop.permute.xlu0 %1008
      %1010 = vrot.lane.b32.xlu0 %v940, 12
      %v1011 = vpop.permute.xlu0 %1010
      %1012 = vrot.lane.b32.xlu0 %v941, 12
      %v1013 = vpop.permute.xlu0 %1012
      %1014 = vrot.lane.b32.xlu0 %v942, 12
      %v1015 = vpop.permute.xlu0 %1014
      %1016 = vrot.lane.b32.xlu0 %v943, 12
      %v1017 = vpop.permute.xlu0 %1016
      %1018 = vrot.lane.b32.xlu0 %v944, 12
      %v1019 = vpop.permute.xlu0 %1018
      %1020 = vrot.lane.b32.xlu0 %v945, 12
      %v1021 = vpop.permute.xlu0 %1020
      %1022 = vrot.lane.b32.xlu0 %v946, 12
      %v1023 = vpop.permute.xlu0 %1022
      %1024 = vrot.lane.b32.xlu0 %v947, 12
      %v1025 = vpop.permute.xlu0 %1024
      %1026 = vrot.lane.b32.xlu0 %v948, 12
      %v1027 = vpop.permute.xlu0 %1026
      %1028 = vrot.lane.b32.xlu0 %v949, 12
      %v1029 = vpop.permute.xlu0 %1028
      %1030 = vrot.lane.b32.xlu0 %v950, 12
      %v1031 = vpop.permute.xlu0 %1030
      %1032 = vrot.lane.b32.xlu0 %v951, 12
      %v1033 = vpop.permute.xlu0 %1032
      %1034 = vrot.lane.b32.xlu0 %v952, 12
      %v1035 = vpop.permute.xlu0 %1034
      %1036 = vrot.lane.b32.xlu0 %v953, 12
      %v1037 = vpop.permute.xlu0 %1036
      %vm1066 = vcmask 121952
      %1067 = vst.msk [vmem:[#allocation2] sm:$0xff] %vm1066, %v983
      %1068 = vst.msk [vmem:[#allocation2 + $0x10] sm:$0xff] %vm1066, %v985
      %1069 = vst.msk [vmem:[#allocation2 + $0x20] sm:$0xff] %vm1066, %v987
      %1070 = vst.msk [vmem:[#allocation2 + $0x30] sm:$0xff] %vm1066, %v989
      %1071 = vst.msk [vmem:[#allocation2 + $0x40] sm:$0xff] %vm1066, %v991
      %1072 = vst.msk [vmem:[#allocation2 + $0x50] sm:$0xff] %vm1066, %v993
      %1073 = vst.msk [vmem:[#allocation2 + $0x60] sm:$0xff] %vm1066, %v995
      %1074 = vst.msk [vmem:[#allocation2 + $0x70] sm:$0xff] %vm1066, %v997
      %1075 = vst.msk [vmem:[#allocation2 + $0x80] sm:$0xff] %vm1066, %v999
      %1076 = vst.msk [vmem:[#allocation2 + $0x90] sm:$0xff] %vm1066, %v1001
      %1077 = vst.msk [vmem:[#allocation2 + $0xa0] sm:$0xff] %vm1066, %v1003
      %1078 = vst.msk [vmem:[#allocation2 + $0xb0] sm:$0xff] %vm1066, %v1005
      %1079 = vst.msk [vmem:[#allocation2 + $0xc0] sm:$0xff] %vm1066, %v1007
      %1080 = vst.msk [vmem:[#allocation2 + $0xd0] sm:$0xff] %vm1066, %v1009
      %1081 = vst.msk [vmem:[#allocation2 + $0xe0] sm:$0xff] %vm1066, %v1011
      %1082 = vst.msk [vmem:[#allocation2 + $0xf0] sm:$0xff] %vm1066, %v1013
      %1083 = vst.msk [vmem:[#allocation2 + $0x100] sm:$0xff] %vm1066, %v1015
      %1084 = vst.msk [vmem:[#allocation2 + $0x110] sm:$0xff] %vm1066, %v1017
      %1085 = vst.msk [vmem:[#allocation2 + $0x120] sm:$0xff] %vm1066, %v1019
      %1086 = vst.msk [vmem:[#allocation2 + $0x130] sm:$0xff] %vm1066, %v1021
      %1087 = vst.msk [vmem:[#allocation2 + $0x140] sm:$0xff] %vm1066, %v1023
      %1088 = vst.msk [vmem:[#allocation2 + $0x150] sm:$0xff] %vm1066, %v1025
      %1089 = vst.msk [vmem:[#allocation2 + $0x160] sm:$0xff] %vm1066, %v1027
      %1090 = vst.msk [vmem:[#allocation2 + $0x170] sm:$0xff] %vm1066, %v1029
      %1091 = vst.msk [vmem:[#allocation2 + $0x180] sm:$0xff] %vm1066, %v1031
      %1092 = vst.msk [vmem:[#allocation2 + $0x190] sm:$0xff] %vm1066, %v1033
      %1093 = vst.msk [vmem:[#allocation2 + $0x1a0] sm:$0xff] %vm1066, %v1035
      %1094 = vst.msk [vmem:[#allocation2 + $0x1b0] sm:$0xff] %vm1066, %v1037
      %v1095 = vld [vmem:[%s354 + $0x12] sm:$0xff]
      %v1096 = vld [vmem:[%s354 + $0x1a] sm:$0xff]
      %v1097 = vld [vmem:[%s354 + $0x22] sm:$0xff]
      %v1098 = vld [vmem:[%s354 + $0x2a] sm:$0xff]
      %v1099 = vld [vmem:[%s354 + $0x32] sm:$0xff]
      %v1100 = vld [vmem:[%s354 + $0x3a] sm:$0xff]
      %v1101 = vld [vmem:[%s354 + $0x42] sm:$0xff]
      %v1102 = vld [vmem:[%s354 + $0x4a] sm:$0xff]
      %v1103 = vld [vmem:[%s354 + $0x52] sm:$0xff]
      %v1104 = vld [vmem:[%s354 + $0x5a] sm:$0xff]
      %v1105 = vld [vmem:[%s354 + $0x62] sm:$0xff]
      %v1106 = vld [vmem:[%s354 + $0x6a] sm:$0xff]
      %v1107 = vld [vmem:[%s354 + $0x72] sm:$0xff]
      %v1108 = vld [vmem:[%s354 + $0x7a] sm:$0xff]
      %v1109 = vld [vmem:[%s354 + $0x82] sm:$0xff]
      %v1110 = vld [vmem:[%s354 + $0x8a] sm:$0xff]
      %v1111 = vld [vmem:[%s354 + $0x92] sm:$0xff]
      %v1112 = vld [vmem:[%s354 + $0x9a] sm:$0xff]
      %v1113 = vld [vmem:[%s354 + $0xa2] sm:$0xff]
      %v1114 = vld [vmem:[%s354 + $0xaa] sm:$0xff]
      %v1115 = vld [vmem:[%s354 + $0xb2] sm:$0xff]
      %v1116 = vld [vmem:[%s354 + $0xba] sm:$0xff]
      %v1117 = vld [vmem:[%s354 + $0xc2] sm:$0xff]
      %v1118 = vld [vmem:[%s354 + $0xca] sm:$0xff]
      %v1119 = vld [vmem:[%s354 + $0xd2] sm:$0xff]
      %v1120 = vld [vmem:[%s354 + $0xda] sm:$0xff]
      %v1121 = vld [vmem:[%s354 + $0xe2] sm:$0xff]
      %v1122 = vld [vmem:[%s354 + $0xea] sm:$0xff]
      %1151 = vrot.lane.b32.xlu0 %v1095, 15
      %v1152 = vpop.permute.xlu0 %1151
      %1153 = vrot.lane.b32.xlu0 %v1096, 15
      %v1154 = vpop.permute.xlu0 %1153
      %1155 = vrot.lane.b32.xlu0 %v1097, 15
      %v1156 = vpop.permute.xlu0 %1155
      %1157 = vrot.lane.b32.xlu0 %v1098, 15
      %v1158 = vpop.permute.xlu0 %1157
      %1159 = vrot.lane.b32.xlu0 %v1099, 15
      %v1160 = vpop.permute.xlu0 %1159
      %1161 = vrot.lane.b32.xlu0 %v1100, 15
      %v1162 = vpop.permute.xlu0 %1161
      %1163 = vrot.lane.b32.xlu0 %v1101, 15
      %v1164 = vpop.permute.xlu0 %1163
      %1165 = vrot.lane.b32.xlu0 %v1102, 15
      %v1166 = vpop.permute.xlu0 %1165
      %1167 = vrot.lane.b32.xlu0 %v1103, 15
      %v1168 = vpop.permute.xlu0 %1167
      %1169 = vrot.lane.b32.xlu0 %v1104, 15
      %v1170 = vpop.permute.xlu0 %1169
      %1171 = vrot.lane.b32.xlu0 %v1105, 15
      %v1172 = vpop.permute.xlu0 %1171
      %1173 = vrot.lane.b32.xlu0 %v1106, 15
      %v1174 = vpop.permute.xlu0 %1173
      %1175 = vrot.lane.b32.xlu0 %v1107, 15
      %v1176 = vpop.permute.xlu0 %1175
      %1177 = vrot.lane.b32.xlu0 %v1108, 15
      %v1178 = vpop.permute.xlu0 %1177
      %1179 = vrot.lane.b32.xlu0 %v1109, 15
      %v1180 = vpop.permute.xlu0 %1179
      %1181 = vrot.lane.b32.xlu0 %v1110, 15
      %v1182 = vpop.permute.xlu0 %1181
      %1183 = vrot.lane.b32.xlu0 %v1111, 15
      %v1184 = vpop.permute.xlu0 %1183
      %1185 = vrot.lane.b32.xlu0 %v1112, 15
      %v1186 = vpop.permute.xlu0 %1185
      %1187 = vrot.lane.b32.xlu0 %v1113, 15
      %v1188 = vpop.permute.xlu0 %1187
      %1189 = vrot.lane.b32.xlu0 %v1114, 15
      %v1190 = vpop.permute.xlu0 %1189
      %1191 = vrot.lane.b32.xlu0 %v1115, 15
      %v1192 = vpop.permute.xlu0 %1191
      %1193 = vrot.lane.b32.xlu0 %v1116, 15
      %v1194 = vpop.permute.xlu0 %1193
      %1195 = vrot.lane.b32.xlu0 %v1117, 15
      %v1196 = vpop.permute.xlu0 %1195
      %1197 = vrot.lane.b32.xlu0 %v1118, 15
      %v1198 = vpop.permute.xlu0 %1197
      %1199 = vrot.lane.b32.xlu0 %v1119, 15
      %v1200 = vpop.permute.xlu0 %1199
      %1201 = vrot.lane.b32.xlu0 %v1120, 15
      %v1202 = vpop.permute.xlu0 %1201
      %1203 = vrot.lane.b32.xlu0 %v1121, 15
      %v1204 = vpop.permute.xlu0 %1203
      %1205 = vrot.lane.b32.xlu0 %v1122, 15
      %v1206 = vpop.permute.xlu0 %1205
      %vm1235 = vcmask 146552
      %1236 = vst.msk [vmem:[#allocation2] sm:$0xff] %vm1235, %v1152
      %1237 = vst.msk [vmem:[#allocation2 + $0x10] sm:$0xff] %vm1235, %v1154
      %1238 = vst.msk [vmem:[#allocation2 + $0x20] sm:$0xff] %vm1235, %v1156
      %1239 = vst.msk [vmem:[#allocation2 + $0x30] sm:$0xff] %vm1235, %v1158
      %1240 = vst.msk [vmem:[#allocation2 + $0x40] sm:$0xff] %vm1235, %v1160
      %1241 = vst.msk [vmem:[#allocation2 + $0x50] sm:$0xff] %vm1235, %v1162
      %1242 = vst.msk [vmem:[#allocation2 + $0x60] sm:$0xff] %vm1235, %v1164
      %1243 = vst.msk [vmem:[#allocation2 + $0x70] sm:$0xff] %vm1235, %v1166
      %1244 = vst.msk [vmem:[#allocation2 + $0x80] sm:$0xff] %vm1235, %v1168
      %1245 = vst.msk [vmem:[#allocation2 + $0x90] sm:$0xff] %vm1235, %v1170
      %1246 = vst.msk [vmem:[#allocation2 + $0xa0] sm:$0xff] %vm1235, %v1172
      %1247 = vst.msk [vmem:[#allocation2 + $0xb0] sm:$0xff] %vm1235, %v1174
      %1248 = vst.msk [vmem:[#allocation2 + $0xc0] sm:$0xff] %vm1235, %v1176
      %1249 = vst.msk [vmem:[#allocation2 + $0xd0] sm:$0xff] %vm1235, %v1178
      %1250 = vst.msk [vmem:[#allocation2 + $0xe0] sm:$0xff] %vm1235, %v1180
      %1251 = vst.msk [vmem:[#allocation2 + $0xf0] sm:$0xff] %vm1235, %v1182
      %1252 = vst.msk [vmem:[#allocation2 + $0x100] sm:$0xff] %vm1235, %v1184
      %1253 = vst.msk [vmem:[#allocation2 + $0x110] sm:$0xff] %vm1235, %v1186
      %1254 = vst.msk [vmem:[#allocation2 + $0x120] sm:$0xff] %vm1235, %v1188
      %1255 = vst.msk [vmem:[#allocation2 + $0x130] sm:$0xff] %vm1235, %v1190
      %1256 = vst.msk [vmem:[#allocation2 + $0x140] sm:$0xff] %vm1235, %v1192
      %1257 = vst.msk [vmem:[#allocation2 + $0x150] sm:$0xff] %vm1235, %v1194
      %1258 = vst.msk [vmem:[#allocation2 + $0x160] sm:$0xff] %vm1235, %v1196
      %1259 = vst.msk [vmem:[#allocation2 + $0x170] sm:$0xff] %vm1235, %v1198
      %1260 = vst.msk [vmem:[#allocation2 + $0x180] sm:$0xff] %vm1235, %v1200
      %1261 = vst.msk [vmem:[#allocation2 + $0x190] sm:$0xff] %vm1235, %v1202
      %1262 = vst.msk [vmem:[#allocation2 + $0x1a0] sm:$0xff] %vm1235, %v1204
      %1263 = vst.msk [vmem:[#allocation2 + $0x1b0] sm:$0xff] %vm1235, %v1206
      %v1264 = vld [vmem:[%s354 + $0x20] sm:$0xff]
      %v1265 = vld [vmem:[%s354 + $0x28] sm:$0xff]
      %v1266 = vld [vmem:[%s354 + $0x30] sm:$0xff]
      %v1267 = vld [vmem:[%s354 + $0x38] sm:$0xff]
      %v1268 = vld [vmem:[%s354 + $0x40] sm:$0xff]
      %v1269 = vld [vmem:[%s354 + $0x48] sm:$0xff]
      %v1270 = vld [vmem:[%s354 + $0x50] sm:$0xff]
      %v1271 = vld [vmem:[%s354 + $0x58] sm:$0xff]
      %v1272 = vld [vmem:[%s354 + $0x60] sm:$0xff]
      %v1273 = vld [vmem:[%s354 + $0x68] sm:$0xff]
      %v1274 = vld [vmem:[%s354 + $0x70] sm:$0xff]
      %v1275 = vld [vmem:[%s354 + $0x78] sm:$0xff]
      %v1276 = vld [vmem:[%s354 + $0x80] sm:$0xff]
      %v1277 = vld [vmem:[%s354 + $0x88] sm:$0xff]
      %v1278 = vld [vmem:[%s354 + $0x90] sm:$0xff]
      %v1279 = vld [vmem:[%s354 + $0x98] sm:$0xff]
      %v1280 = vld [vmem:[%s354 + $0xa0] sm:$0xff]
      %v1281 = vld [vmem:[%s354 + $0xa8] sm:$0xff]
      %v1282 = vld [vmem:[%s354 + $0xb0] sm:$0xff]
      %v1283 = vld [vmem:[%s354 + $0xb8] sm:$0xff]
      %v1284 = vld [vmem:[%s354 + $0xc0] sm:$0xff]
      %v1285 = vld [vmem:[%s354 + $0xc8] sm:$0xff]
      %v1286 = vld [vmem:[%s354 + $0xd0] sm:$0xff]
      %v1287 = vld [vmem:[%s354 + $0xd8] sm:$0xff]
      %v1288 = vld [vmem:[%s354 + $0xe0] sm:$0xff]
      %v1289 = vld [vmem:[%s354 + $0xe8] sm:$0xff]
      %v1290 = vld [vmem:[%s354 + $0xf0] sm:$0xff]
      %v1291 = vld [vmem:[%s354 + $0xf8] sm:$0xff]
      %1320 = vrot.lane.b32.xlu0 %v1264, 18
      %v1321 = vpop.permute.xlu0 %1320
      %1322 = vrot.lane.b32.xlu0 %v1265, 18
      %v1323 = vpop.permute.xlu0 %1322
      %1324 = vrot.lane.b32.xlu0 %v1266, 18
      %v1325 = vpop.permute.xlu0 %1324
      %1326 = vrot.lane.b32.xlu0 %v1267, 18
      %v1327 = vpop.permute.xlu0 %1326
      %1328 = vrot.lane.b32.xlu0 %v1268, 18
      %v1329 = vpop.permute.xlu0 %1328
      %1330 = vrot.lane.b32.xlu0 %v1269, 18
      %v1331 = vpop.permute.xlu0 %1330
      %1332 = vrot.lane.b32.xlu0 %v1270, 18
      %v1333 = vpop.permute.xlu0 %1332
      %1334 = vrot.lane.b32.xlu0 %v1271, 18
      %v1335 = vpop.permute.xlu0 %1334
      %1336 = vrot.lane.b32.xlu0 %v1272, 18
      %v1337 = vpop.permute.xlu0 %1336
      %1338 = vrot.lane.b32.xlu0 %v1273, 18
      %v1339 = vpop.permute.xlu0 %1338
      %1340 = vrot.lane.b32.xlu0 %v1274, 18
      %v1341 = vpop.permute.xlu0 %1340
      %1342 = vrot.lane.b32.xlu0 %v1275, 18
      %v1343 = vpop.permute.xlu0 %1342
      %1344 = vrot.lane.b32.xlu0 %v1276, 18
      %v1345 = vpop.permute.xlu0 %1344
      %1346 = vrot.lane.b32.xlu0 %v1277, 18
      %v1347 = vpop.permute.xlu0 %1346
      %1348 = vrot.lane.b32.xlu0 %v1278, 18
      %v1349 = vpop.permute.xlu0 %1348
      %1350 = vrot.lane.b32.xlu0 %v1279, 18
      %v1351 = vpop.permute.xlu0 %1350
      %1352 = vrot.lane.b32.xlu0 %v1280, 18
      %v1353 = vpop.permute.xlu0 %1352
      %1354 = vrot.lane.b32.xlu0 %v1281, 18
      %v1355 = vpop.permute.xlu0 %1354
      %1356 = vrot.lane.b32.xlu0 %v1282, 18
      %v1357 = vpop.permute.xlu0 %1356
      %1358 = vrot.lane.b32.xlu0 %v1283, 18
      %v1359 = vpop.permute.xlu0 %1358
      %1360 = vrot.lane.b32.xlu0 %v1284, 18
      %v1361 = vpop.permute.xlu0 %1360
      %1362 = vrot.lane.b32.xlu0 %v1285, 18
      %v1363 = vpop.permute.xlu0 %1362
      %1364 = vrot.lane.b32.xlu0 %v1286, 18
      %v1365 = vpop.permute.xlu0 %1364
      %1366 = vrot.lane.b32.xlu0 %v1287, 18
      %v1367 = vpop.permute.xlu0 %1366
      %1368 = vrot.lane.b32.xlu0 %v1288, 18
      %v1369 = vpop.permute.xlu0 %1368
      %1370 = vrot.lane.b32.xlu0 %v1289, 18
      %v1371 = vpop.permute.xlu0 %1370
      %1372 = vrot.lane.b32.xlu0 %v1290, 18
      %v1373 = vpop.permute.xlu0 %1372
      %1374 = vrot.lane.b32.xlu0 %v1291, 18
      %v1375 = vpop.permute.xlu0 %1374
      %vm1404 = vcmask 171152
      %1405 = vst.msk [vmem:[#allocation2] sm:$0xff] %vm1404, %v1321
      %1406 = vst.msk [vmem:[#allocation2 + $0x10] sm:$0xff] %vm1404, %v1323
      %1407 = vst.msk [vmem:[#allocation2 + $0x20] sm:$0xff] %vm1404, %v1325
      %1408 = vst.msk [vmem:[#allocation2 + $0x30] sm:$0xff] %vm1404, %v1327
      %1409 = vst.msk [vmem:[#allocation2 + $0x40] sm:$0xff] %vm1404, %v1329
      %1410 = vst.msk [vmem:[#allocation2 + $0x50] sm:$0xff] %vm1404, %v1331
      %1411 = vst.msk [vmem:[#allocation2 + $0x60] sm:$0xff] %vm1404, %v1333
      %1412 = vst.msk [vmem:[#allocation2 + $0x70] sm:$0xff] %vm1404, %v1335
      %1413 = vst.msk [vmem:[#allocation2 + $0x80] sm:$0xff] %vm1404, %v1337
      %1414 = vst.msk [vmem:[#allocation2 + $0x90] sm:$0xff] %vm1404, %v1339
      %1415 = vst.msk [vmem:[#allocation2 + $0xa0] sm:$0xff] %vm1404, %v1341
      %1416 = vst.msk [vmem:[#allocation2 + $0xb0] sm:$0xff] %vm1404, %v1343
      %1417 = vst.msk [vmem:[#allocation2 + $0xc0] sm:$0xff] %vm1404, %v1345
      %1418 = vst.msk [vmem:[#allocation2 + $0xd0] sm:$0xff] %vm1404, %v1347
      %1419 = vst.msk [vmem:[#allocation2 + $0xe0] sm:$0xff] %vm1404, %v1349
      %1420 = vst.msk [vmem:[#allocation2 + $0xf0] sm:$0xff] %vm1404, %v1351
      %1421 = vst.msk [vmem:[#allocation2 + $0x100] sm:$0xff] %vm1404, %v1353
      %1422 = vst.msk [vmem:[#allocation2 + $0x110] sm:$0xff] %vm1404, %v1355
      %1423 = vst.msk [vmem:[#allocation2 + $0x120] sm:$0xff] %vm1404, %v1357
      %1424 = vst.msk [vmem:[#allocation2 + $0x130] sm:$0xff] %vm1404, %v1359
      %1425 = vst.msk [vmem:[#allocation2 + $0x140] sm:$0xff] %vm1404, %v1361
      %1426 = vst.msk [vmem:[#allocation2 + $0x150] sm:$0xff] %vm1404, %v1363
      %1427 = vst.msk [vmem:[#allocation2 + $0x160] sm:$0xff] %vm1404, %v1365
      %1428 = vst.msk [vmem:[#allocation2 + $0x170] sm:$0xff] %vm1404, %v1367
      %1429 = vst.msk [vmem:[#allocation2 + $0x180] sm:$0xff] %vm1404, %v1369
      %1430 = vst.msk [vmem:[#allocation2 + $0x190] sm:$0xff] %vm1404, %v1371
      %1431 = vst.msk [vmem:[#allocation2 + $0x1a0] sm:$0xff] %vm1404, %v1373
      %1432 = vst.msk [vmem:[#allocation2 + $0x1b0] sm:$0xff] %vm1404, %v1375
      %v1433 = vld [vmem:[%s354 + $0x21] sm:$0xff]
      %v1434 = vld [vmem:[%s354 + $0x29] sm:$0xff]
      %v1435 = vld [vmem:[%s354 + $0x31] sm:$0xff]
      %v1436 = vld [vmem:[%s354 + $0x39] sm:$0xff]
      %v1437 = vld [vmem:[%s354 + $0x41] sm:$0xff]
      %v1438 = vld [vmem:[%s354 + $0x49] sm:$0xff]
      %v1439 = vld [vmem:[%s354 + $0x51] sm:$0xff]
      %v1440 = vld [vmem:[%s354 + $0x59] sm:$0xff]
      %v1441 = vld [vmem:[%s354 + $0x61] sm:$0xff]
      %v1442 = vld [vmem:[%s354 + $0x69] sm:$0xff]
      %v1443 = vld [vmem:[%s354 + $0x71] sm:$0xff]
      %v1444 = vld [vmem:[%s354 + $0x79] sm:$0xff]
      %v1445 = vld [vmem:[%s354 + $0x81] sm:$0xff]
      %v1446 = vld [vmem:[%s354 + $0x89] sm:$0xff]
      %v1447 = vld [vmem:[%s354 + $0x91] sm:$0xff]
      %v1448 = vld [vmem:[%s354 + $0x99] sm:$0xff]
      %v1449 = vld [vmem:[%s354 + $0xa1] sm:$0xff]
      %v1450 = vld [vmem:[%s354 + $0xa9] sm:$0xff]
      %v1451 = vld [vmem:[%s354 + $0xb1] sm:$0xff]
      %v1452 = vld [vmem:[%s354 + $0xb9] sm:$0xff]
      %v1453 = vld [vmem:[%s354 + $0xc1] sm:$0xff]
      %v1454 = vld [vmem:[%s354 + $0xc9] sm:$0xff]
      %v1455 = vld [vmem:[%s354 + $0xd1] sm:$0xff]
      %v1456 = vld [vmem:[%s354 + $0xd9] sm:$0xff]
      %v1457 = vld [vmem:[%s354 + $0xe1] sm:$0xff]
      %v1458 = vld [vmem:[%s354 + $0xe9] sm:$0xff]
      %v1459 = vld [vmem:[%s354 + $0xf1] sm:$0xff]
      %v1460 = vld [vmem:[%s354 + $0xf9] sm:$0xff]
      %1489 = vrot.lane.b32.xlu0 %v1433, 21
      %v1490 = vpop.permute.xlu0 %1489
      %1491 = vrot.lane.b32.xlu0 %v1434, 21
      %v1492 = vpop.permute.xlu0 %1491
      %1493 = vrot.lane.b32.xlu0 %v1435, 21
      %v1494 = vpop.permute.xlu0 %1493
      %1495 = vrot.lane.b32.xlu0 %v1436, 21
      %v1496 = vpop.permute.xlu0 %1495
      %1497 = vrot.lane.b32.xlu0 %v1437, 21
      %v1498 = vpop.permute.xlu0 %1497
      %1499 = vrot.lane.b32.xlu0 %v1438, 21
      %v1500 = vpop.permute.xlu0 %1499
      %1501 = vrot.lane.b32.xlu0 %v1439, 21
      %v1502 = vpop.permute.xlu0 %1501
      %1503 = vrot.lane.b32.xlu0 %v1440, 21
      %v1504 = vpop.permute.xlu0 %1503
      %1505 = vrot.lane.b32.xlu0 %v1441, 21
      %v1506 = vpop.permute.xlu0 %1505
      %1507 = vrot.lane.b32.xlu0 %v1442, 21
      %v1508 = vpop.permute.xlu0 %1507
      %1509 = vrot.lane.b32.xlu0 %v1443, 21
      %v1510 = vpop.permute.xlu0 %1509
      %1511 = vrot.lane.b32.xlu0 %v1444, 21
      %v1512 = vpop.permute.xlu0 %1511
      %1513 = vrot.lane.b32.xlu0 %v1445, 21
      %v1514 = vpop.permute.xlu0 %1513
      %1515 = vrot.lane.b32.xlu0 %v1446, 21
      %v1516 = vpop.permute.xlu0 %1515
      %1517 = vrot.lane.b32.xlu0 %v1447, 21
      %v1518 = vpop.permute.xlu0 %1517
      %1519 = vrot.lane.b32.xlu0 %v1448, 21
      %v1520 = vpop.permute.xlu0 %1519
      %1521 = vrot.lane.b32.xlu0 %v1449, 21
      %v1522 = vpop.permute.xlu0 %1521
      %1523 = vrot.lane.b32.xlu0 %v1450, 21
      %v1524 = vpop.permute.xlu0 %1523
      %1525 = vrot.lane.b32.xlu0 %v1451, 21
      %v1526 = vpop.permute.xlu0 %1525
      %1527 = vrot.lane.b32.xlu0 %v1452, 21
      %v1528 = vpop.permute.xlu0 %1527
      %1529 = vrot.lane.b32.xlu0 %v1453, 21
      %v1530 = vpop.permute.xlu0 %1529
      %1531 = vrot.lane.b32.xlu0 %v1454, 21
      %v1532 = vpop.permute.xlu0 %1531
      %1533 = vrot.lane.b32.xlu0 %v1455, 21
      %v1534 = vpop.permute.xlu0 %1533
      %1535 = vrot.lane.b32.xlu0 %v1456, 21
      %v1536 = vpop.permute.xlu0 %1535
      %1537 = vrot.lane.b32.xlu0 %v1457, 21
      %v1538 = vpop.permute.xlu0 %1537
      %1539 = vrot.lane.b32.xlu0 %v1458, 21
      %v1540 = vpop.permute.xlu0 %1539
      %1541 = vrot.lane.b32.xlu0 %v1459, 21
      %v1542 = vpop.permute.xlu0 %1541
      %1543 = vrot.lane.b32.xlu0 %v1460, 21
      %v1544 = vpop.permute.xlu0 %1543
      %vm1573 = vcmask 195752
      %1574 = vst.msk [vmem:[#allocation2] sm:$0xff] %vm1573, %v1490
      %1575 = vst.msk [vmem:[#allocation2 + $0x10] sm:$0xff] %vm1573, %v1492
      %1576 = vst.msk [vmem:[#allocation2 + $0x20] sm:$0xff] %vm1573, %v1494
      %1577 = vst.msk [vmem:[#allocation2 + $0x30] sm:$0xff] %vm1573, %v1496
      %1578 = vst.msk [vmem:[#allocation2 + $0x40] sm:$0xff] %vm1573, %v1498
      %1579 = vst.msk [vmem:[#allocation2 + $0x50] sm:$0xff] %vm1573, %v1500
      %1580 = vst.msk [vmem:[#allocation2 + $0x60] sm:$0xff] %vm1573, %v1502
      %1581 = vst.msk [vmem:[#allocation2 + $0x70] sm:$0xff] %vm1573, %v1504
      %1582 = vst.msk [vmem:[#allocation2 + $0x80] sm:$0xff] %vm1573, %v1506
      %1583 = vst.msk [vmem:[#allocation2 + $0x90] sm:$0xff] %vm1573, %v1508
      %1584 = vst.msk [vmem:[#allocation2 + $0xa0] sm:$0xff] %vm1573, %v1510
      %1585 = vst.msk [vmem:[#allocation2 + $0xb0] sm:$0xff] %vm1573, %v1512
      %1586 = vst.msk [vmem:[#allocation2 + $0xc0] sm:$0xff] %vm1573, %v1514
      %1587 = vst.msk [vmem:[#allocation2 + $0xd0] sm:$0xff] %vm1573, %v1516
      %1588 = vst.msk [vmem:[#allocation2 + $0xe0] sm:$0xff] %vm1573, %v1518
      %1589 = vst.msk [vmem:[#allocation2 + $0xf0] sm:$0xff] %vm1573, %v1520
      %1590 = vst.msk [vmem:[#allocation2 + $0x100] sm:$0xff] %vm1573, %v1522
      %1591 = vst.msk [vmem:[#allocation2 + $0x110] sm:$0xff] %vm1573, %v1524
      %1592 = vst.msk [vmem:[#allocation2 + $0x120] sm:$0xff] %vm1573, %v1526
      %1593 = vst.msk [vmem:[#allocation2 + $0x130] sm:$0xff] %vm1573, %v1528
      %1594 = vst.msk [vmem:[#allocation2 + $0x140] sm:$0xff] %vm1573, %v1530
      %1595 = vst.msk [vmem:[#allocation2 + $0x150] sm:$0xff] %vm1573, %v1532
      %1596 = vst.msk [vmem:[#allocation2 + $0x160] sm:$0xff] %vm1573, %v1534
      %1597 = vst.msk [vmem:[#allocation2 + $0x170] sm:$0xff] %vm1573, %v1536
      %1598 = vst.msk [vmem:[#allocation2 + $0x180] sm:$0xff] %vm1573, %v1538
      %1599 = vst.msk [vmem:[#allocation2 + $0x190] sm:$0xff] %vm1573, %v1540
      %1600 = vst.msk [vmem:[#allocation2 + $0x1a0] sm:$0xff] %vm1573, %v1542
      %1601 = vst.msk [vmem:[#allocation2 + $0x1b0] sm:$0xff] %vm1573, %v1544
      %v1602 = vld [vmem:[%s354 + $0x22] sm:$0xff]
      %v1603 = vld [vmem:[%s354 + $0x2a] sm:$0xff]
      %v1604 = vld [vmem:[%s354 + $0x32] sm:$0xff]
      %v1605 = vld [vmem:[%s354 + $0x3a] sm:$0xff]
      %v1606 = vld [vmem:[%s354 + $0x42] sm:$0xff]
      %v1607 = vld [vmem:[%s354 + $0x4a] sm:$0xff]
      %v1608 = vld [vmem:[%s354 + $0x52] sm:$0xff]
      %v1609 = vld [vmem:[%s354 + $0x5a] sm:$0xff]
      %v1610 = vld [vmem:[%s354 + $0x62] sm:$0xff]
      %v1611 = vld [vmem:[%s354 + $0x6a] sm:$0xff]
      %v1612 = vld [vmem:[%s354 + $0x72] sm:$0xff]
      %v1613 = vld [vmem:[%s354 + $0x7a] sm:$0xff]
      %v1614 = vld [vmem:[%s354 + $0x82] sm:$0xff]
      %v1615 = vld [vmem:[%s354 + $0x8a] sm:$0xff]
      %v1616 = vld [vmem:[%s354 + $0x92] sm:$0xff]
      %v1617 = vld [vmem:[%s354 + $0x9a] sm:$0xff]
      %v1618 = vld [vmem:[%s354 + $0xa2] sm:$0xff]
      %v1619 = vld [vmem:[%s354 + $0xaa] sm:$0xff]
      %v1620 = vld [vmem:[%s354 + $0xb2] sm:$0xff]
      %v1621 = vld [vmem:[%s354 + $0xba] sm:$0xff]
      %v1622 = vld [vmem:[%s354 + $0xc2] sm:$0xff]
      %v1623 = vld [vmem:[%s354 + $0xca] sm:$0xff]
      %v1624 = vld [vmem:[%s354 + $0xd2] sm:$0xff]
      %v1625 = vld [vmem:[%s354 + $0xda] sm:$0xff]
      %v1626 = vld [vmem:[%s354 + $0xe2] sm:$0xff]
      %v1627 = vld [vmem:[%s354 + $0xea] sm:$0xff]
      %v1628 = vld [vmem:[%s354 + $0xf2] sm:$0xff]
      %v1629 = vld [vmem:[%s354 + $0xfa] sm:$0xff]
      %1658 = vrot.lane.b32.xlu0 %v1602, 24
      %v1659 = vpop.permute.xlu0 %1658
      %1660 = vrot.lane.b32.xlu0 %v1603, 24
      %v1661 = vpop.permute.xlu0 %1660
      %1662 = vrot.lane.b32.xlu0 %v1604, 24
      %v1663 = vpop.permute.xlu0 %1662
      %1664 = vrot.lane.b32.xlu0 %v1605, 24
      %v1665 = vpop.permute.xlu0 %1664
      %1666 = vrot.lane.b32.xlu0 %v1606, 24
      %v1667 = vpop.permute.xlu0 %1666
      %1668 = vrot.lane.b32.xlu0 %v1607, 24
      %v1669 = vpop.permute.xlu0 %1668
      %1670 = vrot.lane.b32.xlu0 %v1608, 24
      %v1671 = vpop.permute.xlu0 %1670
      %1672 = vrot.lane.b32.xlu0 %v1609, 24
      %v1673 = vpop.permute.xlu0 %1672
      %1674 = vrot.lane.b32.xlu0 %v1610, 24
      %v1675 = vpop.permute.xlu0 %1674
      %1676 = vrot.lane.b32.xlu0 %v1611, 24
      %v1677 = vpop.permute.xlu0 %1676
      %1678 = vrot.lane.b32.xlu0 %v1612, 24
      %v1679 = vpop.permute.xlu0 %1678
      %1680 = vrot.lane.b32.xlu0 %v1613, 24
      %v1681 = vpop.permute.xlu0 %1680
      %1682 = vrot.lane.b32.xlu0 %v1614, 24
      %v1683 = vpop.permute.xlu0 %1682
      %1684 = vrot.lane.b32.xlu0 %v1615, 24
      %v1685 = vpop.permute.xlu0 %1684
      %1686 = vrot.lane.b32.xlu0 %v1616, 24
      %v1687 = vpop.permute.xlu0 %1686
      %1688 = vrot.lane.b32.xlu0 %v1617, 24
      %v1689 = vpop.permute.xlu0 %1688
      %1690 = vrot.lane.b32.xlu0 %v1618, 24
      %v1691 = vpop.permute.xlu0 %1690
      %1692 = vrot.lane.b32.xlu0 %v1619, 24
      %v1693 = vpop.permute.xlu0 %1692
      %1694 = vrot.lane.b32.xlu0 %v1620, 24
      %v1695 = vpop.permute.xlu0 %1694
      %1696 = vrot.lane.b32.xlu0 %v1621, 24
      %v1697 = vpop.permute.xlu0 %1696
      %1698 = vrot.lane.b32.xlu0 %v1622, 24
      %v1699 = vpop.permute.xlu0 %1698
      %1700 = vrot.lane.b32.xlu0 %v1623, 24
      %v1701 = vpop.permute.xlu0 %1700
      %1702 = vrot.lane.b32.xlu0 %v1624, 24
      %v1703 = vpop.permute.xlu0 %1702
      %1704 = vrot.lane.b32.xlu0 %v1625, 24
      %v1705 = vpop.permute.xlu0 %1704
      %1706 = vrot.lane.b32.xlu0 %v1626, 24
      %v1707 = vpop.permute.xlu0 %1706
      %1708 = vrot.lane.b32.xlu0 %v1627, 24
      %v1709 = vpop.permute.xlu0 %1708
      %1710 = vrot.lane.b32.xlu0 %v1628, 24
      %v1711 = vpop.permute.xlu0 %1710
      %1712 = vrot.lane.b32.xlu0 %v1629, 24
      %v1713 = vpop.permute.xlu0 %1712
      %vm1742 = vcmask 220352
      %1743 = vst.msk [vmem:[#allocation2] sm:$0xff] %vm1742, %v1659
      %1744 = vst.msk [vmem:[#allocation2 + $0x10] sm:$0xff] %vm1742, %v1661
      %1745 = vst.msk [vmem:[#allocation2 + $0x20] sm:$0xff] %vm1742, %v1663
      %1746 = vst.msk [vmem:[#allocation2 + $0x30] sm:$0xff] %vm1742, %v1665
      %1747 = vst.msk [vmem:[#allocation2 + $0x40] sm:$0xff] %vm1742, %v1667
      %1748 = vst.msk [vmem:[#allocation2 + $0x50] sm:$0xff] %vm1742, %v1669
      %1749 = vst.msk [vmem:[#allocation2 + $0x60] sm:$0xff] %vm1742, %v1671
      %1750 = vst.msk [vmem:[#allocation2 + $0x70] sm:$0xff] %vm1742, %v1673
      %1751 = vst.msk [vmem:[#allocation2 + $0x80] sm:$0xff] %vm1742, %v1675
      %1752 = vst.msk [vmem:[#allocation2 + $0x90] sm:$0xff] %vm1742, %v1677
      %1753 = vst.msk [vmem:[#allocation2 + $0xa0] sm:$0xff] %vm1742, %v1679
      %1754 = vst.msk [vmem:[#allocation2 + $0xb0] sm:$0xff] %vm1742, %v1681
      %1755 = vst.msk [vmem:[#allocation2 + $0xc0] sm:$0xff] %vm1742, %v1683
      %1756 = vst.msk [vmem:[#allocation2 + $0xd0] sm:$0xff] %vm1742, %v1685
      %1757 = vst.msk [vmem:[#allocation2 + $0xe0] sm:$0xff] %vm1742, %v1687
      %1758 = vst.msk [vmem:[#allocation2 + $0xf0] sm:$0xff] %vm1742, %v1689
      %1759 = vst.msk [vmem:[#allocation2 + $0x100] sm:$0xff] %vm1742, %v1691
      %1760 = vst.msk [vmem:[#allocation2 + $0x110] sm:$0xff] %vm1742, %v1693
      %1761 = vst.msk [vmem:[#allocation2 + $0x120] sm:$0xff] %vm1742, %v1695
      %1762 = vst.msk [vmem:[#allocation2 + $0x130] sm:$0xff] %vm1742, %v1697
      %1763 = vst.msk [vmem:[#allocation2 + $0x140] sm:$0xff] %vm1742, %v1699
      %1764 = vst.msk [vmem:[#allocation2 + $0x150] sm:$0xff] %vm1742, %v1701
      %1765 = vst.msk [vmem:[#allocation2 + $0x160] sm:$0xff] %vm1742, %v1703
      %1766 = vst.msk [vmem:[#allocation2 + $0x170] sm:$0xff] %vm1742, %v1705
      %1767 = vst.msk [vmem:[#allocation2 + $0x180] sm:$0xff] %vm1742, %v1707
      %1768 = vst.msk [vmem:[#allocation2 + $0x190] sm:$0xff] %vm1742, %v1709
      %1769 = vst.msk [vmem:[#allocation2 + $0x1a0] sm:$0xff] %vm1742, %v1711
      %1770 = vst.msk [vmem:[#allocation2 + $0x1b0] sm:$0xff] %vm1742, %v1713
      %v1771 = vld [vmem:[#allocation2] sm:$0xff]
      %v1772 = vld [vmem:[#allocation2 + $0x10] sm:$0xff]
      %v1773 = vld [vmem:[#allocation2 + $0x20] sm:$0xff]
      %v1774 = vld [vmem:[#allocation2 + $0x30] sm:$0xff]
      %v1775 = vld [vmem:[#allocation2 + $0x40] sm:$0xff]
      %v1776 = vld [vmem:[#allocation2 + $0x50] sm:$0xff]
      %v1777 = vld [vmem:[#allocation2 + $0x60] sm:$0xff]
      %v1778 = vld [vmem:[#allocation2 + $0x70] sm:$0xff]
      %v1779 = vld [vmem:[#allocation2 + $0x80] sm:$0xff]
      %v1780 = vld [vmem:[#allocation2 + $0x90] sm:$0xff]
      %v1781 = vld [vmem:[#allocation2 + $0xa0] sm:$0xff]
      %v1782 = vld [vmem:[#allocation2 + $0xb0] sm:$0xff]
      %v1783 = vld [vmem:[#allocation2 + $0xc0] sm:$0xff]
      %v1784 = vld [vmem:[#allocation2 + $0xd0] sm:$0xff]
      %v1785 = vld [vmem:[#allocation2 + $0xe0] sm:$0xff]
      %v1786 = vld [vmem:[#allocation2 + $0xf0] sm:$0xff]
      %v1787 = vld [vmem:[#allocation2 + $0x100] sm:$0xff]
      %v1788 = vld [vmem:[#allocation2 + $0x110] sm:$0xff]
      %v1789 = vld [vmem:[#allocation2 + $0x120] sm:$0xff]
      %v1790 = vld [vmem:[#allocation2 + $0x130] sm:$0xff]
      %v1791 = vld [vmem:[#allocation2 + $0x140] sm:$0xff]
      %v1792 = vld [vmem:[#allocation2 + $0x150] sm:$0xff]
      %v1793 = vld [vmem:[#allocation2 + $0x160] sm:$0xff]
      %v1794 = vld [vmem:[#allocation2 + $0x170] sm:$0xff]
      %v1795 = vld [vmem:[#allocation2 + $0x180] sm:$0xff]
      %v1796 = vld [vmem:[#allocation2 + $0x190] sm:$0xff]
      %v1797 = vld [vmem:[#allocation2 + $0x1a0] sm:$0xff]
      %v1798 = vld [vmem:[#allocation2 + $0x1b0] sm:$0xff]
      %v1799 = vpack.c.bf16 %v1772, %v1771
      %v1800 = vpack.c.bf16 %v1774, %v1773
      %v1801 = vpack.c.bf16 %v1776, %v1775
      %v1802 = vpack.c.bf16 %v1778, %v1777
      %v1803 = vpack.c.bf16 %v1780, %v1779
      %v1804 = vpack.c.bf16 %v1782, %v1781
      %v1805 = vpack.c.bf16 %v1784, %v1783
      %v1806 = vpack.c.bf16 %v1786, %v1785
      %v1807 = vpack.c.bf16 %v1788, %v1787
      %v1808 = vpack.c.bf16 %v1790, %v1789
      %v1809 = vpack.c.bf16 %v1792, %v1791
      %v1810 = vpack.c.bf16 %v1794, %v1793
      %v1811 = vpack.c.bf16 %v1796, %v1795
      %v1812 = vpack.c.bf16 %v1798, %v1797
      %v1813 = vld [vmem:[%s1] sm:$0xf]
      %v1814 = vld [vmem:[%s1 + $0x4] sm:$0xf]
      %v1815 = vld [vmem:[%s1 + $0x8] sm:$0xf]
      %v1816 = vld [vmem:[%s1 + $0xc] sm:$0x3]
      %v1817 = vld [vmem:[%s2] sm:$0x1]
      %v1819 = vperm.slane %v1817, 0
      %v1825 = vunpack.c.l.b16 %v1813
      %v1826 = vunpack.c.l.b16 %v1814
      %v1827 = vunpack.c.l.b16 %v1815
      %v1828 = vunpack.c.l.b16 %v1816
      %v1829 = vpack.c.b16 %v1826, %v1825
      %v1830 = vpack.c.b16 %v1828, %v1827
      %vm1832 = vcmask 220160
      %v1834 = vsel %vm1832, %v1799, 0
      %v1837 = vsel %vm1832, %v1800, 0
      %v1840 = vsel %vm1832, %v1801, 0
      %v1843 = vsel %vm1832, %v1802, 0
      %v1846 = vsel %vm1832, %v1803, 0
      %v1849 = vsel %vm1832, %v1804, 0
      %v1852 = vsel %vm1832, %v1805, 0
      %v1855 = vsel %vm1832, %v1806, 0
      %v1858 = vsel %vm1832, %v1807, 0
      %v1861 = vsel %vm1832, %v1808, 0
      %v1864 = vsel %vm1832, %v1809, 0
      %v1867 = vsel %vm1832, %v1810, 0
      %v1870 = vsel %vm1832, %v1811, 0
      %v1873 = vsel %vm1832, %v1812, 0
      %vm1875 = vcmask 1044480
      %vm1876 = vcmask 1045504
      %v1877 = vsel %vm1875, 4294967295, 65535
      %v1878 = vsel %vm1876, %v1877, 0
      %v1880 = vand.u32 %v1830, %v1878
      %1882 = vmatpush.bf16.msra.mxu0 0
      %1883 = vmatpush.bf16.msra.mxu0 0
      %1884 = vmatpush.bf16.msra.mxu0 0
      %1885 = vmatpush.bf16.msra.mxu0 0
      %1886 = vmatpush.bf16.msra.mxu0 0
      %1887 = vmatpush.bf16.msra.mxu0 0
      %1888 = vmatpush.bf16.msra.mxu0 %v1880
      %1889 = vmatpush.bf16.msra.mxu0 %v1829
      %1890 = vmatmul.bf16.gmra.mxu0 %v1834
      %v1891 = vpop.f32.mrf.mxu0
      %v1892 = vadd.f32 %v1819, %v1891
      %v1893 = vpop.f32.mrf.mxu0
      %v1894 = vadd.f32 %v1819, %v1893
      %1895 = vmatmul.bf16.gmra.mxu0 %v1837
      %v1896 = vpop.f32.mrf.mxu0
      %v1897 = vadd.f32 %v1819, %v1896
      %v1898 = vpop.f32.mrf.mxu0
      %v1899 = vadd.f32 %v1819, %v1898
      %1900 = vmatmul.bf16.gmra.mxu0 %v1840
      %v1901 = vpop.f32.mrf.mxu0
      %v1902 = vadd.f32 %v1819, %v1901
      %v1903 = vpop.f32.mrf.mxu0
      %v1904 = vadd.f32 %v1819, %v1903
      %1905 = vmatmul.bf16.gmra.mxu0 %v1843
      %v1906 = vpop.f32.mrf.mxu0
      %v1907 = vadd.f32 %v1819, %v1906
      %v1908 = vpop.f32.mrf.mxu0
      %v1909 = vadd.f32 %v1819, %v1908
      %1910 = vmatmul.bf16.gmra.mxu0 %v1846
      %v1911 = vpop.f32.mrf.mxu0
      %v1912 = vadd.f32 %v1819, %v1911
      %v1913 = vpop.f32.mrf.mxu0
      %v1914 = vadd.f32 %v1819, %v1913
      %1915 = vmatmul.bf16.gmra.mxu0 %v1849
      %v1916 = vpop.f32.mrf.mxu0
      %v1917 = vadd.f32 %v1819, %v1916
      %v1918 = vpop.f32.mrf.mxu0
      %v1919 = vadd.f32 %v1819, %v1918
      %1920 = vmatmul.bf16.gmra.mxu0 %v1852
      %v1921 = vpop.f32.mrf.mxu0
      %v1922 = vadd.f32 %v1819, %v1921
      %v1923 = vpop.f32.mrf.mxu0
      %v1924 = vadd.f32 %v1819, %v1923
      %1925 = vmatmul.bf16.gmra.mxu0 %v1855
      %v1926 = vpop.f32.mrf.mxu0
      %v1927 = vadd.f32 %v1819, %v1926
      %v1928 = vpop.f32.mrf.mxu0
      %v1929 = vadd.f32 %v1819, %v1928
      %1930 = vmatmul.bf16.gmra.mxu0 %v1858
      %v1931 = vpop.f32.mrf.mxu0
      %v1932 = vadd.f32 %v1819, %v1931
      %v1933 = vpop.f32.mrf.mxu0
      %v1934 = vadd.f32 %v1819, %v1933
      %1935 = vmatmul.bf16.gmra.mxu0 %v1861
      %v1936 = vpop.f32.mrf.mxu0
      %v1937 = vadd.f32 %v1819, %v1936
      %v1938 = vpop.f32.mrf.mxu0
      %v1939 = vadd.f32 %v1819, %v1938
      %1940 = vmatmul.bf16.gmra.mxu0 %v1864
      %v1941 = vpop.f32.mrf.mxu0
      %v1942 = vadd.f32 %v1819, %v1941
      %v1943 = vpop.f32.mrf.mxu0
      %v1944 = vadd.f32 %v1819, %v1943
      %1945 = vmatmul.bf16.gmra.mxu0 %v1867
      %v1946 = vpop.f32.mrf.mxu0
      %v1947 = vadd.f32 %v1819, %v1946
      %v1948 = vpop.f32.mrf.mxu0
      %v1949 = vadd.f32 %v1819, %v1948
      %1950 = vmatmul.bf16.gmra.mxu0 %v1870
      %v1951 = vpop.f32.mrf.mxu0
      %v1952 = vadd.f32 %v1819, %v1951
      %v1953 = vpop.f32.mrf.mxu0
      %v1954 = vadd.f32 %v1819, %v1953
      %1955 = vmatmul.bf16.gmra.mxu0 %v1873
      %v1956 = vpop.f32.mrf.mxu0
      %v1957 = vadd.f32 %v1819, %v1956
      %v1958 = vpop.f32.mrf.mxu0
      %v1959 = vadd.f32 %v1819, %v1958
      %1960 = vdwg.mxu0
      %vm1961 = vcmp.gt.f32.partialorder %v1892, 0.0
      %vm1962 = vcmp.gt.f32.partialorder %v1894, 0.0
      %vm1963 = vcmp.gt.f32.partialorder %v1897, 0.0
      %vm1964 = vcmp.gt.f32.partialorder %v1899, 0.0
      %vm1965 = vcmp.gt.f32.partialorder %v1902, 0.0
      %vm1966 = vcmp.gt.f32.partialorder %v1904, 0.0
      %vm1967 = vcmp.gt.f32.partialorder %v1907, 0.0
      %vm1968 = vcmp.gt.f32.partialorder %v1909, 0.0
      %vm1969 = vcmp.gt.f32.partialorder %v1912, 0.0
      %vm1970 = vcmp.gt.f32.partialorder %v1914, 0.0
      %vm1971 = vcmp.gt.f32.partialorder %v1917, 0.0
      %vm1972 = vcmp.gt.f32.partialorder %v1919, 0.0
      %vm1973 = vcmp.gt.f32.partialorder %v1922, 0.0
      %vm1974 = vcmp.gt.f32.partialorder %v1924, 0.0
      %vm1975 = vcmp.gt.f32.partialorder %v1927, 0.0
      %vm1976 = vcmp.gt.f32.partialorder %v1929, 0.0
      %vm1977 = vcmp.gt.f32.partialorder %v1932, 0.0
      %vm1978 = vcmp.gt.f32.partialorder %v1934, 0.0
      %vm1979 = vcmp.gt.f32.partialorder %v1937, 0.0
      %vm1980 = vcmp.gt.f32.partialorder %v1939, 0.0
      %vm1981 = vcmp.gt.f32.partialorder %v1942, 0.0
      %vm1982 = vcmp.gt.f32.partialorder %v1944, 0.0
      %vm1983 = vcmp.gt.f32.partialorder %v1947, 0.0
      %vm1984 = vcmp.gt.f32.partialorder %v1949, 0.0
      %vm1985 = vcmp.gt.f32.partialorder %v1952, 0.0
      %vm1986 = vcmp.gt.f32.partialorder %v1954, 0.0
      %vm1987 = vcmp.gt.f32.partialorder %v1957, 0.0
      %vm1988 = vcmp.gt.f32.partialorder %v1959, 0.0
      %v1990 = vperm.slane %v361, 0
      %1991 = vset.pattern.permute.xlu0 0
      %1992 = vperm.xlu0 %1991, %v1990
      %v1993 = vpop.permute.xlu0 %1992
      %v1995 = vmul.f32 %v1993, %v1892
      %v1996 = vmul.f32 %v1993, %v1894
      %v1997 = vmul.f32 %v1993, %v1897
      %v1998 = vmul.f32 %v1993, %v1899
      %v1999 = vmul.f32 %v1993, %v1902
      %v2000 = vmul.f32 %v1993, %v1904
      %v2001 = vmul.f32 %v1993, %v1907
      %v2002 = vmul.f32 %v1993, %v1909
      %v2003 = vmul.f32 %v1993, %v1912
      %v2004 = vmul.f32 %v1993, %v1914
      %v2005 = vmul.f32 %v1993, %v1917
      %v2006 = vmul.f32 %v1993, %v1919
      %v2007 = vmul.f32 %v1993, %v1922
      %v2008 = vmul.f32 %v1993, %v1924
      %v2009 = vmul.f32 %v1993, %v1927
      %v2010 = vmul.f32 %v1993, %v1929
      %v2011 = vmul.f32 %v1993, %v1932
      %v2012 = vmul.f32 %v1993, %v1934
      %v2013 = vmul.f32 %v1993, %v1937
      %v2014 = vmul.f32 %v1993, %v1939
      %v2015 = vmul.f32 %v1993, %v1942
      %v2016 = vmul.f32 %v1993, %v1944
      %v2017 = vmul.f32 %v1993, %v1947
      %v2018 = vmul.f32 %v1993, %v1949
      %v2019 = vmul.f32 %v1993, %v1952
      %v2020 = vmul.f32 %v1993, %v1954
      %v2021 = vmul.f32 %v1993, %v1957
      %v2022 = vmul.f32 %v1993, %v1959
      %v2023 = vsel %vm1961, %v1892, %v1995
      %v2024 = vsel %vm1962, %v1894, %v1996
      %v2025 = vsel %vm1963, %v1897, %v1997
      %v2026 = vsel %vm1964, %v1899, %v1998
      %v2027 = vsel %vm1965, %v1902, %v1999
      %v2028 = vsel %vm1966, %v1904, %v2000
      %v2029 = vsel %vm1967, %v1907, %v2001
      %v2030 = vsel %vm1968, %v1909, %v2002
      %v2031 = vsel %vm1969, %v1912, %v2003
      %v2032 = vsel %vm1970, %v1914, %v2004
      %v2033 = vsel %vm1971, %v1917, %v2005
      %v2034 = vsel %vm1972, %v1919, %v2006
      %v2035 = vsel %vm1973, %v1922, %v2007
      %v2036 = vsel %vm1974, %v1924, %v2008
      %v2037 = vsel %vm1975, %v1927, %v2009
      %v2038 = vsel %vm1976, %v1929, %v2010
      %v2039 = vsel %vm1977, %v1932, %v2011
      %v2040 = vsel %vm1978, %v1934, %v2012
      %v2041 = vsel %vm1979, %v1937, %v2013
      %v2042 = vsel %vm1980, %v1939, %v2014
      %v2043 = vsel %vm1981, %v1942, %v2015
      %v2044 = vsel %vm1982, %v1944, %v2016
      %v2045 = vsel %vm1983, %v1947, %v2017
      %v2046 = vsel %vm1984, %v1949, %v2018
      %v2047 = vsel %vm1985, %v1952, %v2019
      %v2048 = vsel %vm1986, %v1954, %v2020
      %v2049 = vsel %vm1987, %v1957, %v2021
      %v2050 = vsel %vm1988, %v1959, %v2022
      %vm2051 = vcmask 80896
      %2052 = vst.msk [vmem:[#allocation3] sm:$0xff] %vm2051, %v2023
      %2053 = vst.msk [vmem:[#allocation3 + $0x8] sm:$0xff] %vm2051, %v2024
      %2054 = vst.msk [vmem:[#allocation3 + $0x10] sm:$0xff] %vm2051, %v2025
      %2055 = vst.msk [vmem:[#allocation3 + $0x18] sm:$0xff] %vm2051, %v2026
      %2056 = vst.msk [vmem:[#allocation3 + $0x20] sm:$0xff] %vm2051, %v2027
      %2057 = vst.msk [vmem:[#allocation3 + $0x28] sm:$0xff] %vm2051, %v2028
      %2058 = vst.msk [vmem:[#allocation3 + $0x30] sm:$0xff] %vm2051, %v2029
      %2059 = vst.msk [vmem:[#allocation3 + $0x38] sm:$0xff] %vm2051, %v2030
      %2060 = vst.msk [vmem:[#allocation3 + $0x40] sm:$0xff] %vm2051, %v2031
      %2061 = vst.msk [vmem:[#allocation3 + $0x48] sm:$0xff] %vm2051, %v2032
      %2062 = vst.msk [vmem:[#allocation3 + $0x50] sm:$0xff] %vm2051, %v2033
      %2063 = vst.msk [vmem:[#allocation3 + $0x58] sm:$0xff] %vm2051, %v2034
      %2064 = vst.msk [vmem:[#allocation3 + $0x60] sm:$0xff] %vm2051, %v2035
      %2065 = vst.msk [vmem:[#allocation3 + $0x68] sm:$0xff] %vm2051, %v2036
      %2066 = vst.msk [vmem:[#allocation3 + $0x70] sm:$0xff] %vm2051, %v2037
      %2067 = vst.msk [vmem:[#allocation3 + $0x78] sm:$0xff] %vm2051, %v2038
      %2068 = vst.msk [vmem:[#allocation3 + $0x80] sm:$0xff] %vm2051, %v2039
      %2069 = vst.msk [vmem:[#allocation3 + $0x88] sm:$0xff] %vm2051, %v2040
      %2070 = vst.msk [vmem:[#allocation3 + $0x90] sm:$0xff] %vm2051, %v2041
      %2071 = vst.msk [vmem:[#allocation3 + $0x98] sm:$0xff] %vm2051, %v2042
      %2072 = vst.msk [vmem:[#allocation3 + $0xa0] sm:$0xff] %vm2051, %v2043
      %2073 = vst.msk [vmem:[#allocation3 + $0xa8] sm:$0xff] %vm2051, %v2044
      %2074 = vst.msk [vmem:[#allocation3 + $0xb0] sm:$0xff] %vm2051, %v2045
      %2075 = vst.msk [vmem:[#allocation3 + $0xb8] sm:$0xff] %vm2051, %v2046
      %2076 = vst.msk [vmem:[#allocation3 + $0xc0] sm:$0xff] %vm2051, %v2047
      %2077 = vst.msk [vmem:[#allocation3 + $0xc8] sm:$0xff] %vm2051, %v2048
      %2078 = vst.msk [vmem:[#allocation3 + $0xd0] sm:$0xff] %vm2051, %v2049
      %2079 = vst.msk [vmem:[#allocation3 + $0xd8] sm:$0xff] %vm2051, %v2050
      %v2080 = vld [vmem:[#allocation3] ss:$2 sm:$0x7f]
      %s2081 = scalar_lea.vmem [#allocation3], 1
      %v2082 = vld [vmem:[%s2081] ss:$2 sm:$0x7f]
      %v2083 = vmax.f32 %v2080, %v2082
      %s2084 = scalar_lea.vmem [#allocation3], 16
      %v2085 = vld [vmem:[%s2084] ss:$2 sm:$0x7f]
      %s2086 = scalar_lea.vmem [#allocation3], 17
      %v2087 = vld [vmem:[%s2086] ss:$2 sm:$0x7f]
      %v2088 = vmax.f32 %v2085, %v2087
      %v2089 = vmax.f32 %v2083, %v2088
      %vm2090 = vcmask 79872
      %2091 = vst.msk [vmem:[#allocation4] sm:$0x7f] %vm2090, %v2089
      %s2092 = scalar_lea.vmem [#allocation3], 32
      %v2093 = vld [vmem:[%s2092] ss:$2 sm:$0x7f]
      %s2094 = scalar_lea.vmem [#allocation3], 33
      %v2095 = vld [vmem:[%s2094] ss:$2 sm:$0x7f]
      %v2096 = vmax.f32 %v2093, %v2095
      %s2097 = scalar_lea.vmem [#allocation3], 48
      %v2098 = vld [vmem:[%s2097] ss:$2 sm:$0x7f]
      %s2099 = scalar_lea.vmem [#allocation3], 49
      %v2100 = vld [vmem:[%s2099] ss:$2 sm:$0x7f]
      %v2101 = vmax.f32 %v2098, %v2100
      %v2102 = vmax.f32 %v2096, %v2101
      %2103 = vst.msk [vmem:[#allocation4 + $0x7] sm:$0x7f] %vm2090, %v2102
      %s2104 = scalar_lea.vmem [#allocation3], 64
      %v2105 = vld [vmem:[%s2104] ss:$2 sm:$0x7f]
      %s2106 = scalar_lea.vmem [#allocation3], 65
      %v2107 = vld [vmem:[%s2106] ss:$2 sm:$0x7f]
      %v2108 = vmax.f32 %v2105, %v2107
      %s2109 = scalar_lea.vmem [#allocation3], 80
      %v2110 = vld [vmem:[%s2109] ss:$2 sm:$0x7f]
      %s2111 = scalar_lea.vmem [#allocation3], 81
      %v2112 = vld [vmem:[%s2111] ss:$2 sm:$0x7f]
      %v2113 = vmax.f32 %v2110, %v2112
      %v2114 = vmax.f32 %v2108, %v2113
      %2115 = vst.msk [vmem:[#allocation4 + $0xe] sm:$0x7f] %vm2090, %v2114
      %s2116 = scalar_lea.vmem [#allocation3], 96
      %v2117 = vld [vmem:[%s2116] ss:$2 sm:$0x7f]
      %s2118 = scalar_lea.vmem [#allocation3], 97
      %v2119 = vld [vmem:[%s2118] ss:$2 sm:$0x7f]
      %v2120 = vmax.f32 %v2117, %v2119
      %s2121 = scalar_lea.vmem [#allocation3], 112
      %v2122 = vld [vmem:[%s2121] ss:$2 sm:$0x7f]
      %s2123 = scalar_lea.vmem [#allocation3], 113
      %v2124 = vld [vmem:[%s2123] ss:$2 sm:$0x7f]
      %v2125 = vmax.f32 %v2122, %v2124
      %v2126 = vmax.f32 %v2120, %v2125
      %2127 = vst.msk [vmem:[#allocation4 + $0x15] sm:$0x7f] %vm2090, %v2126
      %s2128 = scalar_lea.vmem [#allocation3], 128
      %v2129 = vld [vmem:[%s2128] ss:$2 sm:$0x7f]
      %s2130 = scalar_lea.vmem [#allocation3], 129
      %v2131 = vld [vmem:[%s2130] ss:$2 sm:$0x7f]
      %v2132 = vmax.f32 %v2129, %v2131
      %s2133 = scalar_lea.vmem [#allocation3], 144
      %v2134 = vld [vmem:[%s2133] ss:$2 sm:$0x7f]
      %s2135 = scalar_lea.vmem [#allocation3], 145
      %v2136 = vld [vmem:[%s2135] ss:$2 sm:$0x7f]
      %v2137 = vmax.f32 %v2134, %v2136
      %v2138 = vmax.f32 %v2132, %v2137
      %2139 = vst.msk [vmem:[#allocation4 + $0x1c] sm:$0x7f] %vm2090, %v2138
      %s2140 = scalar_lea.vmem [#allocation3], 160
      %v2141 = vld [vmem:[%s2140] ss:$2 sm:$0x7f]
      %s2142 = scalar_lea.vmem [#allocation3], 161
      %v2143 = vld [vmem:[%s2142] ss:$2 sm:$0x7f]
      %v2144 = vmax.f32 %v2141, %v2143
      %s2145 = scalar_lea.vmem [#allocation3], 176
      %v2146 = vld [vmem:[%s2145] ss:$2 sm:$0x7f]
      %s2147 = scalar_lea.vmem [#allocation3], 177
      %v2148 = vld [vmem:[%s2147] ss:$2 sm:$0x7f]
      %v2149 = vmax.f32 %v2146, %v2148
      %v2150 = vmax.f32 %v2144, %v2149
      %2151 = vst.msk [vmem:[#allocation4 + $0x23] sm:$0x7f] %vm2090, %v2150
      %s2152 = scalar_lea.vmem [#allocation3], 192
      %v2153 = vld [vmem:[%s2152] ss:$2 sm:$0x7f]
      %s2154 = scalar_lea.vmem [#allocation3], 193
      %v2155 = vld [vmem:[%s2154] ss:$2 sm:$0x7f]
      %v2156 = vmax.f32 %v2153, %v2155
      %s2157 = scalar_lea.vmem [#allocation3], 208
      %v2158 = vld [vmem:[%s2157] ss:$2 sm:$0x7f]
      %s2159 = scalar_lea.vmem [#allocation3], 209
      %v2160 = vld [vmem:[%s2159] ss:$2 sm:$0x7f]
      %v2161 = vmax.f32 %v2158, %v2160
      %v2162 = vmax.f32 %v2156, %v2161
      %2163 = vst.msk [vmem:[#allocation4 + $0x2a] sm:$0x7f] %vm2090, %v2162
      %vm2164 = vcmask 76800
      %2165 = vst.msk [vmem:[#allocation4 + $0x31] sm:$0xf] %vm2164, 0.0
      %v2166 = vld [vmem:[#allocation4] sm:$0xff]
      %v2167 = vld [vmem:[#allocation4 + $0x8] sm:$0xff]
      %v2168 = vld [vmem:[#allocation4 + $0x10] sm:$0xff]
      %v2169 = vld [vmem:[#allocation4 + $0x18] sm:$0xff]
      %v2170 = vld [vmem:[#allocation4 + $0x20] sm:$0x1f]
      %2171 = vst.msk [vmem:[#allocation2] sm:$0xff] %vm2051, %v2166
      %2172 = vst.msk [vmem:[#allocation2 + $0x10] sm:$0xff] %vm2051, %v2167
      %2173 = vst.msk [vmem:[#allocation2 + $0x20] sm:$0xff] %vm2051, %v2168
      %2174 = vst.msk [vmem:[#allocation2 + $0x30] sm:$0xff] %vm2051, %v2169
      %vm2175 = vcmask 77824
      %2176 = vst.msk [vmem:[#allocation2 + $0x40] sm:$0x1f] %vm2175, %v2170
      %v2177 = vld [vmem:[#allocation4 + $0x1] sm:$0xff]
      %v2178 = vld [vmem:[#allocation4 + $0x9] sm:$0xff]
      %v2179 = vld [vmem:[#allocation4 + $0x11] sm:$0xff]
      %v2180 = vld [vmem:[#allocation4 + $0x19] sm:$0xff]
      %v2181 = vld [vmem:[#allocation4 + $0x21] sm:$0x1f]
      %2187 = vrot.lane.b32.xlu0 %v2177, 10
      %v2188 = vpop.permute.xlu0 %2187
      %2189 = vrot.lane.b32.xlu0 %v2178, 10
      %v2190 = vpop.permute.xlu0 %2189
      %2191 = vrot.lane.b32.xlu0 %v2179, 10
      %v2192 = vpop.permute.xlu0 %2191
      %2193 = vrot.lane.b32.xlu0 %v2180, 10
      %v2194 = vpop.permute.xlu0 %2193
      %2195 = vrot.lane.b32.xlu0 %v2181, 10
      %v2196 = vpop.permute.xlu0 %2195
      %vm2202 = vcmask 162896
      %2203 = vst.msk [vmem:[#allocation2] sm:$0xff] %vm2202, %v2188
      %2204 = vst.msk [vmem:[#allocation2 + $0x10] sm:$0xff] %vm2202, %v2190
      %2205 = vst.msk [vmem:[#allocation2 + $0x20] sm:$0xff] %vm2202, %v2192
      %2206 = vst.msk [vmem:[#allocation2 + $0x30] sm:$0xff] %vm2202, %v2194
      %vm2207 = vcmask 159824
      %2208 = vst.msk [vmem:[#allocation2 + $0x40] sm:$0x1f] %vm2207, %v2196
      %v2209 = vld [vmem:[#allocation4 + $0x2] sm:$0xff]
      %v2210 = vld [vmem:[#allocation4 + $0xa] sm:$0xff]
      %v2211 = vld [vmem:[#allocation4 + $0x12] sm:$0xff]
      %v2212 = vld [vmem:[#allocation4 + $0x1a] sm:$0xff]
      %v2213 = vld [vmem:[#allocation4 + $0x22] sm:$0x1f]
      %2219 = vrot.lane.b32.xlu0 %v2209, 20
      %v2220 = vpop.permute.xlu0 %2219
      %2221 = vrot.lane.b32.xlu0 %v2210, 20
      %v2222 = vpop.permute.xlu0 %2221
      %2223 = vrot.lane.b32.xlu0 %v2211, 20
      %v2224 = vpop.permute.xlu0 %2223
      %2225 = vrot.lane.b32.xlu0 %v2212, 20
      %v2226 = vpop.permute.xlu0 %2225
      %2227 = vrot.lane.b32.xlu0 %v2213, 20
      %v2228 = vpop.permute.xlu0 %2227
      %vm2234 = vcmask 244896
      %2235 = vst.msk [vmem:[#allocation2] sm:$0xff] %vm2234, %v2220
      %2236 = vst.msk [vmem:[#allocation2 + $0x10] sm:$0xff] %vm2234, %v2222
      %2237 = vst.msk [vmem:[#allocation2 + $0x20] sm:$0xff] %vm2234, %v2224
      %2238 = vst.msk [vmem:[#allocation2 + $0x30] sm:$0xff] %vm2234, %v2226
      %vm2239 = vcmask 241824
      %2240 = vst.msk [vmem:[#allocation2 + $0x40] sm:$0x1f] %vm2239, %v2228
      %v2241 = vld [vmem:[#allocation4 + $0x7] sm:$0xff]
      %v2242 = vld [vmem:[#allocation4 + $0xf] sm:$0xff]
      %v2243 = vld [vmem:[#allocation4 + $0x17] sm:$0xff]
      %v2244 = vld [vmem:[#allocation4 + $0x1f] sm:$0xff]
      %v2245 = vld [vmem:[#allocation4 + $0x27] sm:$0x1f]
      %2251 = vrot.lane.b32.xlu0 %v2241, 30
      %v2252 = vpop.permute.xlu0 %2251
      %2253 = vrot.lane.b32.xlu0 %v2242, 30
      %v2254 = vpop.permute.xlu0 %2253
      %2255 = vrot.lane.b32.xlu0 %v2243, 30
      %v2256 = vpop.permute.xlu0 %2255
      %2257 = vrot.lane.b32.xlu0 %v2244, 30
      %v2258 = vpop.permute.xlu0 %2257
      %2259 = vrot.lane.b32.xlu0 %v2245, 30
      %v2260 = vpop.permute.xlu0 %2259
      %vm2266 = vcmask 326896
      %2267 = vst.msk [vmem:[#allocation2] sm:$0xff] %vm2266, %v2252
      %2268 = vst.msk [vmem:[#allocation2 + $0x10] sm:$0xff] %vm2266, %v2254
      %2269 = vst.msk [vmem:[#allocation2 + $0x20] sm:$0xff] %vm2266, %v2256
      %2270 = vst.msk [vmem:[#allocation2 + $0x30] sm:$0xff] %vm2266, %v2258
      %vm2271 = vcmask 323824
      %2272 = vst.msk [vmem:[#allocation2 + $0x40] sm:$0x1f] %vm2271, %v2260
      %v2273 = vld [vmem:[#allocation4 + $0x8] sm:$0xff]
      %v2274 = vld [vmem:[#allocation4 + $0x10] sm:$0xff]
      %v2275 = vld [vmem:[#allocation4 + $0x18] sm:$0xff]
      %v2276 = vld [vmem:[#allocation4 + $0x20] sm:$0xff]
      %v2277 = vld [vmem:[#allocation4 + $0x28] sm:$0x1f]
      %2283 = vrot.lane.b32.xlu0 %v2273, 40
      %v2284 = vpop.permute.xlu0 %2283
      %2285 = vrot.lane.b32.xlu0 %v2274, 40
      %v2286 = vpop.permute.xlu0 %2285
      %2287 = vrot.lane.b32.xlu0 %v2275, 40
      %v2288 = vpop.permute.xlu0 %2287
      %2289 = vrot.lane.b32.xlu0 %v2276, 40
      %v2290 = vpop.permute.xlu0 %2289
      %2291 = vrot.lane.b32.xlu0 %v2277, 40
      %v2292 = vpop.permute.xlu0 %2291
      %vm2298 = vcmask 408896
      %2299 = vst.msk [vmem:[#allocation2] sm:$0xff] %vm2298, %v2284
      %2300 = vst.msk [vmem:[#allocation2 + $0x10] sm:$0xff] %vm2298, %v2286
      %2301 = vst.msk [vmem:[#allocation2 + $0x20] sm:$0xff] %vm2298, %v2288
      %2302 = vst.msk [vmem:[#allocation2 + $0x30] sm:$0xff] %vm2298, %v2290
      %vm2303 = vcmask 405824
      %2304 = vst.msk [vmem:[#allocation2 + $0x40] sm:$0x1f] %vm2303, %v2292
      %v2305 = vld [vmem:[#allocation4 + $0x9] sm:$0xff]
      %v2306 = vld [vmem:[#allocation4 + $0x11] sm:$0xff]
      %v2307 = vld [vmem:[#allocation4 + $0x19] sm:$0xff]
      %v2308 = vld [vmem:[#allocation4 + $0x21] sm:$0xff]
      %v2309 = vld [vmem:[#allocation4 + $0x29] sm:$0x1f]
      %2315 = vrot.lane.b32.xlu0 %v2305, 50
      %v2316 = vpop.permute.xlu0 %2315
      %2317 = vrot.lane.b32.xlu0 %v2306, 50
      %v2318 = vpop.permute.xlu0 %2317
      %2319 = vrot.lane.b32.xlu0 %v2307, 50
      %v2320 = vpop.permute.xlu0 %2319
      %2321 = vrot.lane.b32.xlu0 %v2308, 50
      %v2322 = vpop.permute.xlu0 %2321
      %2323 = vrot.lane.b32.xlu0 %v2309, 50
      %v2324 = vpop.permute.xlu0 %2323
      %vm2330 = vcmask 490896
      %2331 = vst.msk [vmem:[#allocation2] sm:$0xff] %vm2330, %v2316
      %2332 = vst.msk [vmem:[#allocation2 + $0x10] sm:$0xff] %vm2330, %v2318
      %2333 = vst.msk [vmem:[#allocation2 + $0x20] sm:$0xff] %vm2330, %v2320
      %2334 = vst.msk [vmem:[#allocation2 + $0x30] sm:$0xff] %vm2330, %v2322
      %vm2335 = vcmask 487824
      %2336 = vst.msk [vmem:[#allocation2 + $0x40] sm:$0x1f] %vm2335, %v2324
      %v2337 = vld [vmem:[#allocation4 + $0xe] sm:$0xff]
      %v2338 = vld [vmem:[#allocation4 + $0x16] sm:$0xff]
      %v2339 = vld [vmem:[#allocation4 + $0x1e] sm:$0xff]
      %v2340 = vld [vmem:[#allocation4 + $0x26] sm:$0xff]
      %v2341 = vld [vmem:[#allocation4 + $0x2e] sm:$0x1f]
      %2347 = vrot.lane.b32.xlu0 %v2337, 60
      %v2348 = vpop.permute.xlu0 %2347
      %2349 = vrot.lane.b32.xlu0 %v2338, 60
      %v2350 = vpop.permute.xlu0 %2349
      %2351 = vrot.lane.b32.xlu0 %v2339, 60
      %v2352 = vpop.permute.xlu0 %2351
      %2353 = vrot.lane.b32.xlu0 %v2340, 60
      %v2354 = vpop.permute.xlu0 %2353
      %2355 = vrot.lane.b32.xlu0 %v2341, 60
      %v2356 = vpop.permute.xlu0 %2355
      %vm2362 = vcmask 572896
      %2363 = vst.msk [vmem:[#allocation2] sm:$0xff] %vm2362, %v2348
      %2364 = vst.msk [vmem:[#allocation2 + $0x10] sm:$0xff] %vm2362, %v2350
      %2365 = vst.msk [vmem:[#allocation2 + $0x20] sm:$0xff] %vm2362, %v2352
      %2366 = vst.msk [vmem:[#allocation2 + $0x30] sm:$0xff] %vm2362, %v2354
      %vm2367 = vcmask 569824
      %2368 = vst.msk [vmem:[#allocation2 + $0x40] sm:$0x1f] %vm2367, %v2356
      %v2369 = vld [vmem:[#allocation4 + $0xf] sm:$0xff]
      %v2370 = vld [vmem:[#allocation4 + $0x17] sm:$0xff]
      %v2371 = vld [vmem:[#allocation4 + $0x1f] sm:$0xff]
      %v2372 = vld [vmem:[#allocation4 + $0x27] sm:$0xff]
      %v2373 = vld [vmem:[#allocation4 + $0x2f] sm:$0x1f]
      %2379 = vrot.lane.b32.xlu0 %v2369, 70
      %v2380 = vpop.permute.xlu0 %2379
      %2381 = vrot.lane.b32.xlu0 %v2370, 70
      %v2382 = vpop.permute.xlu0 %2381
      %2383 = vrot.lane.b32.xlu0 %v2371, 70
      %v2384 = vpop.permute.xlu0 %2383
      %2385 = vrot.lane.b32.xlu0 %v2372, 70
      %v2386 = vpop.permute.xlu0 %2385
      %2387 = vrot.lane.b32.xlu0 %v2373, 70
      %v2388 = vpop.permute.xlu0 %2387
      %vm2394 = vcmask 654896
      %2395 = vst.msk [vmem:[#allocation2] sm:$0xff] %vm2394, %v2380
      %2396 = vst.msk [vmem:[#allocation2 + $0x10] sm:$0xff] %vm2394, %v2382
      %2397 = vst.msk [vmem:[#allocation2 + $0x20] sm:$0xff] %vm2394, %v2384
      %2398 = vst.msk [vmem:[#allocation2 + $0x30] sm:$0xff] %vm2394, %v2386
      %vm2399 = vcmask 651824
      %2400 = vst.msk [vmem:[#allocation2 + $0x40] sm:$0x1f] %vm2399, %v2388
      %v2401 = vld [vmem:[#allocation4 + $0x10] sm:$0xff]
      %v2402 = vld [vmem:[#allocation4 + $0x18] sm:$0xff]
      %v2403 = vld [vmem:[#allocation4 + $0x20] sm:$0xff]
      %v2404 = vld [vmem:[#allocation4 + $0x28] sm:$0xff]
      %v2405 = vld [vmem:[#allocation4 + $0x30] sm:$0x1f]
      %2411 = vrot.lane.b32.xlu0 %v2401, 80
      %v2412 = vpop.permute.xlu0 %2411
      %2413 = vrot.lane.b32.xlu0 %v2402, 80
      %v2414 = vpop.permute.xlu0 %2413
      %2415 = vrot.lane.b32.xlu0 %v2403, 80
      %v2416 = vpop.permute.xlu0 %2415
      %2417 = vrot.lane.b32.xlu0 %v2404, 80
      %v2418 = vpop.permute.xlu0 %2417
      %2419 = vrot.lane.b32.xlu0 %v2405, 80
      %v2420 = vpop.permute.xlu0 %2419
      %vm2426 = vcmask 736896
      %2427 = vst.msk [vmem:[#allocation2] sm:$0xff] %vm2426, %v2412
      %2428 = vst.msk [vmem:[#allocation2 + $0x10] sm:$0xff] %vm2426, %v2414
      %2429 = vst.msk [vmem:[#allocation2 + $0x20] sm:$0xff] %vm2426, %v2416
      %2430 = vst.msk [vmem:[#allocation2 + $0x30] sm:$0xff] %vm2426, %v2418
      %vm2431 = vcmask 733824
      %2432 = vst.msk [vmem:[#allocation2 + $0x40] sm:$0x1f] %vm2431, %v2420
      %v2433 = vld [vmem:[#allocation2] sm:$0xff]
      %v2434 = vld [vmem:[#allocation2 + $0x10] sm:$0xff]
      %v2435 = vld [vmem:[#allocation2 + $0x20] sm:$0xff]
      %v2436 = vld [vmem:[#allocation2 + $0x30] sm:$0xff]
      %v2437 = vld [vmem:[#allocation2 + $0x40] sm:$0x1f]
      %v2438 = vpack.c.bf16 %v2434, %v2433
      %v2439 = vpack.c.bf16 %v2436, %v2435
      %v2440 = vpack.c.bf16 %v2437, %v2437
      %v2441 = vld [vmem:[%s3] sm:$0xf]
      %v2442 = vld [vmem:[%s3 + $0x4] sm:$0xf]
      %v2443 = vld [vmem:[%s3 + $0x8] sm:$0xf]
      %v2444 = vld [vmem:[%s3 + $0xc] sm:$0xf]
      %v2445 = vld [vmem:[%s3 + $0x10] sm:$0xf]
      %v2446 = vld [vmem:[%s3 + $0x14] sm:$0xf]
      %v2447 = vld [vmem:[%s3 + $0x18] sm:$0xf]
      %v2448 = vld [vmem:[%s3 + $0x1c] sm:$0xf]
      %v2449 = vld [vmem:[%s3 + $0x20] sm:$0xf]
      %v2450 = vld [vmem:[%s3 + $0x24] sm:$0xf]
      %v2451 = vld [vmem:[%s3 + $0x28] sm:$0xf]
      %v2452 = vld [vmem:[%s3 + $0x2c] sm:$0x1]
      %v2453 = vld [vmem:[%s4] sm:$0x1]
      %v2455 = vperm.slane %v2453, 0
      %v2469 = vunpack.c.l.b16 %v2441
      %v2470 = vunpack.c.l.b16 %v2442
      %v2471 = vunpack.c.l.b16 %v2443
      %v2472 = vunpack.c.l.b16 %v2444
      %v2473 = vunpack.c.l.b16 %v2445
      %v2474 = vunpack.c.l.b16 %v2446
      %v2475 = vunpack.c.l.b16 %v2447
      %v2476 = vunpack.c.l.b16 %v2448
      %v2477 = vunpack.c.l.b16 %v2449
      %v2478 = vunpack.c.l.b16 %v2450
      %v2479 = vunpack.c.l.b16 %v2451
      %v2480 = vunpack.c.l.b16 %v2452
      %v2481 = vpack.c.b16 %v2470, %v2469
      %v2482 = vpack.c.b16 %v2472, %v2471
      %v2483 = vpack.c.b16 %v2474, %v2473
      %v2484 = vpack.c.b16 %v2476, %v2475
      %v2485 = vpack.c.b16 %v2478, %v2477
      %v2486 = vpack.c.b16 %v2480, %v2479
      %vm2492 = vcmask 736256
      %v2494 = vsel %vm2492, %v2438, 0
      %v2497 = vsel %vm2492, %v2439, 0
      %v2500 = vsel %vm2492, %v2440, 0
      %v2503 = vsel %vm1875, %v2486, 0
      %2505 = vmatpush.bf16.msra.mxu0 0
      %2506 = vmatpush.bf16.msra.mxu0 0
      %2507 = vmatpush.bf16.msra.mxu0 %v2503
      %2508 = vmatpush.bf16.msra.mxu0 %v2485
      %2509 = vmatpush.bf16.msra.mxu0 %v2484
      %2510 = vmatpush.bf16.msra.mxu0 %v2483
      %2511 = vmatpush.bf16.msra.mxu0 %v2482
      %2512 = vmatpush.bf16.msra.mxu0 %v2481
      %2513 = vmatmul.bf16.gmra.mxu0 %v2494
      %v2514 = vpop.f32.mrf.mxu0
      %v2515 = vadd.f32 %v2455, %v2514
      %v2516 = vpop.f32.mrf.mxu0
      %v2517 = vadd.f32 %v2455, %v2516
      %2518 = vmatmul.bf16.gmra.mxu0 %v2497
      %v2519 = vpop.f32.mrf.mxu0
      %v2520 = vadd.f32 %v2455, %v2519
      %v2521 = vpop.f32.mrf.mxu0
      %v2522 = vadd.f32 %v2455, %v2521
      %2523 = vmatmul.bf16.gmra.mxu0 %v2500
      %v2524 = vpop.f32.mrf.mxu0
      %v2525 = vadd.f32 %v2455, %v2524
      %v2526 = vpop.f32.mrf.mxu0
      %2527 = vdwg.mxu0
      %vm2528 = vcmp.gt.f32.partialorder %v2515, 0.0
      %vm2529 = vcmp.gt.f32.partialorder %v2517, 0.0
      %vm2530 = vcmp.gt.f32.partialorder %v2520, 0.0
      %vm2531 = vcmp.gt.f32.partialorder %v2522, 0.0
      %vm2532 = vcmp.gt.f32.partialorder %v2525, 0.0
      %2533 = vset.pattern.permute.xlu0 1
      %2534 = vperm.xlu0 %2533, %v1990
      %v2535 = vpop.permute.xlu0 %2534
      %v2537 = vmul.f32 %v2535, %v2515
      %v2538 = vmul.f32 %v2535, %v2517
      %v2539 = vmul.f32 %v2535, %v2520
      %v2540 = vmul.f32 %v2535, %v2522
      %v2541 = vmul.f32 %v2535, %v2525
      %v2542 = vsel %vm2528, %v2515, %v2537
      %v2543 = vsel %vm2529, %v2517, %v2538
      %v2544 = vsel %vm2530, %v2520, %v2539
      %v2545 = vsel %vm2531, %v2522, %v2540
      %v2546 = vsel %vm2532, %v2525, %v2541
      %vm2547 = vcmask 130048
      %2548 = vst.msk [vmem:[#allocation5] sm:$0xff] %vm2547, %v2542
      %2549 = vst.msk [vmem:[#allocation5 + $0x8] sm:$0xff] %vm2547, %v2543
      %2550 = vst.msk [vmem:[#allocation5 + $0x10] sm:$0xff] %vm2547, %v2544
      %2551 = vst.msk [vmem:[#allocation5 + $0x18] sm:$0xff] %vm2547, %v2545
      %vm2552 = vcmask 126976
      %2553 = vst.msk [vmem:[#allocation5 + $0x20] sm:$0x1f] %vm2552, %v2546
      %v2554 = vld [vmem:[#allocation5] sm:$0xff]
      %v2555 = vld [vmem:[#allocation5 + $0x8] sm:$0xff]
      %v2556 = vld [vmem:[#allocation5 + $0x10] sm:$0x1f]
      %2557 = vst.msk [vmem:[#allocation2] sm:$0xff] %vm2547, %v2554
      %2558 = vst.msk [vmem:[#allocation2 + $0x10] sm:$0xff] %vm2547, %v2555
      %2559 = vst.msk [vmem:[#allocation2 + $0x20] sm:$0x1f] %vm2552, %v2556
      %v2560 = vld [vmem:[#allocation5 + $0x1] sm:$0xff]
      %v2561 = vld [vmem:[#allocation5 + $0x9] sm:$0xff]
      %v2562 = vld [vmem:[#allocation5 + $0x11] sm:$0x1f]
      %2566 = vrot.lane.b32.xlu0 %v2560, 16
      %v2567 = vpop.permute.xlu0 %2566
      %2568 = vrot.lane.b32.xlu0 %v2561, 16
      %v2569 = vpop.permute.xlu0 %2568
      %2570 = vrot.lane.b32.xlu0 %v2562, 16
      %v2571 = vpop.permute.xlu0 %2570
      %vm2575 = vcmask 261248
      %2576 = vst.msk [vmem:[#allocation2] sm:$0xff] %vm2575, %v2567
      %2577 = vst.msk [vmem:[#allocation2 + $0x10] sm:$0xff] %vm2575, %v2569
      %vm2578 = vcmask 258176
      %2579 = vst.msk [vmem:[#allocation2 + $0x20] sm:$0x1f] %vm2578, %v2571
      %v2580 = vld [vmem:[#allocation5 + $0x2] sm:$0xff]
      %v2581 = vld [vmem:[#allocation5 + $0xa] sm:$0xff]
      %v2582 = vld [vmem:[#allocation5 + $0x12] sm:$0x1f]
      %2586 = vrot.lane.b32.xlu0 %v2580, 32
      %v2587 = vpop.permute.xlu0 %2586
      %2588 = vrot.lane.b32.xlu0 %v2581, 32
      %v2589 = vpop.permute.xlu0 %2588
      %2590 = vrot.lane.b32.xlu0 %v2582, 32
      %v2591 = vpop.permute.xlu0 %2590
      %vm2595 = vcmask 392448
      %2596 = vst.msk [vmem:[#allocation2] sm:$0xff] %vm2595, %v2587
      %2597 = vst.msk [vmem:[#allocation2 + $0x10] sm:$0xff] %vm2595, %v2589
      %vm2598 = vcmask 389376
      %2599 = vst.msk [vmem:[#allocation2 + $0x20] sm:$0x1f] %vm2598, %v2591
      %v2600 = vld [vmem:[#allocation5 + $0x7] sm:$0xff]
      %v2601 = vld [vmem:[#allocation5 + $0xf] sm:$0xff]
      %v2602 = vld [vmem:[#allocation5 + $0x17] sm:$0x1f]
      %2606 = vrot.lane.b32.xlu0 %v2600, 48
      %v2607 = vpop.permute.xlu0 %2606
      %2608 = vrot.lane.b32.xlu0 %v2601, 48
      %v2609 = vpop.permute.xlu0 %2608
      %2610 = vrot.lane.b32.xlu0 %v2602, 48
      %v2611 = vpop.permute.xlu0 %2610
      %vm2615 = vcmask 523648
      %2616 = vst.msk [vmem:[#allocation2] sm:$0xff] %vm2615, %v2607
      %2617 = vst.msk [vmem:[#allocation2 + $0x10] sm:$0xff] %vm2615, %v2609
      %vm2618 = vcmask 520576
      %2619 = vst.msk [vmem:[#allocation2 + $0x20] sm:$0x1f] %vm2618, %v2611
      %v2620 = vld [vmem:[#allocation5 + $0x8] sm:$0xff]
      %v2621 = vld [vmem:[#allocation5 + $0x10] sm:$0xff]
      %v2622 = vld [vmem:[#allocation5 + $0x18] sm:$0x1f]
      %2626 = vrot.lane.b32.xlu0 %v2620, 64
      %v2627 = vpop.permute.xlu0 %2626
      %2628 = vrot.lane.b32.xlu0 %v2621, 64
      %v2629 = vpop.permute.xlu0 %2628
      %2630 = vrot.lane.b32.xlu0 %v2622, 64
      %v2631 = vpop.permute.xlu0 %2630
      %vm2635 = vcmask 654848
      %2636 = vst.msk [vmem:[#allocation2] sm:$0xff] %vm2635, %v2627
      %2637 = vst.msk [vmem:[#allocation2 + $0x10] sm:$0xff] %vm2635, %v2629
      %vm2638 = vcmask 651776
      %2639 = vst.msk [vmem:[#allocation2 + $0x20] sm:$0x1f] %vm2638, %v2631
      %v2640 = vld [vmem:[#allocation5 + $0x9] sm:$0xff]
      %v2641 = vld [vmem:[#allocation5 + $0x11] sm:$0xff]
      %v2642 = vld [vmem:[#allocation5 + $0x19] sm:$0x1f]
      %2646 = vrot.lane.b32.xlu0 %v2640, 80
      %v2647 = vpop.permute.xlu0 %2646
      %2648 = vrot.lane.b32.xlu0 %v2641, 80
      %v2649 = vpop.permute.xlu0 %2648
      %2650 = vrot.lane.b32.xlu0 %v2642, 80
      %v2651 = vpop.permute.xlu0 %2650
      %vm2655 = vcmask 786048
      %2656 = vst.msk [vmem:[#allocation2] sm:$0xff] %vm2655, %v2647
      %2657 = vst.msk [vmem:[#allocation2 + $0x10] sm:$0xff] %vm2655, %v2649
      %vm2658 = vcmask 782976
      %2659 = vst.msk [vmem:[#allocation2 + $0x20] sm:$0x1f] %vm2658, %v2651
      %v2660 = vld [vmem:[#allocation5 + $0xe] sm:$0xff]
      %v2661 = vld [vmem:[#allocation5 + $0x16] sm:$0xff]
      %v2662 = vld [vmem:[#allocation5 + $0x1e] sm:$0x1f]
      %2666 = vrot.lane.b32.xlu0 %v2660, 96
      %v2667 = vpop.permute.xlu0 %2666
      %2668 = vrot.lane.b32.xlu0 %v2661, 96
      %v2669 = vpop.permute.xlu0 %2668
      %2670 = vrot.lane.b32.xlu0 %v2662, 96
      %v2671 = vpop.permute.xlu0 %2670
      %vm2675 = vcmask 917248
      %2676 = vst.msk [vmem:[#allocation2] sm:$0xff] %vm2675, %v2667
      %2677 = vst.msk [vmem:[#allocation2 + $0x10] sm:$0xff] %vm2675, %v2669
      %vm2678 = vcmask 914176
      %2679 = vst.msk [vmem:[#allocation2 + $0x20] sm:$0x1f] %vm2678, %v2671
      %v2680 = vld [vmem:[#allocation5 + $0xf] sm:$0xff]
      %v2681 = vld [vmem:[#allocation5 + $0x17] sm:$0xff]
      %v2682 = vld [vmem:[#allocation5 + $0x1f] sm:$0x1f]
      %2686 = vrot.lane.b32.xlu0 %v2680, 112
      %v2687 = vpop.permute.xlu0 %2686
      %2688 = vrot.lane.b32.xlu0 %v2681, 112
      %v2689 = vpop.permute.xlu0 %2688
      %2690 = vrot.lane.b32.xlu0 %v2682, 112
      %v2691 = vpop.permute.xlu0 %2690
      %vm2695 = vcmask 1048448
      %2696 = vst.msk [vmem:[#allocation2] sm:$0xff] %vm2695, %v2687
      %2697 = vst.msk [vmem:[#allocation2 + $0x10] sm:$0xff] %vm2695, %v2689
      %vm2698 = vcmask 1045376
      %2699 = vst.msk [vmem:[#allocation2 + $0x20] sm:$0x1f] %vm2698, %v2691
      %v2700 = vld [vmem:[#allocation5 + $0x10] sm:$0xff]
      %v2701 = vld [vmem:[#allocation5 + $0x18] sm:$0xff]
      %v2702 = vld [vmem:[#allocation5 + $0x20] sm:$0x1f]
      %2703 = vst.msk [vmem:[#allocation2 + $0x8] sm:$0xff] %vm2547, %v2700
      %2704 = vst.msk [vmem:[#allocation2 + $0x18] sm:$0xff] %vm2547, %v2701
      %2705 = vst.msk [vmem:[#allocation2 + $0x28] sm:$0x1f] %vm2552, %v2702
      %v2706 = vld [vmem:[#allocation2] sm:$0xff]
      %v2707 = vld [vmem:[#allocation2 + $0x8] sm:$0xff]
      %v2708 = vld [vmem:[#allocation2 + $0x10] sm:$0xff]
      %v2709 = vld [vmem:[#allocation2 + $0x18] sm:$0xff]
      %v2710 = vld [vmem:[#allocation2 + $0x20] sm:$0x1f]
      %v2711 = vld [vmem:[#allocation2 + $0x28] sm:$0x1f]
      %v2712 = vpack.c.bf16 %v2708, %v2706
      %v2713 = vpack.c.bf16 %v2709, %v2707
      %v2714 = vpack.c.bf16 %v2710, %v2710
      %v2715 = vpack.c.bf16 %v2711, %v2711
      %v2716 = vld [vmem:[%s5] sm:$0xf]
      %v2717 = vld [vmem:[%s5 + $0x4] sm:$0xf]
      %v2718 = vld [vmem:[%s5 + $0x8] sm:$0xf]
      %v2719 = vld [vmem:[%s5 + $0xc] sm:$0xf]
      %v2720 = vld [vmem:[%s5 + $0x10] sm:$0xf]
      %v2721 = vld [vmem:[%s5 + $0x14] sm:$0xf]
      %v2722 = vld [vmem:[%s5 + $0x18] sm:$0xf]
      %v2723 = vld [vmem:[%s5 + $0x1c] sm:$0xf]
      %v2724 = vld [vmem:[%s5 + $0x20] sm:$0xf]
      %v2725 = vld [vmem:[%s5 + $0x24] sm:$0xf]
      %v2726 = vld [vmem:[%s5 + $0x28] sm:$0xf]
      %v2727 = vld [vmem:[%s5 + $0x2c] sm:$0xf]
      %v2728 = vld [vmem:[%s5 + $0x30] sm:$0xf]
      %v2729 = vld [vmem:[%s5 + $0x34] sm:$0xf]
      %v2730 = vld [vmem:[%s5 + $0x38] sm:$0xf]
      %v2731 = vld [vmem:[%s5 + $0x3c] sm:$0xf]
      %v2732 = vld [vmem:[%s5 + $0x40] sm:$0xf]
      %v2733 = vld [vmem:[%s5 + $0x44] sm:$0xf]
      %v2734 = vld [vmem:[%s6] sm:$0x1]
      %v2736 = vperm.slane %v2734, 0
      %v2756 = vunpack.c.l.b16 %v2716
      %v2757 = vunpack.c.l.b16 %v2717
      %v2758 = vunpack.c.l.b16 %v2718
      %v2759 = vunpack.c.l.b16 %v2719
      %v2760 = vunpack.c.l.b16 %v2720
      %v2761 = vunpack.c.l.b16 %v2721
      %v2762 = vunpack.c.l.b16 %v2722
      %v2763 = vunpack.c.l.b16 %v2723
      %v2764 = vunpack.c.l.b16 %v2724
      %v2765 = vunpack.c.l.b16 %v2725
      %v2766 = vunpack.c.l.b16 %v2726
      %v2767 = vunpack.c.l.b16 %v2727
      %v2768 = vunpack.c.l.b16 %v2728
      %v2769 = vunpack.c.l.b16 %v2729
      %v2770 = vunpack.c.l.b16 %v2730
      %v2771 = vunpack.c.l.b16 %v2731
      %v2772 = vunpack.c.l.b16 %v2732
      %v2773 = vunpack.c.l.b16 %v2733
      %v2774 = vpack.c.b16 %v2757, %v2756
      %v2775 = vpack.c.b16 %v2759, %v2758
      %v2776 = vpack.c.b16 %v2761, %v2760
      %v2777 = vpack.c.b16 %v2763, %v2762
      %v2778 = vpack.c.b16 %v2765, %v2764
      %v2779 = vpack.c.b16 %v2767, %v2766
      %v2780 = vpack.c.b16 %v2769, %v2768
      %v2781 = vpack.c.b16 %v2771, %v2770
      %v2782 = vpack.c.b16 %v2773, %v2772
      %v2793 = vsel %vm2547, %v2713, 0
      %v2796 = vsel %vm2547, %v2715, 0
      %2798 = vmatpush.bf16.msra.mxu0 %v2781
      %2799 = vmatpush.bf16.msra.mxu0 %v2780
      %2800 = vmatpush.bf16.msra.mxu0 %v2779
      %2801 = vmatpush.bf16.msra.mxu0 %v2778
      %2802 = vmatpush.bf16.msra.mxu0 %v2777
      %2803 = vmatpush.bf16.msra.mxu0 %v2776
      %2804 = vmatpush.bf16.msra.mxu0 %v2775
      %2805 = vmatpush.bf16.msra.mxu0 %v2774
      %2806 = vmatmul.bf16.gmra.mxu0 %v2712
      %v2807 = vpop.f32.mrf.mxu0
      %v2808 = vadd.f32 %v2736, %v2807
      %v2809 = vpop.f32.mrf.mxu0
      %v2810 = vadd.f32 %v2736, %v2809
      %2811 = vmatmul.bf16.gmra.mxu0 %v2714
      %v2812 = vpop.f32.mrf.mxu0
      %v2813 = vadd.f32 %v2736, %v2812
      %v2814 = vpop.f32.mrf.mxu0
      %2815 = vdwg.mxu0
      %2816 = vmatpush.bf16.msra.mxu0 0
      %2817 = vmatpush.bf16.msra.mxu0 0
      %2818 = vmatpush.bf16.msra.mxu0 0
      %2819 = vmatpush.bf16.msra.mxu0 0
      %2820 = vmatpush.bf16.msra.mxu0 0
      %2821 = vmatpush.bf16.msra.mxu0 0
      %2822 = vmatpush.bf16.msra.mxu0 0
      %2823 = vmatpush.bf16.msra.mxu0 %v2782
      %2824 = vmatmul.bf16.gmra.mxu0 %v2793
      %v2825 = vpop.f32.mrf.mxu0
      %v2826 = vadd.f32 %v2808, %v2825
      %v2827 = vpop.f32.mrf.mxu0
      %v2828 = vadd.f32 %v2810, %v2827
      %2829 = vmatmul.bf16.gmra.mxu0 %v2796
      %v2830 = vpop.f32.mrf.mxu0
      %v2831 = vadd.f32 %v2813, %v2830
      %v2832 = vpop.f32.mrf.mxu0
      %2833 = vdwg.mxu0
      %vm2834 = vcmp.gt.f32.partialorder %v2826, 0.0
      %vm2835 = vcmp.gt.f32.partialorder %v2828, 0.0
      %vm2836 = vcmp.gt.f32.partialorder %v2831, 0.0
      %2837 = vset.pattern.permute.xlu0 2
      %2838 = vperm.xlu0 %2837, %v1990
      %v2839 = vpop.permute.xlu0 %2838
      %v2841 = vmul.f32 %v2839, %v2826
      %v2842 = vmul.f32 %v2839, %v2828
      %v2843 = vmul.f32 %v2839, %v2831
      %v2844 = vsel %vm2834, %v2826, %v2841
      %v2845 = vsel %vm2835, %v2828, %v2842
      %v2846 = vsel %vm2836, %v2831, %v2843
      %v2847 = vpack.c.bf16 %v2845, %v2844
      %v2848 = vpack.c.bf16 %v2846, %v2846
      %v2849 = vld [vmem:[%s7] sm:$0xf]
      %v2850 = vld [vmem:[%s7 + $0x4] sm:$0xf]
      %v2851 = vld [vmem:[%s7 + $0x8] sm:$0xf]
      %v2852 = vld [vmem:[%s7 + $0xc] sm:$0xf]
      %v2853 = vld [vmem:[%s8] sm:$0x1]
      %v2855 = vperm.slane %v2853, 0
      %v2861 = vunpack.c.l.b16 %v2849
      %v2862 = vunpack.c.l.b16 %v2850
      %v2863 = vunpack.c.l.b16 %v2851
      %v2864 = vunpack.c.l.b16 %v2852
      %v2865 = vpack.c.b16 %v2862, %v2861
      %v2866 = vpack.c.b16 %v2864, %v2863
      %vm2869 = vcmask 261120
      %v2871 = vsel %vm2869, %v2847, 0
      %v2874 = vsel %vm2869, %v2848, 0
      %2876 = vmatpush.bf16.msra.mxu0 0
      %2877 = vmatpush.bf16.msra.mxu0 0
      %2878 = vmatpush.bf16.msra.mxu0 0
      %2879 = vmatpush.bf16.msra.mxu0 0
      %2880 = vmatpush.bf16.msra.mxu0 0
      %2881 = vmatpush.bf16.msra.mxu0 0
      %2882 = vmatpush.bf16.msra.mxu0 %v2866
      %2883 = vmatpush.bf16.msra.mxu0 %v2865
      %2884 = vmatmul.bf16.gmra.mxu0 %v2871
      %v2885 = vpop.f32.mrf.mxu0
      %v2886 = vadd.f32 %v2855, %v2885
      %v2887 = vpop.f32.mrf.mxu0
      %v2888 = vadd.f32 %v2855, %v2887
      %2889 = vmatmul.bf16.gmra.mxu0 %v2874
      %v2890 = vpop.f32.mrf.mxu0
      %v2891 = vadd.f32 %v2855, %v2890
      %v2892 = vpop.f32.mrf.mxu0
      %2893 = vdwg.mxu0
      %v2894 = vlaneseq
      %v2895 = vand.u32 %v2894, 127
      %vm2896 = vcmp.eq.s32.totalorder %v2895, 0
      %v2897 = vxor.u32 %v2886, 2147483648
      %v2898 = vxor.u32 %v2888, 2147483648
      %v2899 = vxor.u32 %v2891, 2147483648
      %v2900 = vmul.f32 %v2897, 1.442695
      %v2901 = vpow.pop %v2900
      %v2902 = vmul.f32 %v2898, 1.442695
      %v2903 = vpow.pop %v2902
      %v2904 = vmul.f32 %v2899, 1.442695
      %v2905 = vpow.pop %v2904
      %v2906 = vadd.f32 %v2901, 1.0
      %v2907 = vadd.f32 %v2903, 1.0
      %v2908 = vadd.f32 %v2905, 1.0
      %v2909 = vrcp.pop %v2906
      %v2910 = vmul.f32 %v2906, %v2909
      %v2911 = vsub.f32 1.0, %v2910
      %v2912 = vmul.f32 %v2909, %v2911
      %v2913 = vadd.f32 %v2909, %v2912
      %vm2914 = vweird.f32 %v2906
      %vm2915 = vweird.f32 %v2909
      %vm2916 = vmor %vm2914, %vm2915
      %v2917 = vsel %vm2916, %v2909, %v2913
      %v2918 = vand.u32 2147483647, %v2906
      %vm2919 = vcmp.eq.f32.partialorder %v2918, 8.507059e+37
      %v2920 = vand.u32 %v2906, 2147483648
      %v2921 = vor.u32 1.1754944e-38, %v2920
      %v2922 = vsel %vm2919, %v2921, %v2917
      %v2923 = vmul.f32 1.0, %v2922
      %v2924 = vrcp.pop %v2907
      %v2925 = vmul.f32 %v2907, %v2924
      %v2926 = vsub.f32 1.0, %v2925
      %v2927 = vmul.f32 %v2924, %v2926
      %v2928 = vadd.f32 %v2924, %v2927
      %vm2929 = vweird.f32 %v2907
      %vm2930 = vweird.f32 %v2924
      %vm2931 = vmor %vm2929, %vm2930
      %v2932 = vsel %vm2931, %v2924, %v2928
      %v2933 = vand.u32 2147483647, %v2907
      %vm2934 = vcmp.eq.f32.partialorder %v2933, 8.507059e+37
      %v2935 = vand.u32 %v2907, 2147483648
      %v2936 = vor.u32 1.1754944e-38, %v2935
      %v2937 = vsel %vm2934, %v2936, %v2932
      %v2938 = vmul.f32 1.0, %v2937
      %v2939 = vrcp.pop %v2908
      %v2940 = vmul.f32 %v2908, %v2939
      %v2941 = vsub.f32 1.0, %v2940
      %v2942 = vmul.f32 %v2939, %v2941
      %v2943 = vadd.f32 %v2939, %v2942
      %vm2944 = vweird.f32 %v2908
      %vm2945 = vweird.f32 %v2939
      %vm2946 = vmor %vm2944, %vm2945
      %v2947 = vsel %vm2946, %v2939, %v2943
      %v2948 = vand.u32 2147483647, %v2908
      %vm2949 = vcmp.eq.f32.partialorder %v2948, 8.507059e+37
      %v2950 = vand.u32 %v2908, 2147483648
      %v2951 = vor.u32 1.1754944e-38, %v2950
      %v2952 = vsel %vm2949, %v2951, %v2947
      %v2953 = vmul.f32 1.0, %v2952
      %v2954 = vsel %vm2896, %v2923, %v2886
      %v2955 = vsel %vm2896, %v2938, %v2888
      %v2956 = vsel %vm2896, %v2953, %v2891
      %vm2957 = vcmask 39936
      %2958 = vst.msk [vmem:[%s359] sm:$0xff] %vm2957, %v2954
      %2959 = vst.msk [vmem:[%s359 + $0x8] sm:$0xff] %vm2957, %v2955
      %vm2960 = vcmask 36864
      %2961 = vst.msk [vmem:[%s359 + $0x10] sm:$0x1f] %vm2960, %v2956
      %p2962 = scmp.lt.s32.totalorder %s21, 1
      %s2963 = scalar_select %p2962, %s21, 1
      %s2964 = smul.addr %s2963, 3
      %s2965 = smul.addr %s2964, 8
      %s2966 = scalar_lea.vmem %s10, %s2965
      // Predicated region
      $region61: #{pnet_forward.1} parent=59 // pred_check
        %p2967 = pneg %p254
      $region62: #{pnet_forward.1} parent=59 // pred_check_branch
        %2969 = sbr.rel (%p2967) target = $region64
      $region63: #{pnet_forward.1} parent=59 // pred_region
        _
      $region64: #{pnet_forward.1} parent=59 // pred_fallthru
        _
    $region60: #{pnet_forward.1} parent=5 // pred_fallthru
      _
    %p2970 = scmp.le.s32.totalorder 2, %s16
    // Predicated region
    $region65: #{pnet_forward.1} parent=5 // pred_check
      %p2971 = pneg %p2970
    $region66: #{pnet_forward.1} parent=5 // pred_check_branch
      %2973 = sbr.rel (%p2971) target = $region68
    $region67: #{pnet_forward.1} parent=5 // pred_region
      %s2974 = ssub.s32 %s16, 2
      // Predicated region
      $region69: #{pnet_forward.1} parent=67 // pred_check
        %p2975 = pneg %p260
      $region70: #{pnet_forward.1} parent=67 // pred_check_branch
        %2977 = sbr.rel (%p2975) target = $region72
      $region71: #{pnet_forward.1} parent=67 // pred_region
        %p2978 = scmp.lt.s32.totalorder %s22, 1
        %s2979 = scalar_select %p2978, %s22, 1
        %s2980 = smul.addr %s2979, 3
        %s2981 = smul.addr %s2980, 8
        %s2982 = scalar_lea.vmem %s10, %s2981
      $region72: #{pnet_forward.1} parent=67 // pred_fallthru
        _
    $region68: #{pnet_forward.1} parent=5 // pred_fallthru
      _
  $region6: #{pnet_forward.1} parent=0 // loop_footer
    %s20 = sadd.s32 1, %s16
  $region7: #{pnet_forward.1} parent=0 // loop_footer_branch
    %15 = sbr.rel target = $region3
  $region8: #{pnet_forward.1} parent=0 // loop_exit
    _

</llo_original>
